<compile_context>
chip_gen: v6e
topology: v6e:2x2x1
jax: 0.10.0
libtpu: 0.0.40
codegen_flags: <defaults>
</compile_context>

<pallas_src>
import numpy as np
import jax
import jax.numpy as jnp
from jax.experimental import pallas as pl
from jax.experimental.pallas import tpu as pltpu


# --------------------- constant tables for the PGA kernel ---------------------

# Quadratic monomials q_p = w[i_p] * w[j_p] needed by get_pga_kernel.
_PAIRS = [(0, 0), (4, 4), (5, 5), (6, 6),                        # squares
          (0, 4), (0, 5), (0, 6), (4, 5), (4, 6), (5, 6),        # rotor cross terms
          (0, 1), (0, 2), (0, 3), (1, 4), (1, 5),
          (2, 4), (2, 6), (3, 5), (3, 6)]                        # translation terms
_NUM_Q = len(_PAIRS)                                             # 19
_PIDX = {p: i for i, p in enumerate(_PAIRS)}


def _qidx(i, j):
    return _PIDX[(i, j)] if (i, j) in _PIDX else _PIDX[(j, i)]


# K[row, col] of the 4x4 PGA kernel as signed sums of monomials, transcribed from
# get_pga_kernel (k0..k3 in the torch code are the *columns*).  Note: entry (0, 2)
# is 2*w4*w6 - 2*w0*w4 exactly as written in the PyTorch source (kept verbatim).
_K_TERMS = {
    (0, 0): [((0, 0), 1), ((6, 6), 1), ((4, 4), -1), ((5, 5), -1)],
    (1, 0): [((5, 6), 2), ((0, 4), -2)],
    (2, 0): [((0, 5), 2), ((4, 6), 2)],
    (0, 1): [((0, 4), 2), ((5, 6), 2)],
    (1, 1): [((0, 0), 1), ((5, 5), 1), ((4, 4), -1), ((6, 6), -1)],
    (2, 1): [((4, 5), 2), ((0, 6), -2)],
    (0, 2): [((4, 6), 2), ((0, 4), -2)],
    (1, 2): [((0, 6), 2), ((4, 5), 2)],
    (2, 2): [((0, 0), 1), ((4, 4), 1), ((5, 5), -1), ((6, 6), -1)],
    (0, 3): [((3, 5), 2), ((2, 4), -2), ((0, 1), -2)],
    (1, 3): [((1, 4), 2), ((3, 6), -2), ((0, 2), -2)],
    (2, 3): [((2, 6), 2), ((1, 5), -2), ((0, 3), -2)],
    (3, 3): [((0, 0), 1), ((4, 4), 1), ((5, 5), 1), ((6, 6), 1)],
}

# Packed constant table (single input stream, fetched once):
#   rows  0:8   -> [L | R] (8, 38): w @ [L|R] gives both monomial factors in one matmul
#   rows  8:27  -> A      (19, 16): monomials -> K entries (row-major 4x4)
#   rows 32:48  -> S      (16, 4) : grouped sums over each K row's 4 lanes
_LR_R0, _LR_R1 = 0, 8
_A_R0, _A_R1 = 8, 8 + _NUM_Q
_S_R0, _S_R1 = 32, 48
_PACK_SHAPE = (48, 2 * _NUM_Q)


def _build_constants():
    l_mat = np.zeros((8, _NUM_Q), np.float32)   # first-factor selector
    r_mat = np.zeros((8, _NUM_Q), np.float32)   # second-factor selector
    for p, (i, j) in enumerate(_PAIRS):
        l_mat[i, p] = 1.0
        r_mat[j, p] = 1.0
    a_mat = np.zeros((_NUM_Q, 16), np.float32)  # monomials -> K entries (row-major 4x4)
    for (row, col), terms in _K_TERMS.items():
        for pair, coef in terms:
            a_mat[_qidx(*pair), 4 * row + col] += float(coef)
    s_mat = np.zeros((16, 4), np.float32)       # grouped sum over each row's 4 lanes
    for row in range(4):
        s_mat[4 * row:4 * row + 4, row] = 1.0
    pack = np.zeros(_PACK_SHAPE, np.float32)
    pack[_LR_R0:_LR_R1, :] = np.concatenate([l_mat, r_mat], axis=1)
    pack[_A_R0:_A_R1, :16] = a_mat
    pack[_S_R0:_S_R1, :4] = s_mat
    off_row = np.zeros((1, 8), np.float32)       # MotorNorm "+1" offset on blade 0
    off_row[0, 0] = 1.0
    return pack, off_row


_CONST_PACK, _OFF_ROW = _build_constants()


# ------------------------------- Pallas kernel --------------------------------

def _motor_layer_kernel(x_ref, c_ref, w1_ref, b1_ref, w2_ref, b2_ref, cst_ref, o_ref):
    mxu_dt = w1_ref.dtype

    # ---- code_proj MLP: MXU matmuls (bf16 operands, f32 accumulation) ----------
    c = c_ref[...].astype(mxu_dt)
    h = jnp.dot(c, w1_ref[...], preferred_element_type=jnp.float32) + b1_ref[...]
    h = jnp.maximum(h, 0.01 * h)                                   # LeakyReLU(0.01): mul+max
    m = jnp.dot(h.astype(mxu_dt), w2_ref[...],
                preferred_element_type=jnp.float32) + b2_ref[...]  # (tm, 8); b2 holds +1 offset

    # ---- MotorNorm: blades {0,4,5,6} divided by their joint L2 norm ------------
    lane = jax.lax.broadcasted_iota(jnp.int32, (1, 8), 1)
    sel = ((lane == 0) | (lane == 4) | (lane == 5) | (lane == 6)).astype(jnp.float32)
    nsq = jnp.sum(m * m * sel, axis=-1, keepdims=True)             # (tm, 1)
    inv_n = jax.lax.rsqrt(jnp.maximum(nsq, 1e-30))                 # EUP rsqrt; clamp guards tail rows
    w = m * (inv_n * sel + (1.0 - sel))                            # (tm, 8)

    # ---- get_pga_kernel as lane-dense matmuls against the packed constants -----
    wlr = jnp.dot(w, cst_ref[_LR_R0:_LR_R1, :],
                  preferred_element_type=jnp.float32)              # (tm, 38)
    q = wlr[:, :_NUM_Q] * wlr[:, _NUM_Q:]                          # (tm, 19) monomials
    k = jnp.dot(q, cst_ref[_A_R0:_A_R1, 0:16],
                preferred_element_type=jnp.float32)                # (tm, 16) = 4x4 row-major

    # ---- batched 4x4 apply: out[:, r] = sum_c K[:, 4r+c] * x[:, c] -------------
    x = x_ref[...].astype(jnp.float32)                             # (tm, 4)
    x4 = jnp.concatenate([x, x, x, x], axis=-1)                    # (tm, 16)
    o_ref[...] = jnp.dot(k * x4, cst_ref[_S_R0:_S_R1, 0:4],
                         preferred_element_type=jnp.float32).astype(o_ref.dtype)


def _round_up(v, m):
    return ((v + m - 1) // m) * m


def _pick_tile(n, tile_m):
    # Cap at 2048 so double-buffered, 128-lane-padded blocks stay well inside the default
    # scoped-VMEM budget even on v7x (64 MiB physical).  Shrink to the (8-rounded) problem
    # size when everything fits in a single grid step.
    tile_m = max(8, _round_up(min(tile_m, 2048), 8))
    return min(tile_m, _round_up(n, 8))


def motor_layer_pallas(x, c, w1, b1, w2, b2, *, tile_m=1024, mlp_dtype=jnp.bfloat16):
    """MotorLayer.forward(x, c).

    x : (N, 4) f32 points;  c : (N, code_sz) f32 codes.
    w1: (code_sz, 2*code_sz), b1: (2*code_sz,) -- first Linear, (in, out) layout (torch weight.T).
    w2: (2*code_sz, 8),       b2: (8,)         -- second Linear.
    """
    n, d_x = x.shape
    assert d_x == 4 and c.shape[0] == n
    code_sz = c.shape[1]
    hid = w1.shape[1]
    assert w1.shape == (code_sz, hid) and w2.shape == (hid, 8)

    tile_m = _pick_tile(n, tile_m)
    grid = (pl.cdiv(n, tile_m),)   # ragged tail handled by masked boundary blocks (no jnp.pad copy)

    # One-time prep: pre-cast weights for the MXU, fold the MotorNorm "+1" offset into b2.
    w1 = jnp.asarray(w1, mlp_dtype)
    w2 = jnp.asarray(w2, mlp_dtype)
    b1_2d = jnp.asarray(b1, jnp.float32).reshape(1, hid)
    b2_2d = jnp.asarray(b2, jnp.float32).reshape(1, 8) + jnp.asarray(_OFF_ROW)
    consts = jnp.asarray(_CONST_PACK)

    def const_spec(shape):
        # Constant index_map -> DMA'd into VMEM once, reused by every grid step.
        return pl.BlockSpec(shape, lambda i: (0, 0))

    # NOTE: for tiny latency-critical batches (small tile_m), pipeline_mode=pl.Buffered(3)
    # on the x/c specs would hide the exposed DMA; with tile_m >= 1024 it is unnecessary.
    return pl.pallas_call(
        _motor_layer_kernel,
        out_shape=jax.ShapeDtypeStruct((n, 4), jnp.float32),
        grid_spec=pltpu.PrefetchScalarGridSpec(
            num_scalar_prefetch=0,
            grid=grid,
            in_specs=[
                pl.BlockSpec((tile_m, 4), lambda i: (i, 0)),        # x
                pl.BlockSpec((tile_m, code_sz), lambda i: (i, 0)),  # c (dominant HBM stream)
                const_spec((code_sz, hid)),                          # w1 (bf16)
                const_spec((1, hid)),                                # b1
                const_spec((hid, 8)),                                # w2 (bf16)
                const_spec((1, 8)),                                  # b2 (+ MotorNorm offset)
                const_spec(_PACK_SHAPE),                             # packed [L|R] / A / S table
            ],
            out_specs=pl.BlockSpec((tile_m, 4), lambda i: (i, 0)),
        ),
        compiler_params=pltpu.CompilerParams(
            dimension_semantics=("parallel",)),
    )(x, c, w1, b1_2d, w2, b2_2d, consts)


# ------------------------------- Reference ------------------------------------

def motor_layer_reference(x, c, w1, b1, w2, b2, mlp_dtype=jnp.float32):
    """Pure-JAX port of MotorLayer.forward (code_proj -> MotorNorm -> PGA kernel -> bmm).

    `mlp_dtype` controls the operand dtype of the two Linear matmuls so the bf16-fed kernel
    can be checked at matched precision.  Everything else is exact f32.
    """
    hp = jax.lax.Precision.HIGHEST
    h = jnp.dot(c.astype(mlp_dtype), w1.astype(mlp_dtype),
                preferred_element_type=jnp.float32, precision=hp) + b1
    h = jnp.where(h >= 0.0, h, 0.01 * h)
    m = jnp.dot(h.astype(mlp_dtype), w2.astype(mlp_dtype),
                preferred_element_type=jnp.float32, precision=hp) + b2

    # MotorNorm (select_mat is diagonal with ones at blades {0,4,5,6}).
    mask = jnp.zeros((8,), jnp.float32).at[jnp.array([0, 4, 5, 6])].set(1.0)
    offset = jnp.zeros((8,), jnp.float32).at[0].set(1.0)
    m = m + offset
    nrm = jnp.sqrt(jnp.sum((m * mask) ** 2, axis=1, keepdims=True))   # (B, 1)
    nrm = (nrm - 1.0) * mask + 1.0                                    # norm at {0,4,5,6}, 1 elsewhere
    w = m * (1.0 / nrm)

    # get_pga_kernel (k0..k3 are the columns of the 4x4 kernel).
    a0, a1, a2, a3, a4, a5, a6, a7 = [w[:, i] for i in range(8)]
    kcol0 = jnp.stack([a0**2 + a6**2 - (a4**2 + a5**2),
                       2 * a5 * a6 - 2 * a0 * a4,
                       2 * a0 * a5 + 2 * a4 * a6,
                       a7 * 0], axis=-1)
    kcol1 = jnp.stack([2 * a0 * a4 + 2 * a5 * a6,
                       a0**2 + a5**2 - (a4**2 + a6**2),
                       2 * a4 * a5 - 2 * a0 * a6,
                       a7 * 0], axis=-1)
    kcol2 = jnp.stack([2 * a4 * a6 - 2 * a0 * a4,
                       2 * a0 * a6 + 2 * a4 * a5,
                       a0**2 + a4**2 - (a5**2 + a6**2),
                       a7 * 0], axis=-1)
    kcol3 = jnp.stack([2 * a3 * a5 - 2 * a2 * a4 - 2 * a0 * a1,
                       2 * a1 * a4 - 2 * a3 * a6 - 2 * a0 * a2,
                       2 * a2 * a6 - 2 * a1 * a5 - 2 * a0 * a3,
                       a0**2 + a4**2 + a5**2 + a6**2], axis=-1)
    k = jnp.stack([kcol0, kcol1, kcol2, kcol3], axis=-1)   # (B, 4, 4): [b, row, col]
    return jnp.sum(k * x[:, None, :], axis=-1)             # bmm(k, x[..., None]).squeeze(-1)


# --------------------------- Parameter construction ----------------------------

def make_params(key, code_sz, motor_sz=8, w_std=0.1, b_std=0.01):
    """Deterministic Linear params in (in, out) layout (i.e. torch weight.T).

    NOTE: torch's reset_parameters uses std 1e-3 / 1e-4, which makes the motor ~identity;
    the demo uses larger values so the rotor/translation math is actually exercised.
    """
    k1, k2, k3, k4 = jax.random.split(key, 4)
    w1 = w_std * jax.random.normal(k1, (code_sz, 2 * code_sz), jnp.float32)
    b1 = b_std * jax.random.normal(k2, (2 * code_sz,), jnp.float32)
    w2 = w_std * jax.random.normal(k3, (2 * code_sz, motor_sz), jnp.float32)
    b2 = b_std * jax.random.normal(k4, (motor_sz,), jnp.float32)
    return w1, b1, w2, b2


# ----------------------------------- Main --------------------------------------

if __name__ == "__main__":
    code_sz = 32
    n_points = 500          # deliberately NOT a multiple of 8 / tile_m: exercises the masked tail

    key = jax.random.PRNGKey(0)
    kx, kc, kp, kx2, kc2 = jax.random.split(key, 5)
    x = jax.random.normal(kx, (n_points, 4), jnp.float32)
    c = jax.random.normal(kc, (n_points, code_sz), jnp.float32)
    w1, b1, w2, b2 = make_params(kp, code_sz)

    out = jax.block_until_ready(motor_layer_pallas(x, c, w1, b1, w2, b2))
    assert out.shape == (n_points, 4), out.shape

    # Matched-precision check (reference also feeds the MLP matmuls bf16 operands).
    ref_m = motor_layer_reference(x, c, w1, b1, w2, b2, mlp_dtype=jnp.bfloat16)
    err_m = float(jnp.max(jnp.abs(out - ref_m)))
    assert err_m < 5e-3, f"matched-precision mismatch: max abs err {err_m}"

    # Loose sanity check against the full-f32 reference (bf16 only on MXU operands).
    ref_f = motor_layer_reference(x, c, w1, b1, w2, b2, mlp_dtype=jnp.float32)
    err_f = float(jnp.max(jnp.abs(out - ref_f)))
    assert err_f < 5e-2, f"f32 reference mismatch: max abs err {err_f}"

    # Multi-step grid with a ragged last block (2500 rows, tile_m=1024 -> grid=(3,)).
    n2 = 2500
    x2 = jax.random.normal(kx2, (n2, 4), jnp.float32)
    c2 = jax.random.normal(kc2, (n2, code_sz), jnp.float32)
    out2 = jax.block_until_ready(motor_layer_pallas(x2, c2, w1, b1, w2, b2, tile_m=1024))
    ref2 = motor_layer_reference(x2, c2, w1, b1, w2, b2, mlp_dtype=jnp.bfloat16)
    err2 = float(jnp.max(jnp.abs(out2 - ref2)))
    assert err2 < 5e-3, f"multi-tile mismatch: max abs err {err2}"

    print("KERNEL_OK")
</pallas_src>

<mosaic_0001>
module attributes {stable_mosaic.version = 11 : i64} {
  func.func @_motor_layer_kernel(%arg0: i32, %arg1: memref<504x4xf32, #tpu.memory_space<vmem>>, %arg2: memref<504x32xf32, #tpu.memory_space<vmem>>, %arg3: memref<32x64xbf16, #tpu.memory_space<vmem>>, %arg4: memref<1x64xf32, #tpu.memory_space<vmem>>, %arg5: memref<64x8xbf16, #tpu.memory_space<vmem>>, %arg6: memref<1x8xf32, #tpu.memory_space<vmem>>, %arg7: memref<48x38xf32, #tpu.memory_space<vmem>>, %arg8: memref<504x4xf32, #tpu.memory_space<vmem>>) attributes {dimension_semantics = [#tpu.dimension_semantics<parallel>], iteration_bounds = array<i64: 1>, scalar_prefetch = 0 : i64, scratch_operands = 0 : i64, tpu.core_type = #tpu.core_type<tc>, window_params = [{transform_indices = @transform_0, window_bounds = array<i64: 504, 4>}, {transform_indices = @transform_1, window_bounds = array<i64: 504, 32>}, {pipeline_mode = #tpu.pipeline_mode<synchronous>, transform_indices = @transform_2, window_bounds = array<i64: 32, 64>}, {pipeline_mode = #tpu.pipeline_mode<synchronous>, transform_indices = @transform_3, window_bounds = array<i64: 1, 64>}, {pipeline_mode = #tpu.pipeline_mode<synchronous>, transform_indices = @transform_4, window_bounds = array<i64: 64, 8>}, {pipeline_mode = #tpu.pipeline_mode<synchronous>, transform_indices = @transform_5, window_bounds = array<i64: 1, 8>}, {pipeline_mode = #tpu.pipeline_mode<synchronous>, transform_indices = @transform_6, window_bounds = array<i64: 48, 38>}, {transform_indices = @transform_7, window_bounds = array<i64: 504, 4>}]} {
    %c0 = arith.constant 0 : index
    %c0_0 = arith.constant 0 : index
    %0 = vector.load %arg2[%c0, %c0_0] : memref<504x32xf32, #tpu.memory_space<vmem>>, vector<504x32xf32>
    %1 = arith.truncf %0 : vector<504x32xf32> to vector<504x32xbf16>
    %c0_1 = arith.constant 0 : index
    %c0_2 = arith.constant 0 : index
    %2 = vector.load %arg3[%c0_1, %c0_2] : memref<32x64xbf16, #tpu.memory_space<vmem>>, vector<32x64xbf16>
    %cst = arith.constant dense<0.000000e+00> : vector<504x64xf32>
    %3 = tpu.matmul %1, %2, %cst {dimension_numbers = #tpu.dot_dimension_numbers<[1], [0], [0], [1], [0, 0, 1, 1], [], []>} : vector<504x32xbf16>, vector<32x64xbf16>, vector<504x64xf32> -> vector<504x64xf32>
    %c0_3 = arith.constant 0 : index
    %c0_4 = arith.constant 0 : index
    %4 = vector.load %arg4[%c0_3, %c0_4] : memref<1x64xf32, #tpu.memory_space<vmem>>, vector<1x64xf32>
    %5 = vector.broadcast %4 : vector<1x64xf32> to vector<504x64xf32>
    %6 = arith.addf %3, %5 : vector<504x64xf32>
    %cst_5 = arith.constant 0.00999999977 : f32
    %7 = vector.broadcast %cst_5 : f32 to vector<504x64xf32>
    %8 = arith.mulf %7, %6 : vector<504x64xf32>
    %9 = arith.maximumf %6, %8 : vector<504x64xf32>
    %10 = arith.truncf %9 : vector<504x64xf32> to vector<504x64xbf16>
    %c0_6 = arith.constant 0 : index
    %c0_7 = arith.constant 0 : index
    %11 = vector.load %arg5[%c0_6, %c0_7] : memref<64x8xbf16, #tpu.memory_space<vmem>>, vector<64x8xbf16>
    %cst_8 = arith.constant dense<0.000000e+00> : vector<504x8xf32>
    %12 = tpu.matmul %10, %11, %cst_8 {dimension_numbers = #tpu.dot_dimension_numbers<[1], [0], [0], [1], [0, 0, 1, 1], [], []>} : vector<504x64xbf16>, vector<64x8xbf16>, vector<504x8xf32> -> vector<504x8xf32>
    %c0_9 = arith.constant 0 : index
    %c0_10 = arith.constant 0 : index
    %13 = vector.load %arg6[%c0_9, %c0_10] : memref<1x8xf32, #tpu.memory_space<vmem>>, vector<1x8xf32>
    %14 = vector.broadcast %13 : vector<1x8xf32> to vector<504x8xf32>
    %15 = arith.addf %12, %14 : vector<504x8xf32>
    %16 = tpu.iota {dimensions = array<i32: 1>} : vector<1x8xi32>
    %c0_i32 = arith.constant 0 : i32
    %17 = vector.broadcast %c0_i32 : i32 to vector<1x8xi32>
    %18 = arith.cmpi eq, %16, %17 : vector<1x8xi32>
    %c4_i32 = arith.constant 4 : i32
    %19 = vector.broadcast %c4_i32 : i32 to vector<1x8xi32>
    %20 = arith.cmpi eq, %16, %19 : vector<1x8xi32>
    %21 = arith.ori %18, %20 : vector<1x8xi1>
    %c5_i32 = arith.constant 5 : i32
    %22 = vector.broadcast %c5_i32 : i32 to vector<1x8xi32>
    %23 = arith.cmpi eq, %16, %22 : vector<1x8xi32>
    %24 = arith.ori %21, %23 : vector<1x8xi1>
    %c6_i32 = arith.constant 6 : i32
    %25 = vector.broadcast %c6_i32 : i32 to vector<1x8xi32>
    %26 = arith.cmpi eq, %16, %25 : vector<1x8xi32>
    %27 = arith.ori %24, %26 : vector<1x8xi1>
    %28 = arith.extui %27 : vector<1x8xi1> to vector<1x8xi32>
    %29 = arith.sitofp %28 : vector<1x8xi32> to vector<1x8xf32>
    %30 = arith.mulf %15, %15 : vector<504x8xf32>
    %31 = vector.broadcast %29 : vector<1x8xf32> to vector<504x8xf32>
    %32 = arith.mulf %30, %31 : vector<504x8xf32>
    %cst_11 = arith.constant dense<0.000000e+00> : vector<504xf32>
    %33 = vector.multi_reduction <add>, %32, %cst_11 [1] : vector<504x8xf32> to vector<504xf32>
    %34 = vector.shape_cast %33 : vector<504xf32> to vector<504x1xf32>
    %cst_12 = arith.constant 1.000000e-30 : f32
    %35 = vector.broadcast %cst_12 : f32 to vector<504x1xf32>
    %36 = arith.maximumf %34, %35 : vector<504x1xf32>
    %37 = math.rsqrt %36 : vector<504x1xf32>
    %38 = vector.broadcast %37 : vector<504x1xf32> to vector<504x8xf32>
    %39 = vector.broadcast %29 : vector<1x8xf32> to vector<504x8xf32>
    %40 = arith.mulf %38, %39 : vector<504x8xf32>
    %cst_13 = arith.constant 1.000000e+00 : f32
    %41 = vector.broadcast %cst_13 : f32 to vector<1x8xf32>
    %42 = arith.subf %41, %29 : vector<1x8xf32>
    %43 = vector.broadcast %42 : vector<1x8xf32> to vector<504x8xf32>
    %44 = arith.addf %40, %43 : vector<504x8xf32>
    %45 = arith.mulf %15, %44 : vector<504x8xf32>
    %c0_14 = arith.constant 0 : index
    %c0_15 = arith.constant 0 : index
    %46 = vector.load %arg7[%c0_14, %c0_15] : memref<48x38xf32, #tpu.memory_space<vmem>>, vector<8x38xf32>
    %cst_16 = arith.constant dense<0.000000e+00> : vector<504x38xf32>
    %47 = tpu.matmul %45, %46, %cst_16 {dimension_numbers = #tpu.dot_dimension_numbers<[1], [0], [0], [1], [0, 0, 1, 1], [], []>} : vector<504x8xf32>, vector<8x38xf32>, vector<504x38xf32> -> vector<504x38xf32>
    %48 = vector.extract_strided_slice %47 {offsets = [0, 0], sizes = [504, 19], strides = [1, 1]} : vector<504x38xf32> to vector<504x19xf32>
    %49 = vector.extract_strided_slice %47 {offsets = [0, 19], sizes = [504, 19], strides = [1, 1]} : vector<504x38xf32> to vector<504x19xf32>
    %50 = arith.mulf %48, %49 : vector<504x19xf32>
    %c8 = arith.constant 8 : index
    %c0_17 = arith.constant 0 : index
    %51 = vector.load %arg7[%c8, %c0_17] : memref<48x38xf32, #tpu.memory_space<vmem>>, vector<19x16xf32>
    %cst_18 = arith.constant dense<0.000000e+00> : vector<504x16xf32>
    %52 = tpu.matmul %50, %51, %cst_18 {dimension_numbers = #tpu.dot_dimension_numbers<[1], [0], [0], [1], [0, 0, 1, 1], [], []>} : vector<504x19xf32>, vector<19x16xf32>, vector<504x16xf32> -> vector<504x16xf32>
    %c0_19 = arith.constant 0 : index
    %c0_20 = arith.constant 0 : index
    %53 = vector.load %arg1[%c0_19, %c0_20] : memref<504x4xf32, #tpu.memory_space<vmem>>, vector<504x4xf32>
    %54 = tpu.concatenate %53, %53, %53, %53 in 1 : vector<504x4xf32>, vector<504x4xf32>, vector<504x4xf32>, vector<504x4xf32> -> vector<504x16xf32>
    %55 = arith.mulf %52, %54 : vector<504x16xf32>
    %c32 = arith.constant 32 : index
    %c0_21 = arith.constant 0 : index
    %56 = vector.load %arg7[%c32, %c0_21] : memref<48x38xf32, #tpu.memory_space<vmem>>, vector<16x4xf32>
    %cst_22 = arith.constant dense<0.000000e+00> : vector<504x4xf32>
    %57 = tpu.matmul %55, %56, %cst_22 {dimension_numbers = #tpu.dot_dimension_numbers<[1], [0], [0], [1], [0, 0, 1, 1], [], []>} : vector<504x16xf32>, vector<16x4xf32>, vector<504x4xf32> -> vector<504x4xf32>
    %c0_23 = arith.constant 0 : index
    %c0_24 = arith.constant 0 : index
    %58 = vector.load %arg8[%c0_23, %c0_24] : memref<504x4xf32, #tpu.memory_space<vmem>>, vector<504x4xf32>
    tpu.vector_store %arg8[%c0_23, %c0_24], %57 {strides = array<i32>} : memref<504x4xf32, #tpu.memory_space<vmem>>, vector<504x4xf32>,
    return
  }
  func.func @transform_0(%arg0: i32) -> (i32, i32) {
    %c0_i32 = arith.constant 0 : i32
    %c0_i32_0 = arith.constant 0 : i32
    return %arg0, %c0_i32 : i32, i32
  }
  func.func @transform_1(%arg0: i32) -> (i32, i32) {
    %c0_i32 = arith.constant 0 : i32
    %c0_i32_0 = arith.constant 0 : i32
    return %arg0, %c0_i32 : i32, i32
  }
  func.func @transform_2(%arg0: i32) -> (i32, i32) {
    %c0_i32 = arith.constant 0 : i32
    %c0_i32_0 = arith.constant 0 : i32
    %c0_i32_1 = arith.constant 0 : i32
    return %c0_i32, %c0_i32_0 : i32, i32
  }
  func.func @transform_3(%arg0: i32) -> (i32, i32) {
    %c0_i32 = arith.constant 0 : i32
    %c0_i32_0 = arith.constant 0 : i32
    %c0_i32_1 = arith.constant 0 : i32
    return %c0_i32, %c0_i32_0 : i32, i32
  }
  func.func @transform_4(%arg0: i32) -> (i32, i32) {
    %c0_i32 = arith.constant 0 : i32
    %c0_i32_0 = arith.constant 0 : i32
    %c0_i32_1 = arith.constant 0 : i32
    return %c0_i32, %c0_i32_0 : i32, i32
  }
  func.func @transform_5(%arg0: i32) -> (i32, i32) {
    %c0_i32 = arith.constant 0 : i32
    %c0_i32_0 = arith.constant 0 : i32
    %c0_i32_1 = arith.constant 0 : i32
    return %c0_i32, %c0_i32_0 : i32, i32
  }
  func.func @transform_6(%arg0: i32) -> (i32, i32) {
    %c0_i32 = arith.constant 0 : i32
    %c0_i32_0 = arith.constant 0 : i32
    %c0_i32_1 = arith.constant 0 : i32
    return %c0_i32, %c0_i32_0 : i32, i32
  }
  func.func @transform_7(%arg0: i32) -> (i32, i32) {
    %c0_i32 = arith.constant 0 : i32
    %c0_i32_0 = arith.constant 0 : i32
    return %arg0, %c0_i32 : i32, i32
  }
}

</mosaic_0001>

<llo_original>
// kernel: tpu_custom_call.1
$region0: #{tpu_custom_call.1}
  #allocation0 [shape = 'u32[]', space=smem, size = 0x4, offset = 0x4, fixed_abs, tag = 'smem constant byte address 0x4 - core index']
  #allocation1 [shape = 'u32[144,128]{1,0:T(1,128)}', space=vmem, size = 0x12000, scoped, tag = 'internal scratch']
  %s0 = inlined_call_operand.vmem [shape: f32[500,4], index: 0, kind: input, shape index: {}]
  %s1 = inlined_call_operand.vmem [shape: f32[500,32], index: 1, kind: input, shape index: {}]
  %s2 = inlined_call_operand.vmem [shape: bf16[32,64], index: 2, kind: input, shape index: {}]
  %s3 = inlined_call_operand.vmem [shape: f32[1,64], index: 3, kind: input, shape index: {}]
  %s4 = inlined_call_operand.vmem [shape: bf16[64,8], index: 4, kind: input, shape index: {}]
  %s5 = inlined_call_operand.vmem [shape: f32[1,8], index: 5, kind: input, shape index: {}]
  %s6 = inlined_call_operand.vmem [shape: f32[48,38], index: 6, kind: input, shape index: {}]
  %s7 = inlined_call_operand.vmem [shape: f32[500,4], index: 7, kind: output, shape index: {}]
  %s8 = sld [smem:[#allocation0]]
  $region38: #{tpu_custom_call.1} parent=0
    _
  %s10 = ssub.s32 1, %s8
  %s11 = scalar_select 0, %s10, %s8
  // Predicated region
  $region2: #{tpu_custom_call.1} parent=0 // pred_check
    _
  $region3: #{tpu_custom_call.1} parent=0 // pred_check_branch
    %13 = sbr.rel (0) target = $region5
  $region4: #{tpu_custom_call.1} parent=0 // pred_region
    _
  $region5: #{tpu_custom_call.1} parent=0 // pred_fallthru
    _
  // Predicated region
  $region6: #{tpu_custom_call.1} parent=0 // pred_check
    _
  $region7: #{tpu_custom_call.1} parent=0 // pred_check_branch
    %15 = sbr.rel (0) target = $region9
  $region8: #{tpu_custom_call.1} parent=0 // pred_region
    _
  $region9: #{tpu_custom_call.1} parent=0 // pred_fallthru
    _
  // Predicated region
  $region10: #{tpu_custom_call.1} parent=0 // pred_check
    _
  $region11: #{tpu_custom_call.1} parent=0 // pred_check_branch
    %17 = sbr.rel (0) target = $region13
  $region12: #{tpu_custom_call.1} parent=0 // pred_region
    _
  $region13: #{tpu_custom_call.1} parent=0 // pred_fallthru
    _
  // Predicated region
  $region14: #{tpu_custom_call.1} parent=0 // pred_check
    _
  $region15: #{tpu_custom_call.1} parent=0 // pred_check_branch
    %19 = sbr.rel (0) target = $region17
  $region16: #{tpu_custom_call.1} parent=0 // pred_region
    _
  $region17: #{tpu_custom_call.1} parent=0 // pred_fallthru
    _
  // Predicated region
  $region18: #{tpu_custom_call.1} parent=0 // pred_check
    _
  $region19: #{tpu_custom_call.1} parent=0 // pred_check_branch
    %21 = sbr.rel (0) target = $region21
  $region20: #{tpu_custom_call.1} parent=0 // pred_region
    _
  $region21: #{tpu_custom_call.1} parent=0 // pred_fallthru
    _
  // Predicated region
  $region22: #{tpu_custom_call.1} parent=0 // pred_check
    _
  $region23: #{tpu_custom_call.1} parent=0 // pred_check_branch
    %23 = sbr.rel (0) target = $region25
  $region24: #{tpu_custom_call.1} parent=0 // pred_region
    _
  $region25: #{tpu_custom_call.1} parent=0 // pred_fallthru
    _
  // Predicated region
  $region26: #{tpu_custom_call.1} parent=0 // pred_check
    _
  $region27: #{tpu_custom_call.1} parent=0 // pred_check_branch
    %25 = sbr.rel (0) target = $region29
  $region28: #{tpu_custom_call.1} parent=0 // pred_region
    _
  $region29: #{tpu_custom_call.1} parent=0 // pred_fallthru
    _
  %v27 = vld [vmem:[%s1] sm:$0xff]
  %v28 = vld [vmem:[%s1 + $0x8] sm:$0xff]
  %v29 = vld [vmem:[%s1 + $0x10] sm:$0xff]
  %v30 = vld [vmem:[%s1 + $0x18] sm:$0xff]
  %v31 = vld [vmem:[%s1 + $0x20] sm:$0xff]
  %v32 = vld [vmem:[%s1 + $0x28] sm:$0xff]
  %v33 = vld [vmem:[%s1 + $0x30] sm:$0xff]
  %v34 = vld [vmem:[%s1 + $0x38] sm:$0xff]
  %v35 = vld [vmem:[%s1 + $0x40] sm:$0xff]
  %v36 = vld [vmem:[%s1 + $0x48] sm:$0xff]
  %v37 = vld [vmem:[%s1 + $0x50] sm:$0xff]
  %v38 = vld [vmem:[%s1 + $0x58] sm:$0xff]
  %v39 = vld [vmem:[%s1 + $0x60] sm:$0xff]
  %v40 = vld [vmem:[%s1 + $0x68] sm:$0xff]
  %v41 = vld [vmem:[%s1 + $0x70] sm:$0xff]
  %v42 = vld [vmem:[%s1 + $0x78] sm:$0xff]
  %v43 = vld [vmem:[%s1 + $0x80] sm:$0xff]
  %v44 = vld [vmem:[%s1 + $0x88] sm:$0xff]
  %v45 = vld [vmem:[%s1 + $0x90] sm:$0xff]
  %v46 = vld [vmem:[%s1 + $0x98] sm:$0xff]
  %v47 = vld [vmem:[%s1 + $0xa0] sm:$0xff]
  %v48 = vld [vmem:[%s1 + $0xa8] sm:$0xff]
  %v49 = vld [vmem:[%s1 + $0xb0] sm:$0xff]
  %v50 = vld [vmem:[%s1 + $0xb8] sm:$0xff]
  %v51 = vld [vmem:[%s1 + $0xc0] sm:$0xff]
  %v52 = vld [vmem:[%s1 + $0xc8] sm:$0xff]
  %v53 = vld [vmem:[%s1 + $0xd0] sm:$0xff]
  %v54 = vld [vmem:[%s1 + $0xd8] sm:$0xff]
  %v55 = vld [vmem:[%s1 + $0xe0] sm:$0xff]
  %v56 = vld [vmem:[%s1 + $0xe8] sm:$0xff]
  %v57 = vld [vmem:[%s1 + $0xf0] sm:$0xff]
  %v58 = vld [vmem:[%s1 + $0xf8] sm:$0xff]
  %v59 = vld [vmem:[%s1 + $0x100] sm:$0xff]
  %v60 = vld [vmem:[%s1 + $0x108] sm:$0xff]
  %v61 = vld [vmem:[%s1 + $0x110] sm:$0xff]
  %v62 = vld [vmem:[%s1 + $0x118] sm:$0xff]
  %v63 = vld [vmem:[%s1 + $0x120] sm:$0xff]
  %v64 = vld [vmem:[%s1 + $0x128] sm:$0xff]
  %v65 = vld [vmem:[%s1 + $0x130] sm:$0xff]
  %v66 = vld [vmem:[%s1 + $0x138] sm:$0xff]
  %v67 = vld [vmem:[%s1 + $0x140] sm:$0xff]
  %v68 = vld [vmem:[%s1 + $0x148] sm:$0xff]
  %v69 = vld [vmem:[%s1 + $0x150] sm:$0xff]
  %v70 = vld [vmem:[%s1 + $0x158] sm:$0xff]
  %v71 = vld [vmem:[%s1 + $0x160] sm:$0xff]
  %v72 = vld [vmem:[%s1 + $0x168] sm:$0xff]
  %v73 = vld [vmem:[%s1 + $0x170] sm:$0xff]
  %v74 = vld [vmem:[%s1 + $0x178] sm:$0xff]
  %v75 = vld [vmem:[%s1 + $0x180] sm:$0xff]
  %v76 = vld [vmem:[%s1 + $0x188] sm:$0xff]
  %v77 = vld [vmem:[%s1 + $0x190] sm:$0xff]
  %v78 = vld [vmem:[%s1 + $0x198] sm:$0xff]
  %v79 = vld [vmem:[%s1 + $0x1a0] sm:$0xff]
  %v80 = vld [vmem:[%s1 + $0x1a8] sm:$0xff]
  %v81 = vld [vmem:[%s1 + $0x1b0] sm:$0xff]
  %v82 = vld [vmem:[%s1 + $0x1b8] sm:$0xff]
  %v83 = vld [vmem:[%s1 + $0x1c0] sm:$0xff]
  %v84 = vld [vmem:[%s1 + $0x1c8] sm:$0xff]
  %v85 = vld [vmem:[%s1 + $0x1d0] sm:$0xff]
  %v86 = vld [vmem:[%s1 + $0x1d8] sm:$0xff]
  %v87 = vld [vmem:[%s1 + $0x1e0] sm:$0xff]
  %v88 = vld [vmem:[%s1 + $0x1e8] sm:$0xff]
  %v89 = vld [vmem:[%s1 + $0x1f0] sm:$0xff]
  %v90 = vpack.c.bf16 %v28, %v27
  %v91 = vpack.c.bf16 %v30, %v29
  %v92 = vpack.c.bf16 %v32, %v31
  %v93 = vpack.c.bf16 %v34, %v33
  %v94 = vpack.c.bf16 %v36, %v35
  %v95 = vpack.c.bf16 %v38, %v37
  %v96 = vpack.c.bf16 %v40, %v39
  %v97 = vpack.c.bf16 %v42, %v41
  %v98 = vpack.c.bf16 %v44, %v43
  %v99 = vpack.c.bf16 %v46, %v45
  %v100 = vpack.c.bf16 %v48, %v47
  %v101 = vpack.c.bf16 %v50, %v49
  %v102 = vpack.c.bf16 %v52, %v51
  %v103 = vpack.c.bf16 %v54, %v53
  %v104 = vpack.c.bf16 %v56, %v55
  %v105 = vpack.c.bf16 %v58, %v57
  %v106 = vpack.c.bf16 %v60, %v59
  %v107 = vpack.c.bf16 %v62, %v61
  %v108 = vpack.c.bf16 %v64, %v63
  %v109 = vpack.c.bf16 %v66, %v65
  %v110 = vpack.c.bf16 %v68, %v67
  %v111 = vpack.c.bf16 %v70, %v69
  %v112 = vpack.c.bf16 %v72, %v71
  %v113 = vpack.c.bf16 %v74, %v73
  %v114 = vpack.c.bf16 %v76, %v75
  %v115 = vpack.c.bf16 %v78, %v77
  %v116 = vpack.c.bf16 %v80, %v79
  %v117 = vpack.c.bf16 %v82, %v81
  %v118 = vpack.c.bf16 %v84, %v83
  %v119 = vpack.c.bf16 %v86, %v85
  %v120 = vpack.c.bf16 %v88, %v87
  %v121 = vpack.c.bf16 %v89, %v89
  %v122 = vld [vmem:[%s2] sm:$0xf]
  %v123 = vld [vmem:[%s2 + $0x4] sm:$0xf]
  %v124 = vld [vmem:[%s2 + $0x8] sm:$0xf]
  %v125 = vld [vmem:[%s2 + $0xc] sm:$0xf]
  %v126 = vld [vmem:[%s3] sm:$0x1]
  %v128 = vlaneseq
  %v129 = vshrl.u32 %v128, 7
  %v130 = vsub.s32 0, %v129
  %v131 = vrot.slane %v126, %v130
  %v137 = vunpack.c.l.b16 %v122
  %v138 = vunpack.c.l.b16 %v123
  %v139 = vunpack.c.l.b16 %v124
  %v140 = vunpack.c.l.b16 %v125
  %v141 = vpack.c.b16 %v138, %v137
  %v142 = vpack.c.b16 %v140, %v139
  %vm145 = vcmask 261120
  %v147 = vsel %vm145, %v90, 0
  %v150 = vsel %vm145, %v91, 0
  %v153 = vsel %vm145, %v92, 0
  %v156 = vsel %vm145, %v93, 0
  %v159 = vsel %vm145, %v94, 0
  %v162 = vsel %vm145, %v95, 0
  %v165 = vsel %vm145, %v96, 0
  %v168 = vsel %vm145, %v97, 0
  %v171 = vsel %vm145, %v98, 0
  %v174 = vsel %vm145, %v99, 0
  %v177 = vsel %vm145, %v100, 0
  %v180 = vsel %vm145, %v101, 0
  %v183 = vsel %vm145, %v102, 0
  %v186 = vsel %vm145, %v103, 0
  %v189 = vsel %vm145, %v104, 0
  %v192 = vsel %vm145, %v105, 0
  %v195 = vsel %vm145, %v106, 0
  %v198 = vsel %vm145, %v107, 0
  %v201 = vsel %vm145, %v108, 0
  %v204 = vsel %vm145, %v109, 0
  %v207 = vsel %vm145, %v110, 0
  %v210 = vsel %vm145, %v111, 0
  %v213 = vsel %vm145, %v112, 0
  %v216 = vsel %vm145, %v113, 0
  %v219 = vsel %vm145, %v114, 0
  %v222 = vsel %vm145, %v115, 0
  %v225 = vsel %vm145, %v116, 0
  %v228 = vsel %vm145, %v117, 0
  %v231 = vsel %vm145, %v118, 0
  %v234 = vsel %vm145, %v119, 0
  %v237 = vsel %vm145, %v120, 0
  %v240 = vsel %vm145, %v121, 0
  %242 = vmatprep.subr.bf16.mxu0 0
  %243 = vmatpush1.bf16.msra.mxu0 0
  %244 = vmatprep.subr.bf16.mxu0 0
  %245 = vmatpush1.bf16.msra.mxu0 0
  %246 = vmatprep.subr.bf16.mxu0 0
  %247 = vmatpush1.bf16.msra.mxu0 0
  %248 = vmatprep.subr.bf16.mxu0 0
  %249 = vmatpush1.bf16.msra.mxu0 0
  %250 = vmatprep.subr.bf16.mxu0 0
  %251 = vmatpush1.bf16.msra.mxu0 0
  %252 = vmatprep.subr.bf16.mxu0 0
  %253 = vmatpush1.bf16.msra.mxu0 0
  %254 = vmatprep.subr.bf16.mxu0 0
  %255 = vmatpush1.bf16.msra.mxu0 %v142
  %256 = vmatprep.subr.bf16.mxu0 0
  %257 = vmatpush1.bf16.msra.mxu0 %v141
  %258 = vmatprep.subr.bf16.mxu0 0
  %259 = vmatpush2.bf16.msra.mxu0 0
  %260 = vmatprep.subr.bf16.mxu0 0
  %261 = vmatpush2.bf16.msra.mxu0 0
  %262 = vmatprep.subr.bf16.mxu0 0
  %263 = vmatpush2.bf16.msra.mxu0 0
  %264 = vmatprep.subr.bf16.mxu0 0
  %265 = vmatpush2.bf16.msra.mxu0 0
  %266 = vmatprep.subr.bf16.mxu0 0
  %267 = vmatpush2.bf16.msra.mxu0 0
  %268 = vmatprep.subr.bf16.mxu0 0
  %269 = vmatpush2.bf16.msra.mxu0 0
  %270 = vmatprep.subr.bf16.mxu0 0
  %271 = vmatpush2.bf16.msra.mxu0 0
  %272 = vmatprep.subr.bf16.mxu0 0
  %273 = vmatpush2.bf16.msra.mxu0 0
  %274 = vmatprep.mubr.bf16.mxu0 0
  %275 = vmatmul.mubr.bf16.gmra.mxu0 %v147
  %v276 = vpop.f32.mrf.mxu0
  %v277 = vadd.f32 %v131, %v276
  %v278 = vpop.f32.mrf.mxu0
  %v279 = vpop.f32.mrf.mxu0
  %v280 = vadd.f32 %v131, %v279
  %v281 = vpop.f32.mrf.mxu0
  %282 = vmatprep.mubr.bf16.mxu0 0
  %283 = vmatmul.mubr.bf16.gmra.mxu0 %v150
  %v284 = vpop.f32.mrf.mxu0
  %v285 = vadd.f32 %v131, %v284
  %v286 = vpop.f32.mrf.mxu0
  %v287 = vpop.f32.mrf.mxu0
  %v288 = vadd.f32 %v131, %v287
  %v289 = vpop.f32.mrf.mxu0
  %290 = vmatprep.mubr.bf16.mxu0 0
  %291 = vmatmul.mubr.bf16.gmra.mxu0 %v153
  %v292 = vpop.f32.mrf.mxu0
  %v293 = vadd.f32 %v131, %v292
  %v294 = vpop.f32.mrf.mxu0
  %v295 = vpop.f32.mrf.mxu0
  %v296 = vadd.f32 %v131, %v295
  %v297 = vpop.f32.mrf.mxu0
  %298 = vmatprep.mubr.bf16.mxu0 0
  %299 = vmatmul.mubr.bf16.gmra.mxu0 %v156
  %v300 = vpop.f32.mrf.mxu0
  %v301 = vadd.f32 %v131, %v300
  %v302 = vpop.f32.mrf.mxu0
  %v303 = vpop.f32.mrf.mxu0
  %v304 = vadd.f32 %v131, %v303
  %v305 = vpop.f32.mrf.mxu0
  %306 = vmatprep.mubr.bf16.mxu0 0
  %307 = vmatmul.mubr.bf16.gmra.mxu0 %v159
  %v308 = vpop.f32.mrf.mxu0
  %v309 = vadd.f32 %v131, %v308
  %v310 = vpop.f32.mrf.mxu0
  %v311 = vpop.f32.mrf.mxu0
  %v312 = vadd.f32 %v131, %v311
  %v313 = vpop.f32.mrf.mxu0
  %314 = vmatprep.mubr.bf16.mxu0 0
  %315 = vmatmul.mubr.bf16.gmra.mxu0 %v162
  %v316 = vpop.f32.mrf.mxu0
  %v317 = vadd.f32 %v131, %v316
  %v318 = vpop.f32.mrf.mxu0
  %v319 = vpop.f32.mrf.mxu0
  %v320 = vadd.f32 %v131, %v319
  %v321 = vpop.f32.mrf.mxu0
  %322 = vmatprep.mubr.bf16.mxu0 0
  %323 = vmatmul.mubr.bf16.gmra.mxu0 %v165
  %v324 = vpop.f32.mrf.mxu0
  %v325 = vadd.f32 %v131, %v324
  %v326 = vpop.f32.mrf.mxu0
  %v327 = vpop.f32.mrf.mxu0
  %v328 = vadd.f32 %v131, %v327
  %v329 = vpop.f32.mrf.mxu0
  %330 = vmatprep.mubr.bf16.mxu0 0
  %331 = vmatmul.mubr.bf16.gmra.mxu0 %v168
  %v332 = vpop.f32.mrf.mxu0
  %v333 = vadd.f32 %v131, %v332
  %v334 = vpop.f32.mrf.mxu0
  %v335 = vpop.f32.mrf.mxu0
  %v336 = vadd.f32 %v131, %v335
  %v337 = vpop.f32.mrf.mxu0
  %338 = vmatprep.mubr.bf16.mxu0 0
  %339 = vmatmul.mubr.bf16.gmra.mxu0 %v171
  %v340 = vpop.f32.mrf.mxu0
  %v341 = vadd.f32 %v131, %v340
  %v342 = vpop.f32.mrf.mxu0
  %v343 = vpop.f32.mrf.mxu0
  %v344 = vadd.f32 %v131, %v343
  %v345 = vpop.f32.mrf.mxu0
  %346 = vmatprep.mubr.bf16.mxu0 0
  %347 = vmatmul.mubr.bf16.gmra.mxu0 %v174
  %v348 = vpop.f32.mrf.mxu0
  %v349 = vadd.f32 %v131, %v348
  %v350 = vpop.f32.mrf.mxu0
  %v351 = vpop.f32.mrf.mxu0
  %v352 = vadd.f32 %v131, %v351
  %v353 = vpop.f32.mrf.mxu0
  %354 = vmatprep.mubr.bf16.mxu0 0
  %355 = vmatmul.mubr.bf16.gmra.mxu0 %v177
  %v356 = vpop.f32.mrf.mxu0
  %v357 = vadd.f32 %v131, %v356
  %v358 = vpop.f32.mrf.mxu0
  %v359 = vpop.f32.mrf.mxu0
  %v360 = vadd.f32 %v131, %v359
  %v361 = vpop.f32.mrf.mxu0
  %362 = vmatprep.mubr.bf16.mxu0 0
  %363 = vmatmul.mubr.bf16.gmra.mxu0 %v180
  %v364 = vpop.f32.mrf.mxu0
  %v365 = vadd.f32 %v131, %v364
  %v366 = vpop.f32.mrf.mxu0
  %v367 = vpop.f32.mrf.mxu0
  %v368 = vadd.f32 %v131, %v367
  %v369 = vpop.f32.mrf.mxu0
  %370 = vmatprep.mubr.bf16.mxu0 0
  %371 = vmatmul.mubr.bf16.gmra.mxu0 %v183
  %v372 = vpop.f32.mrf.mxu0
  %v373 = vadd.f32 %v131, %v372
  %v374 = vpop.f32.mrf.mxu0
  %v375 = vpop.f32.mrf.mxu0
  %v376 = vadd.f32 %v131, %v375
  %v377 = vpop.f32.mrf.mxu0
  %378 = vmatprep.mubr.bf16.mxu0 0
  %379 = vmatmul.mubr.bf16.gmra.mxu0 %v186
  %v380 = vpop.f32.mrf.mxu0
  %v381 = vadd.f32 %v131, %v380
  %v382 = vpop.f32.mrf.mxu0
  %v383 = vpop.f32.mrf.mxu0
  %v384 = vadd.f32 %v131, %v383
  %v385 = vpop.f32.mrf.mxu0
  %386 = vmatprep.mubr.bf16.mxu0 0
  %387 = vmatmul.mubr.bf16.gmra.mxu0 %v189
  %v388 = vpop.f32.mrf.mxu0
  %v389 = vadd.f32 %v131, %v388
  %v390 = vpop.f32.mrf.mxu0
  %v391 = vpop.f32.mrf.mxu0
  %v392 = vadd.f32 %v131, %v391
  %v393 = vpop.f32.mrf.mxu0
  %394 = vmatprep.mubr.bf16.mxu0 0
  %395 = vmatmul.mubr.bf16.gmra.mxu0 %v192
  %v396 = vpop.f32.mrf.mxu0
  %v397 = vadd.f32 %v131, %v396
  %v398 = vpop.f32.mrf.mxu0
  %v399 = vpop.f32.mrf.mxu0
  %v400 = vadd.f32 %v131, %v399
  %v401 = vpop.f32.mrf.mxu0
  %402 = vmatprep.mubr.bf16.mxu0 0
  %403 = vmatmul.mubr.bf16.gmra.mxu0 %v195
  %v404 = vpop.f32.mrf.mxu0
  %v405 = vadd.f32 %v131, %v404
  %v406 = vpop.f32.mrf.mxu0
  %v407 = vpop.f32.mrf.mxu0
  %v408 = vadd.f32 %v131, %v407
  %v409 = vpop.f32.mrf.mxu0
  %410 = vmatprep.mubr.bf16.mxu0 0
  %411 = vmatmul.mubr.bf16.gmra.mxu0 %v198
  %v412 = vpop.f32.mrf.mxu0
  %v413 = vadd.f32 %v131, %v412
  %v414 = vpop.f32.mrf.mxu0
  %v415 = vpop.f32.mrf.mxu0
  %v416 = vadd.f32 %v131, %v415
  %v417 = vpop.f32.mrf.mxu0
  %418 = vmatprep.mubr.bf16.mxu0 0
  %419 = vmatmul.mubr.bf16.gmra.mxu0 %v201
  %v420 = vpop.f32.mrf.mxu0
  %v421 = vadd.f32 %v131, %v420
  %v422 = vpop.f32.mrf.mxu0
  %v423 = vpop.f32.mrf.mxu0
  %v424 = vadd.f32 %v131, %v423
  %v425 = vpop.f32.mrf.mxu0
  %426 = vmatprep.mubr.bf16.mxu0 0
  %427 = vmatmul.mubr.bf16.gmra.mxu0 %v204
  %v428 = vpop.f32.mrf.mxu0
  %v429 = vadd.f32 %v131, %v428
  %v430 = vpop.f32.mrf.mxu0
  %v431 = vpop.f32.mrf.mxu0
  %v432 = vadd.f32 %v131, %v431
  %v433 = vpop.f32.mrf.mxu0
  %434 = vmatprep.mubr.bf16.mxu0 0
  %435 = vmatmul.mubr.bf16.gmra.mxu0 %v207
  %v436 = vpop.f32.mrf.mxu0
  %v437 = vadd.f32 %v131, %v436
  %v438 = vpop.f32.mrf.mxu0
  %v439 = vpop.f32.mrf.mxu0
  %v440 = vadd.f32 %v131, %v439
  %v441 = vpop.f32.mrf.mxu0
  %442 = vmatprep.mubr.bf16.mxu0 0
  %443 = vmatmul.mubr.bf16.gmra.mxu0 %v210
  %v444 = vpop.f32.mrf.mxu0
  %v445 = vadd.f32 %v131, %v444
  %v446 = vpop.f32.mrf.mxu0
  %v447 = vpop.f32.mrf.mxu0
  %v448 = vadd.f32 %v131, %v447
  %v449 = vpop.f32.mrf.mxu0
  %450 = vmatprep.mubr.bf16.mxu0 0
  %451 = vmatmul.mubr.bf16.gmra.mxu0 %v213
  %v452 = vpop.f32.mrf.mxu0
  %v453 = vadd.f32 %v131, %v452
  %v454 = vpop.f32.mrf.mxu0
  %v455 = vpop.f32.mrf.mxu0
  %v456 = vadd.f32 %v131, %v455
  %v457 = vpop.f32.mrf.mxu0
  %458 = vmatprep.mubr.bf16.mxu0 0
  %459 = vmatmul.mubr.bf16.gmra.mxu0 %v216
  %v460 = vpop.f32.mrf.mxu0
  %v461 = vadd.f32 %v131, %v460
  %v462 = vpop.f32.mrf.mxu0
  %v463 = vpop.f32.mrf.mxu0
  %v464 = vadd.f32 %v131, %v463
  %v465 = vpop.f32.mrf.mxu0
  %466 = vmatprep.mubr.bf16.mxu0 0
  %467 = vmatmul.mubr.bf16.gmra.mxu0 %v219
  %v468 = vpop.f32.mrf.mxu0
  %v469 = vadd.f32 %v131, %v468
  %v470 = vpop.f32.mrf.mxu0
  %v471 = vpop.f32.mrf.mxu0
  %v472 = vadd.f32 %v131, %v471
  %v473 = vpop.f32.mrf.mxu0
  %474 = vmatprep.mubr.bf16.mxu0 0
  %475 = vmatmul.mubr.bf16.gmra.mxu0 %v222
  %v476 = vpop.f32.mrf.mxu0
  %v477 = vadd.f32 %v131, %v476
  %v478 = vpop.f32.mrf.mxu0
  %v479 = vpop.f32.mrf.mxu0
  %v480 = vadd.f32 %v131, %v479
  %v481 = vpop.f32.mrf.mxu0
  %482 = vmatprep.mubr.bf16.mxu0 0
  %483 = vmatmul.mubr.bf16.gmra.mxu0 %v225
  %v484 = vpop.f32.mrf.mxu0
  %v485 = vadd.f32 %v131, %v484
  %v486 = vpop.f32.mrf.mxu0
  %v487 = vpop.f32.mrf.mxu0
  %v488 = vadd.f32 %v131, %v487
  %v489 = vpop.f32.mrf.mxu0
  %490 = vmatprep.mubr.bf16.mxu0 0
  %491 = vmatmul.mubr.bf16.gmra.mxu0 %v228
  %v492 = vpop.f32.mrf.mxu0
  %v493 = vadd.f32 %v131, %v492
  %v494 = vpop.f32.mrf.mxu0
  %v495 = vpop.f32.mrf.mxu0
  %v496 = vadd.f32 %v131, %v495
  %v497 = vpop.f32.mrf.mxu0
  %498 = vmatprep.mubr.bf16.mxu0 0
  %499 = vmatmul.mubr.bf16.gmra.mxu0 %v231
  %v500 = vpop.f32.mrf.mxu0
  %v501 = vadd.f32 %v131, %v500
  %v502 = vpop.f32.mrf.mxu0
  %v503 = vpop.f32.mrf.mxu0
  %v504 = vadd.f32 %v131, %v503
  %v505 = vpop.f32.mrf.mxu0
  %506 = vmatprep.mubr.bf16.mxu0 0
  %507 = vmatmul.mubr.bf16.gmra.mxu0 %v234
  %v508 = vpop.f32.mrf.mxu0
  %v509 = vadd.f32 %v131, %v508
  %v510 = vpop.f32.mrf.mxu0
  %v511 = vpop.f32.mrf.mxu0
  %v512 = vadd.f32 %v131, %v511
  %v513 = vpop.f32.mrf.mxu0
  %514 = vmatprep.mubr.bf16.mxu0 0
  %515 = vmatmul.mubr.bf16.gmra.mxu0 %v237
  %v516 = vpop.f32.mrf.mxu0
  %v517 = vadd.f32 %v131, %v516
  %v518 = vpop.f32.mrf.mxu0
  %v519 = vpop.f32.mrf.mxu0
  %v520 = vadd.f32 %v131, %v519
  %v521 = vpop.f32.mrf.mxu0
  %522 = vmatprep.mubr.bf16.mxu0 0
  %523 = vmatmul.mubr.bf16.gmra.mxu0 %v240
  %v524 = vpop.f32.mrf.mxu0
  %v525 = vadd.f32 %v131, %v524
  %v526 = vpop.f32.mrf.mxu0
  %v527 = vpop.f32.mrf.mxu0
  %v528 = vpop.f32.mrf.mxu0
  %529 = vdwg.mxu0
  %v530 = vmul.f32 %v277, 0.01
  %v531 = vmul.f32 %v280, 0.01
  %v532 = vmul.f32 %v285, 0.01
  %v533 = vmul.f32 %v288, 0.01
  %v534 = vmul.f32 %v293, 0.01
  %v535 = vmul.f32 %v296, 0.01
  %v536 = vmul.f32 %v301, 0.01
  %v537 = vmul.f32 %v304, 0.01
  %v538 = vmul.f32 %v309, 0.01
  %v539 = vmul.f32 %v312, 0.01
  %v540 = vmul.f32 %v317, 0.01
  %v541 = vmul.f32 %v320, 0.01
  %v542 = vmul.f32 %v325, 0.01
  %v543 = vmul.f32 %v328, 0.01
  %v544 = vmul.f32 %v333, 0.01
  %v545 = vmul.f32 %v336, 0.01
  %v546 = vmul.f32 %v341, 0.01
  %v547 = vmul.f32 %v344, 0.01
  %v548 = vmul.f32 %v349, 0.01
  %v549 = vmul.f32 %v352, 0.01
  %v550 = vmul.f32 %v357, 0.01
  %v551 = vmul.f32 %v360, 0.01
  %v552 = vmul.f32 %v365, 0.01
  %v553 = vmul.f32 %v368, 0.01
  %v554 = vmul.f32 %v373, 0.01
  %v555 = vmul.f32 %v376, 0.01
  %v556 = vmul.f32 %v381, 0.01
  %v557 = vmul.f32 %v384, 0.01
  %v558 = vmul.f32 %v389, 0.01
  %v559 = vmul.f32 %v392, 0.01
  %v560 = vmul.f32 %v397, 0.01
  %v561 = vmul.f32 %v400, 0.01
  %v562 = vmul.f32 %v405, 0.01
  %v563 = vmul.f32 %v408, 0.01
  %v564 = vmul.f32 %v413, 0.01
  %v565 = vmul.f32 %v416, 0.01
  %v566 = vmul.f32 %v421, 0.01
  %v567 = vmul.f32 %v424, 0.01
  %v568 = vmul.f32 %v429, 0.01
  %v569 = vmul.f32 %v432, 0.01
  %v570 = vmul.f32 %v437, 0.01
  %v571 = vmul.f32 %v440, 0.01
  %v572 = vmul.f32 %v445, 0.01
  %v573 = vmul.f32 %v448, 0.01
  %v574 = vmul.f32 %v453, 0.01
  %v575 = vmul.f32 %v456, 0.01
  %v576 = vmul.f32 %v461, 0.01
  %v577 = vmul.f32 %v464, 0.01
  %v578 = vmul.f32 %v469, 0.01
  %v579 = vmul.f32 %v472, 0.01
  %v580 = vmul.f32 %v477, 0.01
  %v581 = vmul.f32 %v480, 0.01
  %v582 = vmul.f32 %v485, 0.01
  %v583 = vmul.f32 %v488, 0.01
  %v584 = vmul.f32 %v493, 0.01
  %v585 = vmul.f32 %v496, 0.01
  %v586 = vmul.f32 %v501, 0.01
  %v587 = vmul.f32 %v504, 0.01
  %v588 = vmul.f32 %v509, 0.01
  %v589 = vmul.f32 %v512, 0.01
  %v590 = vmul.f32 %v517, 0.01
  %v591 = vmul.f32 %v520, 0.01
  %v592 = vmul.f32 %v525, 0.01
  %v593 = vmax.f32 %v277, %v530
  %v594 = vmax.f32 %v280, %v531
  %v595 = vmax.f32 %v285, %v532
  %v596 = vmax.f32 %v288, %v533
  %v597 = vmax.f32 %v293, %v534
  %v598 = vmax.f32 %v296, %v535
  %v599 = vmax.f32 %v301, %v536
  %v600 = vmax.f32 %v304, %v537
  %v601 = vmax.f32 %v309, %v538
  %v602 = vmax.f32 %v312, %v539
  %v603 = vmax.f32 %v317, %v540
  %v604 = vmax.f32 %v320, %v541
  %v605 = vmax.f32 %v325, %v542
  %v606 = vmax.f32 %v328, %v543
  %v607 = vmax.f32 %v333, %v544
  %v608 = vmax.f32 %v336, %v545
  %v609 = vmax.f32 %v341, %v546
  %v610 = vmax.f32 %v344, %v547
  %v611 = vmax.f32 %v349, %v548
  %v612 = vmax.f32 %v352, %v549
  %v613 = vmax.f32 %v357, %v550
  %v614 = vmax.f32 %v360, %v551
  %v615 = vmax.f32 %v365, %v552
  %v616 = vmax.f32 %v368, %v553
  %v617 = vmax.f32 %v373, %v554
  %v618 = vmax.f32 %v376, %v555
  %v619 = vmax.f32 %v381, %v556
  %v620 = vmax.f32 %v384, %v557
  %v621 = vmax.f32 %v389, %v558
  %v622 = vmax.f32 %v392, %v559
  %v623 = vmax.f32 %v397, %v560
  %v624 = vmax.f32 %v400, %v561
  %v625 = vmax.f32 %v405, %v562
  %v626 = vmax.f32 %v408, %v563
  %v627 = vmax.f32 %v413, %v564
  %v628 = vmax.f32 %v416, %v565
  %v629 = vmax.f32 %v421, %v566
  %v630 = vmax.f32 %v424, %v567
  %v631 = vmax.f32 %v429, %v568
  %v632 = vmax.f32 %v432, %v569
  %v633 = vmax.f32 %v437, %v570
  %v634 = vmax.f32 %v440, %v571
  %v635 = vmax.f32 %v445, %v572
  %v636 = vmax.f32 %v448, %v573
  %v637 = vmax.f32 %v453, %v574
  %v638 = vmax.f32 %v456, %v575
  %v639 = vmax.f32 %v461, %v576
  %v640 = vmax.f32 %v464, %v577
  %v641 = vmax.f32 %v469, %v578
  %v642 = vmax.f32 %v472, %v579
  %v643 = vmax.f32 %v477, %v580
  %v644 = vmax.f32 %v480, %v581
  %v645 = vmax.f32 %v485, %v582
  %v646 = vmax.f32 %v488, %v583
  %v647 = vmax.f32 %v493, %v584
  %v648 = vmax.f32 %v496, %v585
  %v649 = vmax.f32 %v501, %v586
  %v650 = vmax.f32 %v504, %v587
  %v651 = vmax.f32 %v509, %v588
  %v652 = vmax.f32 %v512, %v589
  %v653 = vmax.f32 %v517, %v590
  %v654 = vmax.f32 %v520, %v591
  %v655 = vmax.f32 %v525, %v592
  %v656 = vpack.c.bf16 %v594, %v593
  %v657 = vpack.c.bf16 %v596, %v595
  %v658 = vpack.c.bf16 %v598, %v597
  %v659 = vpack.c.bf16 %v600, %v599
  %v660 = vpack.c.bf16 %v602, %v601
  %v661 = vpack.c.bf16 %v604, %v603
  %v662 = vpack.c.bf16 %v606, %v605
  %v663 = vpack.c.bf16 %v608, %v607
  %v664 = vpack.c.bf16 %v610, %v609
  %v665 = vpack.c.bf16 %v612, %v611
  %v666 = vpack.c.bf16 %v614, %v613
  %v667 = vpack.c.bf16 %v616, %v615
  %v668 = vpack.c.bf16 %v618, %v617
  %v669 = vpack.c.bf16 %v620, %v619
  %v670 = vpack.c.bf16 %v622, %v621
  %v671 = vpack.c.bf16 %v624, %v623
  %v672 = vpack.c.bf16 %v626, %v625
  %v673 = vpack.c.bf16 %v628, %v627
  %v674 = vpack.c.bf16 %v630, %v629
  %v675 = vpack.c.bf16 %v632, %v631
  %v676 = vpack.c.bf16 %v634, %v633
  %v677 = vpack.c.bf16 %v636, %v635
  %v678 = vpack.c.bf16 %v638, %v637
  %v679 = vpack.c.bf16 %v640, %v639
  %v680 = vpack.c.bf16 %v642, %v641
  %v681 = vpack.c.bf16 %v644, %v643
  %v682 = vpack.c.bf16 %v646, %v645
  %v683 = vpack.c.bf16 %v648, %v647
  %v684 = vpack.c.bf16 %v650, %v649
  %v685 = vpack.c.bf16 %v652, %v651
  %v686 = vpack.c.bf16 %v654, %v653
  %v687 = vpack.c.bf16 %v655, %v655
  %v688 = vld [vmem:[%s4] sm:$0xf]
  %v689 = vld [vmem:[%s4 + $0x4] sm:$0xf]
  %v690 = vld [vmem:[%s4 + $0x8] sm:$0xf]
  %v691 = vld [vmem:[%s4 + $0xc] sm:$0xf]
  %v692 = vld [vmem:[%s4 + $0x10] sm:$0xf]
  %v693 = vld [vmem:[%s4 + $0x14] sm:$0xf]
  %v694 = vld [vmem:[%s4 + $0x18] sm:$0xf]
  %v695 = vld [vmem:[%s4 + $0x1c] sm:$0xf]
  %v696 = vld [vmem:[%s5] sm:$0x1]
  %v698 = vlaneseq
  %v699 = vshrl.u32 %v698, 7
  %v700 = vsub.s32 0, %v699
  %v701 = vrot.slane %v696, %v700
  %v711 = vunpack.c.l.b16 %v688
  %v712 = vunpack.c.l.b16 %v689
  %v713 = vunpack.c.l.b16 %v690
  %v714 = vunpack.c.l.b16 %v691
  %v715 = vunpack.c.l.b16 %v692
  %v716 = vunpack.c.l.b16 %v693
  %v717 = vunpack.c.l.b16 %v694
  %v718 = vunpack.c.l.b16 %v695
  %v719 = vpack.c.b16 %v712, %v711
  %v720 = vpack.c.b16 %v714, %v713
  %v721 = vpack.c.b16 %v716, %v715
  %v722 = vpack.c.b16 %v718, %v717
  %vm727 = vcmask 523264
  %v729 = vsel %vm727, %v656, 0
  %v732 = vsel %vm727, %v657, 0
  %v735 = vsel %vm727, %v658, 0
  %v738 = vsel %vm727, %v659, 0
  %v741 = vsel %vm727, %v660, 0
  %v744 = vsel %vm727, %v661, 0
  %v747 = vsel %vm727, %v662, 0
  %v750 = vsel %vm727, %v663, 0
  %v753 = vsel %vm727, %v664, 0
  %v756 = vsel %vm727, %v665, 0
  %v759 = vsel %vm727, %v666, 0
  %v762 = vsel %vm727, %v667, 0
  %v765 = vsel %vm727, %v668, 0
  %v768 = vsel %vm727, %v669, 0
  %v771 = vsel %vm727, %v670, 0
  %v774 = vsel %vm727, %v671, 0
  %v777 = vsel %vm727, %v672, 0
  %v780 = vsel %vm727, %v673, 0
  %v783 = vsel %vm727, %v674, 0
  %v786 = vsel %vm727, %v675, 0
  %v789 = vsel %vm727, %v676, 0
  %v792 = vsel %vm727, %v677, 0
  %v795 = vsel %vm727, %v678, 0
  %v798 = vsel %vm727, %v679, 0
  %v801 = vsel %vm727, %v680, 0
  %v804 = vsel %vm727, %v681, 0
  %v807 = vsel %vm727, %v682, 0
  %v810 = vsel %vm727, %v683, 0
  %v813 = vsel %vm727, %v684, 0
  %v816 = vsel %vm727, %v685, 0
  %v819 = vsel %vm727, %v686, 0
  %v822 = vsel %vm727, %v687, 0
  %824 = vmatprep.subr.bf16.mxu0 0
  %825 = vmatpush1.bf16.msra.mxu0 0
  %826 = vmatprep.subr.bf16.mxu0 0
  %827 = vmatpush1.bf16.msra.mxu0 0
  %828 = vmatprep.subr.bf16.mxu0 0
  %829 = vmatpush1.bf16.msra.mxu0 0
  %830 = vmatprep.subr.bf16.mxu0 0
  %831 = vmatpush1.bf16.msra.mxu0 0
  %832 = vmatprep.subr.bf16.mxu0 0
  %833 = vmatpush1.bf16.msra.mxu0 %v722
  %834 = vmatprep.subr.bf16.mxu0 0
  %835 = vmatpush1.bf16.msra.mxu0 %v721
  %836 = vmatprep.subr.bf16.mxu0 0
  %837 = vmatpush1.bf16.msra.mxu0 %v720
  %838 = vmatprep.subr.bf16.mxu0 0
  %839 = vmatpush1.bf16.msra.mxu0 %v719
  %840 = vmatprep.subr.bf16.mxu0 0
  %841 = vmatpush2.bf16.msra.mxu0 0
  %842 = vmatprep.subr.bf16.mxu0 0
  %843 = vmatpush2.bf16.msra.mxu0 0
  %844 = vmatprep.subr.bf16.mxu0 0
  %845 = vmatpush2.bf16.msra.mxu0 0
  %846 = vmatprep.subr.bf16.mxu0 0
  %847 = vmatpush2.bf16.msra.mxu0 0
  %848 = vmatprep.subr.bf16.mxu0 0
  %849 = vmatpush2.bf16.msra.mxu0 0
  %850 = vmatprep.subr.bf16.mxu0 0
  %851 = vmatpush2.bf16.msra.mxu0 0
  %852 = vmatprep.subr.bf16.mxu0 0
  %853 = vmatpush2.bf16.msra.mxu0 0
  %854 = vmatprep.subr.bf16.mxu0 0
  %855 = vmatpush2.bf16.msra.mxu0 0
  %856 = vmatprep.mubr.bf16.mxu0 0
  %857 = vmatmul.mubr.bf16.gmra.mxu0 %v729
  %v858 = vpop.f32.mrf.mxu0
  %v859 = vadd.f32 %v701, %v858
  %v860 = vpop.f32.mrf.mxu0
  %v861 = vpop.f32.mrf.mxu0
  %v862 = vadd.f32 %v701, %v861
  %v863 = vpop.f32.mrf.mxu0
  %864 = vmatprep.mubr.bf16.mxu0 0
  %865 = vmatmul.mubr.bf16.gmra.mxu0 %v732
  %v866 = vpop.f32.mrf.mxu0
  %v867 = vadd.f32 %v701, %v866
  %v868 = vpop.f32.mrf.mxu0
  %v869 = vpop.f32.mrf.mxu0
  %v870 = vadd.f32 %v701, %v869
  %v871 = vpop.f32.mrf.mxu0
  %872 = vmatprep.mubr.bf16.mxu0 0
  %873 = vmatmul.mubr.bf16.gmra.mxu0 %v735
  %v874 = vpop.f32.mrf.mxu0
  %v875 = vadd.f32 %v701, %v874
  %v876 = vpop.f32.mrf.mxu0
  %v877 = vpop.f32.mrf.mxu0
  %v878 = vadd.f32 %v701, %v877
  %v879 = vpop.f32.mrf.mxu0
  %880 = vmatprep.mubr.bf16.mxu0 0
  %881 = vmatmul.mubr.bf16.gmra.mxu0 %v738
  %v882 = vpop.f32.mrf.mxu0
  %v883 = vadd.f32 %v701, %v882
  %v884 = vpop.f32.mrf.mxu0
  %v885 = vpop.f32.mrf.mxu0
  %v886 = vadd.f32 %v701, %v885
  %v887 = vpop.f32.mrf.mxu0
  %888 = vmatprep.mubr.bf16.mxu0 0
  %889 = vmatmul.mubr.bf16.gmra.mxu0 %v741
  %v890 = vpop.f32.mrf.mxu0
  %v891 = vadd.f32 %v701, %v890
  %v892 = vpop.f32.mrf.mxu0
  %v893 = vpop.f32.mrf.mxu0
  %v894 = vadd.f32 %v701, %v893
  %v895 = vpop.f32.mrf.mxu0
  %896 = vmatprep.mubr.bf16.mxu0 0
  %897 = vmatmul.mubr.bf16.gmra.mxu0 %v744
  %v898 = vpop.f32.mrf.mxu0
  %v899 = vadd.f32 %v701, %v898
  %v900 = vpop.f32.mrf.mxu0
  %v901 = vpop.f32.mrf.mxu0
  %v902 = vadd.f32 %v701, %v901
  %v903 = vpop.f32.mrf.mxu0
  %904 = vmatprep.mubr.bf16.mxu0 0
  %905 = vmatmul.mubr.bf16.gmra.mxu0 %v747
  %v906 = vpop.f32.mrf.mxu0
  %v907 = vadd.f32 %v701, %v906
  %v908 = vpop.f32.mrf.mxu0
  %v909 = vpop.f32.mrf.mxu0
  %v910 = vadd.f32 %v701, %v909
  %v911 = vpop.f32.mrf.mxu0
  %912 = vmatprep.mubr.bf16.mxu0 0
  %913 = vmatmul.mubr.bf16.gmra.mxu0 %v750
  %v914 = vpop.f32.mrf.mxu0
  %v915 = vadd.f32 %v701, %v914
  %v916 = vpop.f32.mrf.mxu0
  %v917 = vpop.f32.mrf.mxu0
  %v918 = vadd.f32 %v701, %v917
  %v919 = vpop.f32.mrf.mxu0
  %920 = vmatprep.mubr.bf16.mxu0 0
  %921 = vmatmul.mubr.bf16.gmra.mxu0 %v753
  %v922 = vpop.f32.mrf.mxu0
  %v923 = vadd.f32 %v701, %v922
  %v924 = vpop.f32.mrf.mxu0
  %v925 = vpop.f32.mrf.mxu0
  %v926 = vadd.f32 %v701, %v925
  %v927 = vpop.f32.mrf.mxu0
  %928 = vmatprep.mubr.bf16.mxu0 0
  %929 = vmatmul.mubr.bf16.gmra.mxu0 %v756
  %v930 = vpop.f32.mrf.mxu0
  %v931 = vadd.f32 %v701, %v930
  %v932 = vpop.f32.mrf.mxu0
  %v933 = vpop.f32.mrf.mxu0
  %v934 = vadd.f32 %v701, %v933
  %v935 = vpop.f32.mrf.mxu0
  %936 = vmatprep.mubr.bf16.mxu0 0
  %937 = vmatmul.mubr.bf16.gmra.mxu0 %v759
  %v938 = vpop.f32.mrf.mxu0
  %v939 = vadd.f32 %v701, %v938
  %v940 = vpop.f32.mrf.mxu0
  %v941 = vpop.f32.mrf.mxu0
  %v942 = vadd.f32 %v701, %v941
  %v943 = vpop.f32.mrf.mxu0
  %944 = vmatprep.mubr.bf16.mxu0 0
  %945 = vmatmul.mubr.bf16.gmra.mxu0 %v762
  %v946 = vpop.f32.mrf.mxu0
  %v947 = vadd.f32 %v701, %v946
  %v948 = vpop.f32.mrf.mxu0
  %v949 = vpop.f32.mrf.mxu0
  %v950 = vadd.f32 %v701, %v949
  %v951 = vpop.f32.mrf.mxu0
  %952 = vmatprep.mubr.bf16.mxu0 0
  %953 = vmatmul.mubr.bf16.gmra.mxu0 %v765
  %v954 = vpop.f32.mrf.mxu0
  %v955 = vadd.f32 %v701, %v954
  %v956 = vpop.f32.mrf.mxu0
  %v957 = vpop.f32.mrf.mxu0
  %v958 = vadd.f32 %v701, %v957
  %v959 = vpop.f32.mrf.mxu0
  %960 = vmatprep.mubr.bf16.mxu0 0
  %961 = vmatmul.mubr.bf16.gmra.mxu0 %v768
  %v962 = vpop.f32.mrf.mxu0
  %v963 = vadd.f32 %v701, %v962
  %v964 = vpop.f32.mrf.mxu0
  %v965 = vpop.f32.mrf.mxu0
  %v966 = vadd.f32 %v701, %v965
  %v967 = vpop.f32.mrf.mxu0
  %968 = vmatprep.mubr.bf16.mxu0 0
  %969 = vmatmul.mubr.bf16.gmra.mxu0 %v771
  %v970 = vpop.f32.mrf.mxu0
  %v971 = vadd.f32 %v701, %v970
  %v972 = vpop.f32.mrf.mxu0
  %v973 = vpop.f32.mrf.mxu0
  %v974 = vadd.f32 %v701, %v973
  %v975 = vpop.f32.mrf.mxu0
  %976 = vmatprep.mubr.bf16.mxu0 0
  %977 = vmatmul.mubr.bf16.gmra.mxu0 %v774
  %v978 = vpop.f32.mrf.mxu0
  %v979 = vadd.f32 %v701, %v978
  %v980 = vpop.f32.mrf.mxu0
  %v981 = vpop.f32.mrf.mxu0
  %v982 = vadd.f32 %v701, %v981
  %v983 = vpop.f32.mrf.mxu0
  %984 = vmatprep.mubr.bf16.mxu0 0
  %985 = vmatmul.mubr.bf16.gmra.mxu0 %v777
  %v986 = vpop.f32.mrf.mxu0
  %v987 = vadd.f32 %v701, %v986
  %v988 = vpop.f32.mrf.mxu0
  %v989 = vpop.f32.mrf.mxu0
  %v990 = vadd.f32 %v701, %v989
  %v991 = vpop.f32.mrf.mxu0
  %992 = vmatprep.mubr.bf16.mxu0 0
  %993 = vmatmul.mubr.bf16.gmra.mxu0 %v780
  %v994 = vpop.f32.mrf.mxu0
  %v995 = vadd.f32 %v701, %v994
  %v996 = vpop.f32.mrf.mxu0
  %v997 = vpop.f32.mrf.mxu0
  %v998 = vadd.f32 %v701, %v997
  %v999 = vpop.f32.mrf.mxu0
  %1000 = vmatprep.mubr.bf16.mxu0 0
  %1001 = vmatmul.mubr.bf16.gmra.mxu0 %v783
  %v1002 = vpop.f32.mrf.mxu0
  %v1003 = vadd.f32 %v701, %v1002
  %v1004 = vpop.f32.mrf.mxu0
  %v1005 = vpop.f32.mrf.mxu0
  %v1006 = vadd.f32 %v701, %v1005
  %v1007 = vpop.f32.mrf.mxu0
  %1008 = vmatprep.mubr.bf16.mxu0 0
  %1009 = vmatmul.mubr.bf16.gmra.mxu0 %v786
  %v1010 = vpop.f32.mrf.mxu0
  %v1011 = vadd.f32 %v701, %v1010
  %v1012 = vpop.f32.mrf.mxu0
  %v1013 = vpop.f32.mrf.mxu0
  %v1014 = vadd.f32 %v701, %v1013
  %v1015 = vpop.f32.mrf.mxu0
  %1016 = vmatprep.mubr.bf16.mxu0 0
  %1017 = vmatmul.mubr.bf16.gmra.mxu0 %v789
  %v1018 = vpop.f32.mrf.mxu0
  %v1019 = vadd.f32 %v701, %v1018
  %v1020 = vpop.f32.mrf.mxu0
  %v1021 = vpop.f32.mrf.mxu0
  %v1022 = vadd.f32 %v701, %v1021
  %v1023 = vpop.f32.mrf.mxu0
  %1024 = vmatprep.mubr.bf16.mxu0 0
  %1025 = vmatmul.mubr.bf16.gmra.mxu0 %v792
  %v1026 = vpop.f32.mrf.mxu0
  %v1027 = vadd.f32 %v701, %v1026
  %v1028 = vpop.f32.mrf.mxu0
  %v1029 = vpop.f32.mrf.mxu0
  %v1030 = vadd.f32 %v701, %v1029
  %v1031 = vpop.f32.mrf.mxu0
  %1032 = vmatprep.mubr.bf16.mxu0 0
  %1033 = vmatmul.mubr.bf16.gmra.mxu0 %v795
  %v1034 = vpop.f32.mrf.mxu0
  %v1035 = vadd.f32 %v701, %v1034
  %v1036 = vpop.f32.mrf.mxu0
  %v1037 = vpop.f32.mrf.mxu0
  %v1038 = vadd.f32 %v701, %v1037
  %v1039 = vpop.f32.mrf.mxu0
  %1040 = vmatprep.mubr.bf16.mxu0 0
  %1041 = vmatmul.mubr.bf16.gmra.mxu0 %v798
  %v1042 = vpop.f32.mrf.mxu0
  %v1043 = vadd.f32 %v701, %v1042
  %v1044 = vpop.f32.mrf.mxu0
  %v1045 = vpop.f32.mrf.mxu0
  %v1046 = vadd.f32 %v701, %v1045
  %v1047 = vpop.f32.mrf.mxu0
  %1048 = vmatprep.mubr.bf16.mxu0 0
  %1049 = vmatmul.mubr.bf16.gmra.mxu0 %v801
  %v1050 = vpop.f32.mrf.mxu0
  %v1051 = vadd.f32 %v701, %v1050
  %v1052 = vpop.f32.mrf.mxu0
  %v1053 = vpop.f32.mrf.mxu0
  %v1054 = vadd.f32 %v701, %v1053
  %v1055 = vpop.f32.mrf.mxu0
  %1056 = vmatprep.mubr.bf16.mxu0 0
  %1057 = vmatmul.mubr.bf16.gmra.mxu0 %v804
  %v1058 = vpop.f32.mrf.mxu0
  %v1059 = vadd.f32 %v701, %v1058
  %v1060 = vpop.f32.mrf.mxu0
  %v1061 = vpop.f32.mrf.mxu0
  %v1062 = vadd.f32 %v701, %v1061
  %v1063 = vpop.f32.mrf.mxu0
  %1064 = vmatprep.mubr.bf16.mxu0 0
  %1065 = vmatmul.mubr.bf16.gmra.mxu0 %v807
  %v1066 = vpop.f32.mrf.mxu0
  %v1067 = vadd.f32 %v701, %v1066
  %v1068 = vpop.f32.mrf.mxu0
  %v1069 = vpop.f32.mrf.mxu0
  %v1070 = vadd.f32 %v701, %v1069
  %v1071 = vpop.f32.mrf.mxu0
  %1072 = vmatprep.mubr.bf16.mxu0 0
  %1073 = vmatmul.mubr.bf16.gmra.mxu0 %v810
  %v1074 = vpop.f32.mrf.mxu0
  %v1075 = vadd.f32 %v701, %v1074
  %v1076 = vpop.f32.mrf.mxu0
  %v1077 = vpop.f32.mrf.mxu0
  %v1078 = vadd.f32 %v701, %v1077
  %v1079 = vpop.f32.mrf.mxu0
  %1080 = vmatprep.mubr.bf16.mxu0 0
  %1081 = vmatmul.mubr.bf16.gmra.mxu0 %v813
  %v1082 = vpop.f32.mrf.mxu0
  %v1083 = vadd.f32 %v701, %v1082
  %v1084 = vpop.f32.mrf.mxu0
  %v1085 = vpop.f32.mrf.mxu0
  %v1086 = vadd.f32 %v701, %v1085
  %v1087 = vpop.f32.mrf.mxu0
  %1088 = vmatprep.mubr.bf16.mxu0 0
  %1089 = vmatmul.mubr.bf16.gmra.mxu0 %v816
  %v1090 = vpop.f32.mrf.mxu0
  %v1091 = vadd.f32 %v701, %v1090
  %v1092 = vpop.f32.mrf.mxu0
  %v1093 = vpop.f32.mrf.mxu0
  %v1094 = vadd.f32 %v701, %v1093
  %v1095 = vpop.f32.mrf.mxu0
  %1096 = vmatprep.mubr.bf16.mxu0 0
  %1097 = vmatmul.mubr.bf16.gmra.mxu0 %v819
  %v1098 = vpop.f32.mrf.mxu0
  %v1099 = vadd.f32 %v701, %v1098
  %v1100 = vpop.f32.mrf.mxu0
  %v1101 = vpop.f32.mrf.mxu0
  %v1102 = vadd.f32 %v701, %v1101
  %v1103 = vpop.f32.mrf.mxu0
  %1104 = vmatprep.mubr.bf16.mxu0 0
  %1105 = vmatmul.mubr.bf16.gmra.mxu0 %v822
  %v1106 = vpop.f32.mrf.mxu0
  %v1107 = vadd.f32 %v701, %v1106
  %v1108 = vpop.f32.mrf.mxu0
  %v1109 = vpop.f32.mrf.mxu0
  %v1110 = vpop.f32.mrf.mxu0
  %1111 = vdwg.mxu0
  %v1112 = vlaneseq
  %v1113 = vand.u32 %v1112, 127
  %vm1114 = vcmp.eq.s32.totalorder %v1113, 0
  %vm1115 = vcmp.eq.s32.totalorder %v1113, 4
  %vm1116 = vmor %vm1114, %vm1115
  %vm1117 = vcmp.eq.s32.totalorder %v1113, 5
  %vm1118 = vmor %vm1116, %vm1117
  %vm1119 = vcmp.eq.s32.totalorder %v1113, 6
  %vm1120 = vmor %vm1118, %vm1119
  %v1121 = vsel %vm1120, 1, 0
  %v1122 = vcvt.s32.f32 %v1121
  %v1123 = vmul.f32 %v859, %v859
  %v1124 = vmul.f32 %v862, %v862
  %v1125 = vmul.f32 %v867, %v867
  %v1126 = vmul.f32 %v870, %v870
  %v1127 = vmul.f32 %v875, %v875
  %v1128 = vmul.f32 %v878, %v878
  %v1129 = vmul.f32 %v883, %v883
  %v1130 = vmul.f32 %v886, %v886
  %v1131 = vmul.f32 %v891, %v891
  %v1132 = vmul.f32 %v894, %v894
  %v1133 = vmul.f32 %v899, %v899
  %v1134 = vmul.f32 %v902, %v902
  %v1135 = vmul.f32 %v907, %v907
  %v1136 = vmul.f32 %v910, %v910
  %v1137 = vmul.f32 %v915, %v915
  %v1138 = vmul.f32 %v918, %v918
  %v1139 = vmul.f32 %v923, %v923
  %v1140 = vmul.f32 %v926, %v926
  %v1141 = vmul.f32 %v931, %v931
  %v1142 = vmul.f32 %v934, %v934
  %v1143 = vmul.f32 %v939, %v939
  %v1144 = vmul.f32 %v942, %v942
  %v1145 = vmul.f32 %v947, %v947
  %v1146 = vmul.f32 %v950, %v950
  %v1147 = vmul.f32 %v955, %v955
  %v1148 = vmul.f32 %v958, %v958
  %v1149 = vmul.f32 %v963, %v963
  %v1150 = vmul.f32 %v966, %v966
  %v1151 = vmul.f32 %v971, %v971
  %v1152 = vmul.f32 %v974, %v974
  %v1153 = vmul.f32 %v979, %v979
  %v1154 = vmul.f32 %v982, %v982
  %v1155 = vmul.f32 %v987, %v987
  %v1156 = vmul.f32 %v990, %v990
  %v1157 = vmul.f32 %v995, %v995
  %v1158 = vmul.f32 %v998, %v998
  %v1159 = vmul.f32 %v1003, %v1003
  %v1160 = vmul.f32 %v1006, %v1006
  %v1161 = vmul.f32 %v1011, %v1011
  %v1162 = vmul.f32 %v1014, %v1014
  %v1163 = vmul.f32 %v1019, %v1019
  %v1164 = vmul.f32 %v1022, %v1022
  %v1165 = vmul.f32 %v1027, %v1027
  %v1166 = vmul.f32 %v1030, %v1030
  %v1167 = vmul.f32 %v1035, %v1035
  %v1168 = vmul.f32 %v1038, %v1038
  %v1169 = vmul.f32 %v1043, %v1043
  %v1170 = vmul.f32 %v1046, %v1046
  %v1171 = vmul.f32 %v1051, %v1051
  %v1172 = vmul.f32 %v1054, %v1054
  %v1173 = vmul.f32 %v1059, %v1059
  %v1174 = vmul.f32 %v1062, %v1062
  %v1175 = vmul.f32 %v1067, %v1067
  %v1176 = vmul.f32 %v1070, %v1070
  %v1177 = vmul.f32 %v1075, %v1075
  %v1178 = vmul.f32 %v1078, %v1078
  %v1179 = vmul.f32 %v1083, %v1083
  %v1180 = vmul.f32 %v1086, %v1086
  %v1181 = vmul.f32 %v1091, %v1091
  %v1182 = vmul.f32 %v1094, %v1094
  %v1183 = vmul.f32 %v1099, %v1099
  %v1184 = vmul.f32 %v1102, %v1102
  %v1185 = vmul.f32 %v1107, %v1107
  %v1186 = vmul.f32 %v1123, %v1122
  %v1187 = vmul.f32 %v1124, %v1122
  %v1188 = vmul.f32 %v1125, %v1122
  %v1189 = vmul.f32 %v1126, %v1122
  %v1190 = vmul.f32 %v1127, %v1122
  %v1191 = vmul.f32 %v1128, %v1122
  %v1192 = vmul.f32 %v1129, %v1122
  %v1193 = vmul.f32 %v1130, %v1122
  %v1194 = vmul.f32 %v1131, %v1122
  %v1195 = vmul.f32 %v1132, %v1122
  %v1196 = vmul.f32 %v1133, %v1122
  %v1197 = vmul.f32 %v1134, %v1122
  %v1198 = vmul.f32 %v1135, %v1122
  %v1199 = vmul.f32 %v1136, %v1122
  %v1200 = vmul.f32 %v1137, %v1122
  %v1201 = vmul.f32 %v1138, %v1122
  %v1202 = vmul.f32 %v1139, %v1122
  %v1203 = vmul.f32 %v1140, %v1122
  %v1204 = vmul.f32 %v1141, %v1122
  %v1205 = vmul.f32 %v1142, %v1122
  %v1206 = vmul.f32 %v1143, %v1122
  %v1207 = vmul.f32 %v1144, %v1122
  %v1208 = vmul.f32 %v1145, %v1122
  %v1209 = vmul.f32 %v1146, %v1122
  %v1210 = vmul.f32 %v1147, %v1122
  %v1211 = vmul.f32 %v1148, %v1122
  %v1212 = vmul.f32 %v1149, %v1122
  %v1213 = vmul.f32 %v1150, %v1122
  %v1214 = vmul.f32 %v1151, %v1122
  %v1215 = vmul.f32 %v1152, %v1122
  %v1216 = vmul.f32 %v1153, %v1122
  %v1217 = vmul.f32 %v1154, %v1122
  %v1218 = vmul.f32 %v1155, %v1122
  %v1219 = vmul.f32 %v1156, %v1122
  %v1220 = vmul.f32 %v1157, %v1122
  %v1221 = vmul.f32 %v1158, %v1122
  %v1222 = vmul.f32 %v1159, %v1122
  %v1223 = vmul.f32 %v1160, %v1122
  %v1224 = vmul.f32 %v1161, %v1122
  %v1225 = vmul.f32 %v1162, %v1122
  %v1226 = vmul.f32 %v1163, %v1122
  %v1227 = vmul.f32 %v1164, %v1122
  %v1228 = vmul.f32 %v1165, %v1122
  %v1229 = vmul.f32 %v1166, %v1122
  %v1230 = vmul.f32 %v1167, %v1122
  %v1231 = vmul.f32 %v1168, %v1122
  %v1232 = vmul.f32 %v1169, %v1122
  %v1233 = vmul.f32 %v1170, %v1122
  %v1234 = vmul.f32 %v1171, %v1122
  %v1235 = vmul.f32 %v1172, %v1122
  %v1236 = vmul.f32 %v1173, %v1122
  %v1237 = vmul.f32 %v1174, %v1122
  %v1238 = vmul.f32 %v1175, %v1122
  %v1239 = vmul.f32 %v1176, %v1122
  %v1240 = vmul.f32 %v1177, %v1122
  %v1241 = vmul.f32 %v1178, %v1122
  %v1242 = vmul.f32 %v1179, %v1122
  %v1243 = vmul.f32 %v1180, %v1122
  %v1244 = vmul.f32 %v1181, %v1122
  %v1245 = vmul.f32 %v1182, %v1122
  %v1246 = vmul.f32 %v1183, %v1122
  %v1247 = vmul.f32 %v1184, %v1122
  %v1248 = vmul.f32 %v1185, %v1122
  %vm1249 = vcmask 64512
  %v1250 = vsel %vm1249, %v1186, 0.0
  %1251 = vadd.xlane.f32.xlu0 %v1250
  %v1252 = vpop.xlane.xlu0 %1251
  %v1253 = vsel %vm1249, %v1187, 0.0
  %1254 = vadd.xlane.f32.xlu0 %v1253
  %v1255 = vpop.xlane.xlu0 %1254
  %v1256 = vsel %vm1249, %v1188, 0.0
  %1257 = vadd.xlane.f32.xlu0 %v1256
  %v1258 = vpop.xlane.xlu0 %1257
  %v1259 = vsel %vm1249, %v1189, 0.0
  %1260 = vadd.xlane.f32.xlu0 %v1259
  %v1261 = vpop.xlane.xlu0 %1260
  %v1262 = vsel %vm1249, %v1190, 0.0
  %1263 = vadd.xlane.f32.xlu0 %v1262
  %v1264 = vpop.xlane.xlu0 %1263
  %v1265 = vsel %vm1249, %v1191, 0.0
  %1266 = vadd.xlane.f32.xlu0 %v1265
  %v1267 = vpop.xlane.xlu0 %1266
  %v1268 = vsel %vm1249, %v1192, 0.0
  %1269 = vadd.xlane.f32.xlu0 %v1268
  %v1270 = vpop.xlane.xlu0 %1269
  %v1271 = vsel %vm1249, %v1193, 0.0
  %1272 = vadd.xlane.f32.xlu0 %v1271
  %v1273 = vpop.xlane.xlu0 %1272
  %v1274 = vsel %vm1249, %v1194, 0.0
  %1275 = vadd.xlane.f32.xlu0 %v1274
  %v1276 = vpop.xlane.xlu0 %1275
  %v1277 = vsel %vm1249, %v1195, 0.0
  %1278 = vadd.xlane.f32.xlu0 %v1277
  %v1279 = vpop.xlane.xlu0 %1278
  %v1280 = vsel %vm1249, %v1196, 0.0
  %1281 = vadd.xlane.f32.xlu0 %v1280
  %v1282 = vpop.xlane.xlu0 %1281
  %v1283 = vsel %vm1249, %v1197, 0.0
  %1284 = vadd.xlane.f32.xlu0 %v1283
  %v1285 = vpop.xlane.xlu0 %1284
  %v1286 = vsel %vm1249, %v1198, 0.0
  %1287 = vadd.xlane.f32.xlu0 %v1286
  %v1288 = vpop.xlane.xlu0 %1287
  %v1289 = vsel %vm1249, %v1199, 0.0
  %1290 = vadd.xlane.f32.xlu0 %v1289
  %v1291 = vpop.xlane.xlu0 %1290
  %v1292 = vsel %vm1249, %v1200, 0.0
  %1293 = vadd.xlane.f32.xlu0 %v1292
  %v1294 = vpop.xlane.xlu0 %1293
  %v1295 = vsel %vm1249, %v1201, 0.0
  %1296 = vadd.xlane.f32.xlu0 %v1295
  %v1297 = vpop.xlane.xlu0 %1296
  %v1298 = vsel %vm1249, %v1202, 0.0
  %1299 = vadd.xlane.f32.xlu0 %v1298
  %v1300 = vpop.xlane.xlu0 %1299
  %v1301 = vsel %vm1249, %v1203, 0.0
  %1302 = vadd.xlane.f32.xlu0 %v1301
  %v1303 = vpop.xlane.xlu0 %1302
  %v1304 = vsel %vm1249, %v1204, 0.0
  %1305 = vadd.xlane.f32.xlu0 %v1304
  %v1306 = vpop.xlane.xlu0 %1305
  %v1307 = vsel %vm1249, %v1205, 0.0
  %1308 = vadd.xlane.f32.xlu0 %v1307
  %v1309 = vpop.xlane.xlu0 %1308
  %v1310 = vsel %vm1249, %v1206, 0.0
  %1311 = vadd.xlane.f32.xlu0 %v1310
  %v1312 = vpop.xlane.xlu0 %1311
  %v1313 = vsel %vm1249, %v1207, 0.0
  %1314 = vadd.xlane.f32.xlu0 %v1313
  %v1315 = vpop.xlane.xlu0 %1314
  %v1316 = vsel %vm1249, %v1208, 0.0
  %1317 = vadd.xlane.f32.xlu0 %v1316
  %v1318 = vpop.xlane.xlu0 %1317
  %v1319 = vsel %vm1249, %v1209, 0.0
  %1320 = vadd.xlane.f32.xlu0 %v1319
  %v1321 = vpop.xlane.xlu0 %1320
  %v1322 = vsel %vm1249, %v1210, 0.0
  %1323 = vadd.xlane.f32.xlu0 %v1322
  %v1324 = vpop.xlane.xlu0 %1323
  %v1325 = vsel %vm1249, %v1211, 0.0
  %1326 = vadd.xlane.f32.xlu0 %v1325
  %v1327 = vpop.xlane.xlu0 %1326
  %v1328 = vsel %vm1249, %v1212, 0.0
  %1329 = vadd.xlane.f32.xlu0 %v1328
  %v1330 = vpop.xlane.xlu0 %1329
  %v1331 = vsel %vm1249, %v1213, 0.0
  %1332 = vadd.xlane.f32.xlu0 %v1331
  %v1333 = vpop.xlane.xlu0 %1332
  %v1334 = vsel %vm1249, %v1214, 0.0
  %1335 = vadd.xlane.f32.xlu0 %v1334
  %v1336 = vpop.xlane.xlu0 %1335
  %v1337 = vsel %vm1249, %v1215, 0.0
  %1338 = vadd.xlane.f32.xlu0 %v1337
  %v1339 = vpop.xlane.xlu0 %1338
  %v1340 = vsel %vm1249, %v1216, 0.0
  %1341 = vadd.xlane.f32.xlu0 %v1340
  %v1342 = vpop.xlane.xlu0 %1341
  %v1343 = vsel %vm1249, %v1217, 0.0
  %1344 = vadd.xlane.f32.xlu0 %v1343
  %v1345 = vpop.xlane.xlu0 %1344
  %v1346 = vsel %vm1249, %v1218, 0.0
  %1347 = vadd.xlane.f32.xlu0 %v1346
  %v1348 = vpop.xlane.xlu0 %1347
  %v1349 = vsel %vm1249, %v1219, 0.0
  %1350 = vadd.xlane.f32.xlu0 %v1349
  %v1351 = vpop.xlane.xlu0 %1350
  %v1352 = vsel %vm1249, %v1220, 0.0
  %1353 = vadd.xlane.f32.xlu0 %v1352
  %v1354 = vpop.xlane.xlu0 %1353
  %v1355 = vsel %vm1249, %v1221, 0.0
  %1356 = vadd.xlane.f32.xlu0 %v1355
  %v1357 = vpop.xlane.xlu0 %1356
  %v1358 = vsel %vm1249, %v1222, 0.0
  %1359 = vadd.xlane.f32.xlu0 %v1358
  %v1360 = vpop.xlane.xlu0 %1359
  %v1361 = vsel %vm1249, %v1223, 0.0
  %1362 = vadd.xlane.f32.xlu0 %v1361
  %v1363 = vpop.xlane.xlu0 %1362
  %v1364 = vsel %vm1249, %v1224, 0.0
  %1365 = vadd.xlane.f32.xlu0 %v1364
  %v1366 = vpop.xlane.xlu0 %1365
  %v1367 = vsel %vm1249, %v1225, 0.0
  %1368 = vadd.xlane.f32.xlu0 %v1367
  %v1369 = vpop.xlane.xlu0 %1368
  %v1370 = vsel %vm1249, %v1226, 0.0
  %1371 = vadd.xlane.f32.xlu0 %v1370
  %v1372 = vpop.xlane.xlu0 %1371
  %v1373 = vsel %vm1249, %v1227, 0.0
  %1374 = vadd.xlane.f32.xlu0 %v1373
  %v1375 = vpop.xlane.xlu0 %1374
  %v1376 = vsel %vm1249, %v1228, 0.0
  %1377 = vadd.xlane.f32.xlu0 %v1376
  %v1378 = vpop.xlane.xlu0 %1377
  %v1379 = vsel %vm1249, %v1229, 0.0
  %1380 = vadd.xlane.f32.xlu0 %v1379
  %v1381 = vpop.xlane.xlu0 %1380
  %v1382 = vsel %vm1249, %v1230, 0.0
  %1383 = vadd.xlane.f32.xlu0 %v1382
  %v1384 = vpop.xlane.xlu0 %1383
  %v1385 = vsel %vm1249, %v1231, 0.0
  %1386 = vadd.xlane.f32.xlu0 %v1385
  %v1387 = vpop.xlane.xlu0 %1386
  %v1388 = vsel %vm1249, %v1232, 0.0
  %1389 = vadd.xlane.f32.xlu0 %v1388
  %v1390 = vpop.xlane.xlu0 %1389
  %v1391 = vsel %vm1249, %v1233, 0.0
  %1392 = vadd.xlane.f32.xlu0 %v1391
  %v1393 = vpop.xlane.xlu0 %1392
  %v1394 = vsel %vm1249, %v1234, 0.0
  %1395 = vadd.xlane.f32.xlu0 %v1394
  %v1396 = vpop.xlane.xlu0 %1395
  %v1397 = vsel %vm1249, %v1235, 0.0
  %1398 = vadd.xlane.f32.xlu0 %v1397
  %v1399 = vpop.xlane.xlu0 %1398
  %v1400 = vsel %vm1249, %v1236, 0.0
  %1401 = vadd.xlane.f32.xlu0 %v1400
  %v1402 = vpop.xlane.xlu0 %1401
  %v1403 = vsel %vm1249, %v1237, 0.0
  %1404 = vadd.xlane.f32.xlu0 %v1403
  %v1405 = vpop.xlane.xlu0 %1404
  %v1406 = vsel %vm1249, %v1238, 0.0
  %1407 = vadd.xlane.f32.xlu0 %v1406
  %v1408 = vpop.xlane.xlu0 %1407
  %v1409 = vsel %vm1249, %v1239, 0.0
  %1410 = vadd.xlane.f32.xlu0 %v1409
  %v1411 = vpop.xlane.xlu0 %1410
  %v1412 = vsel %vm1249, %v1240, 0.0
  %1413 = vadd.xlane.f32.xlu0 %v1412
  %v1414 = vpop.xlane.xlu0 %1413
  %v1415 = vsel %vm1249, %v1241, 0.0
  %1416 = vadd.xlane.f32.xlu0 %v1415
  %v1417 = vpop.xlane.xlu0 %1416
  %v1418 = vsel %vm1249, %v1242, 0.0
  %1419 = vadd.xlane.f32.xlu0 %v1418
  %v1420 = vpop.xlane.xlu0 %1419
  %v1421 = vsel %vm1249, %v1243, 0.0
  %1422 = vadd.xlane.f32.xlu0 %v1421
  %v1423 = vpop.xlane.xlu0 %1422
  %v1424 = vsel %vm1249, %v1244, 0.0
  %1425 = vadd.xlane.f32.xlu0 %v1424
  %v1426 = vpop.xlane.xlu0 %1425
  %v1427 = vsel %vm1249, %v1245, 0.0
  %1428 = vadd.xlane.f32.xlu0 %v1427
  %v1429 = vpop.xlane.xlu0 %1428
  %v1430 = vsel %vm1249, %v1246, 0.0
  %1431 = vadd.xlane.f32.xlu0 %v1430
  %v1432 = vpop.xlane.xlu0 %1431
  %v1433 = vsel %vm1249, %v1247, 0.0
  %1434 = vadd.xlane.f32.xlu0 %v1433
  %v1435 = vpop.xlane.xlu0 %1434
  %v1436 = vsel %vm1249, %v1248, 0.0
  %1437 = vadd.xlane.f32.xlu0 %v1436
  %v1438 = vpop.xlane.xlu0 %1437
  %v1439 = vmax.f32 %v1252, 1e-30
  %v1440 = vmax.f32 %v1255, 1e-30
  %v1441 = vmax.f32 %v1258, 1e-30
  %v1442 = vmax.f32 %v1261, 1e-30
  %v1443 = vmax.f32 %v1264, 1e-30
  %v1444 = vmax.f32 %v1267, 1e-30
  %v1445 = vmax.f32 %v1270, 1e-30
  %v1446 = vmax.f32 %v1273, 1e-30
  %v1447 = vmax.f32 %v1276, 1e-30
  %v1448 = vmax.f32 %v1279, 1e-30
  %v1449 = vmax.f32 %v1282, 1e-30
  %v1450 = vmax.f32 %v1285, 1e-30
  %v1451 = vmax.f32 %v1288, 1e-30
  %v1452 = vmax.f32 %v1291, 1e-30
  %v1453 = vmax.f32 %v1294, 1e-30
  %v1454 = vmax.f32 %v1297, 1e-30
  %v1455 = vmax.f32 %v1300, 1e-30
  %v1456 = vmax.f32 %v1303, 1e-30
  %v1457 = vmax.f32 %v1306, 1e-30
  %v1458 = vmax.f32 %v1309, 1e-30
  %v1459 = vmax.f32 %v1312, 1e-30
  %v1460 = vmax.f32 %v1315, 1e-30
  %v1461 = vmax.f32 %v1318, 1e-30
  %v1462 = vmax.f32 %v1321, 1e-30
  %v1463 = vmax.f32 %v1324, 1e-30
  %v1464 = vmax.f32 %v1327, 1e-30
  %v1465 = vmax.f32 %v1330, 1e-30
  %v1466 = vmax.f32 %v1333, 1e-30
  %v1467 = vmax.f32 %v1336, 1e-30
  %v1468 = vmax.f32 %v1339, 1e-30
  %v1469 = vmax.f32 %v1342, 1e-30
  %v1470 = vmax.f32 %v1345, 1e-30
  %v1471 = vmax.f32 %v1348, 1e-30
  %v1472 = vmax.f32 %v1351, 1e-30
  %v1473 = vmax.f32 %v1354, 1e-30
  %v1474 = vmax.f32 %v1357, 1e-30
  %v1475 = vmax.f32 %v1360, 1e-30
  %v1476 = vmax.f32 %v1363, 1e-30
  %v1477 = vmax.f32 %v1366, 1e-30
  %v1478 = vmax.f32 %v1369, 1e-30
  %v1479 = vmax.f32 %v1372, 1e-30
  %v1480 = vmax.f32 %v1375, 1e-30
  %v1481 = vmax.f32 %v1378, 1e-30
  %v1482 = vmax.f32 %v1381, 1e-30
  %v1483 = vmax.f32 %v1384, 1e-30
  %v1484 = vmax.f32 %v1387, 1e-30
  %v1485 = vmax.f32 %v1390, 1e-30
  %v1486 = vmax.f32 %v1393, 1e-30
  %v1487 = vmax.f32 %v1396, 1e-30
  %v1488 = vmax.f32 %v1399, 1e-30
  %v1489 = vmax.f32 %v1402, 1e-30
  %v1490 = vmax.f32 %v1405, 1e-30
  %v1491 = vmax.f32 %v1408, 1e-30
  %v1492 = vmax.f32 %v1411, 1e-30
  %v1493 = vmax.f32 %v1414, 1e-30
  %v1494 = vmax.f32 %v1417, 1e-30
  %v1495 = vmax.f32 %v1420, 1e-30
  %v1496 = vmax.f32 %v1423, 1e-30
  %v1497 = vmax.f32 %v1426, 1e-30
  %v1498 = vmax.f32 %v1429, 1e-30
  %v1499 = vmax.f32 %v1432, 1e-30
  %v1500 = vmax.f32 %v1435, 1e-30
  %v1501 = vmax.f32 %v1438, 1e-30
  %v1502 = vrsqrt.pop %v1439
  %v1503 = vrsqrt.pop %v1440
  %v1504 = vrsqrt.pop %v1441
  %v1505 = vrsqrt.pop %v1442
  %v1506 = vrsqrt.pop %v1443
  %v1507 = vrsqrt.pop %v1444
  %v1508 = vrsqrt.pop %v1445
  %v1509 = vrsqrt.pop %v1446
  %v1510 = vrsqrt.pop %v1447
  %v1511 = vrsqrt.pop %v1448
  %v1512 = vrsqrt.pop %v1449
  %v1513 = vrsqrt.pop %v1450
  %v1514 = vrsqrt.pop %v1451
  %v1515 = vrsqrt.pop %v1452
  %v1516 = vrsqrt.pop %v1453
  %v1517 = vrsqrt.pop %v1454
  %v1518 = vrsqrt.pop %v1455
  %v1519 = vrsqrt.pop %v1456
  %v1520 = vrsqrt.pop %v1457
  %v1521 = vrsqrt.pop %v1458
  %v1522 = vrsqrt.pop %v1459
  %v1523 = vrsqrt.pop %v1460
  %v1524 = vrsqrt.pop %v1461
  %v1525 = vrsqrt.pop %v1462
  %v1526 = vrsqrt.pop %v1463
  %v1527 = vrsqrt.pop %v1464
  %v1528 = vrsqrt.pop %v1465
  %v1529 = vrsqrt.pop %v1466
  %v1530 = vrsqrt.pop %v1467
  %v1531 = vrsqrt.pop %v1468
  %v1532 = vrsqrt.pop %v1469
  %v1533 = vrsqrt.pop %v1470
  %v1534 = vrsqrt.pop %v1471
  %v1535 = vrsqrt.pop %v1472
  %v1536 = vrsqrt.pop %v1473
  %v1537 = vrsqrt.pop %v1474
  %v1538 = vrsqrt.pop %v1475
  %v1539 = vrsqrt.pop %v1476
  %v1540 = vrsqrt.pop %v1477
  %v1541 = vrsqrt.pop %v1478
  %v1542 = vrsqrt.pop %v1479
  %v1543 = vrsqrt.pop %v1480
  %v1544 = vrsqrt.pop %v1481
  %v1545 = vrsqrt.pop %v1482
  %v1546 = vrsqrt.pop %v1483
  %v1547 = vrsqrt.pop %v1484
  %v1548 = vrsqrt.pop %v1485
  %v1549 = vrsqrt.pop %v1486
  %v1550 = vrsqrt.pop %v1487
  %v1551 = vrsqrt.pop %v1488
  %v1552 = vrsqrt.pop %v1489
  %v1553 = vrsqrt.pop %v1490
  %v1554 = vrsqrt.pop %v1491
  %v1555 = vrsqrt.pop %v1492
  %v1556 = vrsqrt.pop %v1493
  %v1557 = vrsqrt.pop %v1494
  %v1558 = vrsqrt.pop %v1495
  %v1559 = vrsqrt.pop %v1496
  %v1560 = vrsqrt.pop %v1497
  %v1561 = vrsqrt.pop %v1498
  %v1562 = vrsqrt.pop %v1499
  %v1563 = vrsqrt.pop %v1500
  %v1564 = vrsqrt.pop %v1501
  %v1565 = vmul.f32 %v1502, %v1122
  %v1566 = vmul.f32 %v1503, %v1122
  %v1567 = vmul.f32 %v1504, %v1122
  %v1568 = vmul.f32 %v1505, %v1122
  %v1569 = vmul.f32 %v1506, %v1122
  %v1570 = vmul.f32 %v1507, %v1122
  %v1571 = vmul.f32 %v1508, %v1122
  %v1572 = vmul.f32 %v1509, %v1122
  %v1573 = vmul.f32 %v1510, %v1122
  %v1574 = vmul.f32 %v1511, %v1122
  %v1575 = vmul.f32 %v1512, %v1122
  %v1576 = vmul.f32 %v1513, %v1122
  %v1577 = vmul.f32 %v1514, %v1122
  %v1578 = vmul.f32 %v1515, %v1122
  %v1579 = vmul.f32 %v1516, %v1122
  %v1580 = vmul.f32 %v1517, %v1122
  %v1581 = vmul.f32 %v1518, %v1122
  %v1582 = vmul.f32 %v1519, %v1122
  %v1583 = vmul.f32 %v1520, %v1122
  %v1584 = vmul.f32 %v1521, %v1122
  %v1585 = vmul.f32 %v1522, %v1122
  %v1586 = vmul.f32 %v1523, %v1122
  %v1587 = vmul.f32 %v1524, %v1122
  %v1588 = vmul.f32 %v1525, %v1122
  %v1589 = vmul.f32 %v1526, %v1122
  %v1590 = vmul.f32 %v1527, %v1122
  %v1591 = vmul.f32 %v1528, %v1122
  %v1592 = vmul.f32 %v1529, %v1122
  %v1593 = vmul.f32 %v1530, %v1122
  %v1594 = vmul.f32 %v1531, %v1122
  %v1595 = vmul.f32 %v1532, %v1122
  %v1596 = vmul.f32 %v1533, %v1122
  %v1597 = vmul.f32 %v1534, %v1122
  %v1598 = vmul.f32 %v1535, %v1122
  %v1599 = vmul.f32 %v1536, %v1122
  %v1600 = vmul.f32 %v1537, %v1122
  %v1601 = vmul.f32 %v1538, %v1122
  %v1602 = vmul.f32 %v1539, %v1122
  %v1603 = vmul.f32 %v1540, %v1122
  %v1604 = vmul.f32 %v1541, %v1122
  %v1605 = vmul.f32 %v1542, %v1122
  %v1606 = vmul.f32 %v1543, %v1122
  %v1607 = vmul.f32 %v1544, %v1122
  %v1608 = vmul.f32 %v1545, %v1122
  %v1609 = vmul.f32 %v1546, %v1122
  %v1610 = vmul.f32 %v1547, %v1122
  %v1611 = vmul.f32 %v1548, %v1122
  %v1612 = vmul.f32 %v1549, %v1122
  %v1613 = vmul.f32 %v1550, %v1122
  %v1614 = vmul.f32 %v1551, %v1122
  %v1615 = vmul.f32 %v1552, %v1122
  %v1616 = vmul.f32 %v1553, %v1122
  %v1617 = vmul.f32 %v1554, %v1122
  %v1618 = vmul.f32 %v1555, %v1122
  %v1619 = vmul.f32 %v1556, %v1122
  %v1620 = vmul.f32 %v1557, %v1122
  %v1621 = vmul.f32 %v1558, %v1122
  %v1622 = vmul.f32 %v1559, %v1122
  %v1623 = vmul.f32 %v1560, %v1122
  %v1624 = vmul.f32 %v1561, %v1122
  %v1625 = vmul.f32 %v1562, %v1122
  %v1626 = vmul.f32 %v1563, %v1122
  %v1627 = vmul.f32 %v1564, %v1122
  %v1628 = vsub.f32 1.0, %v1122
  %v1629 = vadd.f32 %v1565, %v1628
  %v1630 = vadd.f32 %v1566, %v1628
  %v1631 = vadd.f32 %v1567, %v1628
  %v1632 = vadd.f32 %v1568, %v1628
  %v1633 = vadd.f32 %v1569, %v1628
  %v1634 = vadd.f32 %v1570, %v1628
  %v1635 = vadd.f32 %v1571, %v1628
  %v1636 = vadd.f32 %v1572, %v1628
  %v1637 = vadd.f32 %v1573, %v1628
  %v1638 = vadd.f32 %v1574, %v1628
  %v1639 = vadd.f32 %v1575, %v1628
  %v1640 = vadd.f32 %v1576, %v1628
  %v1641 = vadd.f32 %v1577, %v1628
  %v1642 = vadd.f32 %v1578, %v1628
  %v1643 = vadd.f32 %v1579, %v1628
  %v1644 = vadd.f32 %v1580, %v1628
  %v1645 = vadd.f32 %v1581, %v1628
  %v1646 = vadd.f32 %v1582, %v1628
  %v1647 = vadd.f32 %v1583, %v1628
  %v1648 = vadd.f32 %v1584, %v1628
  %v1649 = vadd.f32 %v1585, %v1628
  %v1650 = vadd.f32 %v1586, %v1628
  %v1651 = vadd.f32 %v1587, %v1628
  %v1652 = vadd.f32 %v1588, %v1628
  %v1653 = vadd.f32 %v1589, %v1628
  %v1654 = vadd.f32 %v1590, %v1628
  %v1655 = vadd.f32 %v1591, %v1628
  %v1656 = vadd.f32 %v1592, %v1628
  %v1657 = vadd.f32 %v1593, %v1628
  %v1658 = vadd.f32 %v1594, %v1628
  %v1659 = vadd.f32 %v1595, %v1628
  %v1660 = vadd.f32 %v1596, %v1628
  %v1661 = vadd.f32 %v1597, %v1628
  %v1662 = vadd.f32 %v1598, %v1628
  %v1663 = vadd.f32 %v1599, %v1628
  %v1664 = vadd.f32 %v1600, %v1628
  %v1665 = vadd.f32 %v1601, %v1628
  %v1666 = vadd.f32 %v1602, %v1628
  %v1667 = vadd.f32 %v1603, %v1628
  %v1668 = vadd.f32 %v1604, %v1628
  %v1669 = vadd.f32 %v1605, %v1628
  %v1670 = vadd.f32 %v1606, %v1628
  %v1671 = vadd.f32 %v1607, %v1628
  %v1672 = vadd.f32 %v1608, %v1628
  %v1673 = vadd.f32 %v1609, %v1628
  %v1674 = vadd.f32 %v1610, %v1628
  %v1675 = vadd.f32 %v1611, %v1628
  %v1676 = vadd.f32 %v1612, %v1628
  %v1677 = vadd.f32 %v1613, %v1628
  %v1678 = vadd.f32 %v1614, %v1628
  %v1679 = vadd.f32 %v1615, %v1628
  %v1680 = vadd.f32 %v1616, %v1628
  %v1681 = vadd.f32 %v1617, %v1628
  %v1682 = vadd.f32 %v1618, %v1628
  %v1683 = vadd.f32 %v1619, %v1628
  %v1684 = vadd.f32 %v1620, %v1628
  %v1685 = vadd.f32 %v1621, %v1628
  %v1686 = vadd.f32 %v1622, %v1628
  %v1687 = vadd.f32 %v1623, %v1628
  %v1688 = vadd.f32 %v1624, %v1628
  %v1689 = vadd.f32 %v1625, %v1628
  %v1690 = vadd.f32 %v1626, %v1628
  %v1691 = vadd.f32 %v1627, %v1628
  %v1692 = vmul.f32 %v859, %v1629
  %v1693 = vmul.f32 %v862, %v1630
  %v1694 = vmul.f32 %v867, %v1631
  %v1695 = vmul.f32 %v870, %v1632
  %v1696 = vmul.f32 %v875, %v1633
  %v1697 = vmul.f32 %v878, %v1634
  %v1698 = vmul.f32 %v883, %v1635
  %v1699 = vmul.f32 %v886, %v1636
  %v1700 = vmul.f32 %v891, %v1637
  %v1701 = vmul.f32 %v894, %v1638
  %v1702 = vmul.f32 %v899, %v1639
  %v1703 = vmul.f32 %v902, %v1640
  %v1704 = vmul.f32 %v907, %v1641
  %v1705 = vmul.f32 %v910, %v1642
  %v1706 = vmul.f32 %v915, %v1643
  %v1707 = vmul.f32 %v918, %v1644
  %v1708 = vmul.f32 %v923, %v1645
  %v1709 = vmul.f32 %v926, %v1646
  %v1710 = vmul.f32 %v931, %v1647
  %v1711 = vmul.f32 %v934, %v1648
  %v1712 = vmul.f32 %v939, %v1649
  %v1713 = vmul.f32 %v942, %v1650
  %v1714 = vmul.f32 %v947, %v1651
  %v1715 = vmul.f32 %v950, %v1652
  %v1716 = vmul.f32 %v955, %v1653
  %v1717 = vmul.f32 %v958, %v1654
  %v1718 = vmul.f32 %v963, %v1655
  %v1719 = vmul.f32 %v966, %v1656
  %v1720 = vmul.f32 %v971, %v1657
  %v1721 = vmul.f32 %v974, %v1658
  %v1722 = vmul.f32 %v979, %v1659
  %v1723 = vmul.f32 %v982, %v1660
  %v1724 = vmul.f32 %v987, %v1661
  %v1725 = vmul.f32 %v990, %v1662
  %v1726 = vmul.f32 %v995, %v1663
  %v1727 = vmul.f32 %v998, %v1664
  %v1728 = vmul.f32 %v1003, %v1665
  %v1729 = vmul.f32 %v1006, %v1666
  %v1730 = vmul.f32 %v1011, %v1667
  %v1731 = vmul.f32 %v1014, %v1668
  %v1732 = vmul.f32 %v1019, %v1669
  %v1733 = vmul.f32 %v1022, %v1670
  %v1734 = vmul.f32 %v1027, %v1671
  %v1735 = vmul.f32 %v1030, %v1672
  %v1736 = vmul.f32 %v1035, %v1673
  %v1737 = vmul.f32 %v1038, %v1674
  %v1738 = vmul.f32 %v1043, %v1675
  %v1739 = vmul.f32 %v1046, %v1676
  %v1740 = vmul.f32 %v1051, %v1677
  %v1741 = vmul.f32 %v1054, %v1678
  %v1742 = vmul.f32 %v1059, %v1679
  %v1743 = vmul.f32 %v1062, %v1680
  %v1744 = vmul.f32 %v1067, %v1681
  %v1745 = vmul.f32 %v1070, %v1682
  %v1746 = vmul.f32 %v1075, %v1683
  %v1747 = vmul.f32 %v1078, %v1684
  %v1748 = vmul.f32 %v1083, %v1685
  %v1749 = vmul.f32 %v1086, %v1686
  %v1750 = vmul.f32 %v1091, %v1687
  %v1751 = vmul.f32 %v1094, %v1688
  %v1752 = vmul.f32 %v1099, %v1689
  %v1753 = vmul.f32 %v1102, %v1690
  %v1754 = vmul.f32 %v1107, %v1691
  %v1755 = vld [vmem:[%s6] sm:$0xff]
  %v1757 = vsel %vm1249, %v1692, 0
  %v1760 = vsel %vm1249, %v1693, 0
  %v1763 = vsel %vm1249, %v1694, 0
  %v1766 = vsel %vm1249, %v1695, 0
  %v1769 = vsel %vm1249, %v1696, 0
  %v1772 = vsel %vm1249, %v1697, 0
  %v1775 = vsel %vm1249, %v1698, 0
  %v1778 = vsel %vm1249, %v1699, 0
  %v1781 = vsel %vm1249, %v1700, 0
  %v1784 = vsel %vm1249, %v1701, 0
  %v1787 = vsel %vm1249, %v1702, 0
  %v1790 = vsel %vm1249, %v1703, 0
  %v1793 = vsel %vm1249, %v1704, 0
  %v1796 = vsel %vm1249, %v1705, 0
  %v1799 = vsel %vm1249, %v1706, 0
  %v1802 = vsel %vm1249, %v1707, 0
  %v1805 = vsel %vm1249, %v1708, 0
  %v1808 = vsel %vm1249, %v1709, 0
  %v1811 = vsel %vm1249, %v1710, 0
  %v1814 = vsel %vm1249, %v1711, 0
  %v1817 = vsel %vm1249, %v1712, 0
  %v1820 = vsel %vm1249, %v1713, 0
  %v1823 = vsel %vm1249, %v1714, 0
  %v1826 = vsel %vm1249, %v1715, 0
  %v1829 = vsel %vm1249, %v1716, 0
  %v1832 = vsel %vm1249, %v1717, 0
  %v1835 = vsel %vm1249, %v1718, 0
  %v1838 = vsel %vm1249, %v1719, 0
  %v1841 = vsel %vm1249, %v1720, 0
  %v1844 = vsel %vm1249, %v1721, 0
  %v1847 = vsel %vm1249, %v1722, 0
  %v1850 = vsel %vm1249, %v1723, 0
  %v1853 = vsel %vm1249, %v1724, 0
  %v1856 = vsel %vm1249, %v1725, 0
  %v1859 = vsel %vm1249, %v1726, 0
  %v1862 = vsel %vm1249, %v1727, 0
  %v1865 = vsel %vm1249, %v1728, 0
  %v1868 = vsel %vm1249, %v1729, 0
  %v1871 = vsel %vm1249, %v1730, 0
  %v1874 = vsel %vm1249, %v1731, 0
  %v1877 = vsel %vm1249, %v1732, 0
  %v1880 = vsel %vm1249, %v1733, 0
  %v1883 = vsel %vm1249, %v1734, 0
  %v1886 = vsel %vm1249, %v1735, 0
  %v1889 = vsel %vm1249, %v1736, 0
  %v1892 = vsel %vm1249, %v1737, 0
  %v1895 = vsel %vm1249, %v1738, 0
  %v1898 = vsel %vm1249, %v1739, 0
  %v1901 = vsel %vm1249, %v1740, 0
  %v1904 = vsel %vm1249, %v1741, 0
  %v1907 = vsel %vm1249, %v1742, 0
  %v1910 = vsel %vm1249, %v1743, 0
  %v1913 = vsel %vm1249, %v1744, 0
  %v1916 = vsel %vm1249, %v1745, 0
  %v1919 = vsel %vm1249, %v1746, 0
  %v1922 = vsel %vm1249, %v1747, 0
  %v1925 = vsel %vm1249, %v1748, 0
  %v1928 = vsel %vm1249, %v1749, 0
  %v1931 = vsel %vm1249, %v1750, 0
  %v1934 = vsel %vm1249, %v1751, 0
  %v1937 = vsel %vm1249, %v1752, 0
  %v1940 = vsel %vm1249, %v1753, 0
  %v1943 = vsel %vm1249, %v1754, 0
  %1945 = vmatprep.subr.mxu0 0.0
  %1946 = vmatpush1.msra.mxu0 0.0
  %1947 = vmatprep.subr.mxu0 0.0
  %1948 = vmatpush1.msra.mxu0 0.0
  %1949 = vmatprep.subr.mxu0 0.0
  %1950 = vmatpush1.msra.mxu0 0.0
  %1951 = vmatprep.subr.mxu0 0.0
  %1952 = vmatpush1.msra.mxu0 0.0
  %1953 = vmatprep.subr.mxu0 0.0
  %1954 = vmatpush1.msra.mxu0 0.0
  %1955 = vmatprep.subr.mxu0 0.0
  %1956 = vmatpush1.msra.mxu0 0.0
  %1957 = vmatprep.subr.mxu0 0.0
  %1958 = vmatpush1.msra.mxu0 0.0
  %1959 = vmatprep.subr.mxu0 0.0
  %1960 = vmatpush1.msra.mxu0 0.0
  %1961 = vmatprep.subr.mxu0 0.0
  %1962 = vmatpush1.msra.mxu0 0.0
  %1963 = vmatprep.subr.mxu0 0.0
  %1964 = vmatpush1.msra.mxu0 0.0
  %1965 = vmatprep.subr.mxu0 0.0
  %1966 = vmatpush1.msra.mxu0 0.0
  %1967 = vmatprep.subr.mxu0 0.0
  %1968 = vmatpush1.msra.mxu0 0.0
  %1969 = vmatprep.subr.mxu0 0.0
  %1970 = vmatpush1.msra.mxu0 0.0
  %1971 = vmatprep.subr.mxu0 0.0
  %1972 = vmatpush1.msra.mxu0 0.0
  %1973 = vmatprep.subr.mxu0 0.0
  %1974 = vmatpush1.msra.mxu0 0.0
  %1975 = vmatprep.subr.mxu0 0.0
  %1976 = vmatpush1.msra.mxu0 %v1755
  %1977 = vmatprep.subr.mxu0 0.0
  %1978 = vmatpush2.msra.mxu0 0.0
  %1979 = vmatprep.subr.mxu0 0.0
  %1980 = vmatpush2.msra.mxu0 0.0
  %1981 = vmatprep.subr.mxu0 0.0
  %1982 = vmatpush2.msra.mxu0 0.0
  %1983 = vmatprep.subr.mxu0 0.0
  %1984 = vmatpush2.msra.mxu0 0.0
  %1985 = vmatprep.subr.mxu0 0.0
  %1986 = vmatpush2.msra.mxu0 0.0
  %1987 = vmatprep.subr.mxu0 0.0
  %1988 = vmatpush2.msra.mxu0 0.0
  %1989 = vmatprep.subr.mxu0 0.0
  %1990 = vmatpush2.msra.mxu0 0.0
  %1991 = vmatprep.subr.mxu0 0.0
  %1992 = vmatpush2.msra.mxu0 0.0
  %1993 = vmatprep.subr.mxu0 0.0
  %1994 = vmatpush2.msra.mxu0 0.0
  %1995 = vmatprep.subr.mxu0 0.0
  %1996 = vmatpush2.msra.mxu0 0.0
  %1997 = vmatprep.subr.mxu0 0.0
  %1998 = vmatpush2.msra.mxu0 0.0
  %1999 = vmatprep.subr.mxu0 0.0
  %2000 = vmatpush2.msra.mxu0 0.0
  %2001 = vmatprep.subr.mxu0 0.0
  %2002 = vmatpush2.msra.mxu0 0.0
  %2003 = vmatprep.subr.mxu0 0.0
  %2004 = vmatpush2.msra.mxu0 0.0
  %2005 = vmatprep.subr.mxu0 0.0
  %2006 = vmatpush2.msra.mxu0 0.0
  %2007 = vmatprep.subr.mxu0 0.0
  %2008 = vmatpush2.msra.mxu0 0.0
  %2009 = vmatprep.mubr.f32.mxu0 0.0
  %2010 = vmatmul.mubr.f32.gmra.mxu0 %v1757
  %v2011 = vpop.f32.mrf.mxu0
  %v2012 = vadd.f32 0.0, %v2011
  %v2013 = vpop.f32.mrf.mxu0
  %2014 = vmatprep.mubr.f32.mxu0 0.0
  %2015 = vmatmul.mubr.f32.gmra.mxu0 %v1760
  %v2016 = vpop.f32.mrf.mxu0
  %v2017 = vadd.f32 0.0, %v2016
  %v2018 = vpop.f32.mrf.mxu0
  %2019 = vmatprep.mubr.f32.mxu0 0.0
  %2020 = vmatmul.mubr.f32.gmra.mxu0 %v1763
  %v2021 = vpop.f32.mrf.mxu0
  %v2022 = vadd.f32 0.0, %v2021
  %v2023 = vpop.f32.mrf.mxu0
  %2024 = vmatprep.mubr.f32.mxu0 0.0
  %2025 = vmatmul.mubr.f32.gmra.mxu0 %v1766
  %v2026 = vpop.f32.mrf.mxu0
  %v2027 = vadd.f32 0.0, %v2026
  %v2028 = vpop.f32.mrf.mxu0
  %2029 = vmatprep.mubr.f32.mxu0 0.0
  %2030 = vmatmul.mubr.f32.gmra.mxu0 %v1769
  %v2031 = vpop.f32.mrf.mxu0
  %v2032 = vadd.f32 0.0, %v2031
  %v2033 = vpop.f32.mrf.mxu0
  %2034 = vmatprep.mubr.f32.mxu0 0.0
  %2035 = vmatmul.mubr.f32.gmra.mxu0 %v1772
  %v2036 = vpop.f32.mrf.mxu0
  %v2037 = vadd.f32 0.0, %v2036
  %v2038 = vpop.f32.mrf.mxu0
  %2039 = vmatprep.mubr.f32.mxu0 0.0
  %2040 = vmatmul.mubr.f32.gmra.mxu0 %v1775
  %v2041 = vpop.f32.mrf.mxu0
  %v2042 = vadd.f32 0.0, %v2041
  %v2043 = vpop.f32.mrf.mxu0
  %2044 = vmatprep.mubr.f32.mxu0 0.0
  %2045 = vmatmul.mubr.f32.gmra.mxu0 %v1778
  %v2046 = vpop.f32.mrf.mxu0
  %v2047 = vadd.f32 0.0, %v2046
  %v2048 = vpop.f32.mrf.mxu0
  %2049 = vmatprep.mubr.f32.mxu0 0.0
  %2050 = vmatmul.mubr.f32.gmra.mxu0 %v1781
  %v2051 = vpop.f32.mrf.mxu0
  %v2052 = vadd.f32 0.0, %v2051
  %v2053 = vpop.f32.mrf.mxu0
  %2054 = vmatprep.mubr.f32.mxu0 0.0
  %2055 = vmatmul.mubr.f32.gmra.mxu0 %v1784
  %v2056 = vpop.f32.mrf.mxu0
  %v2057 = vadd.f32 0.0, %v2056
  %v2058 = vpop.f32.mrf.mxu0
  %2059 = vmatprep.mubr.f32.mxu0 0.0
  %2060 = vmatmul.mubr.f32.gmra.mxu0 %v1787
  %v2061 = vpop.f32.mrf.mxu0
  %v2062 = vadd.f32 0.0, %v2061
  %v2063 = vpop.f32.mrf.mxu0
  %2064 = vmatprep.mubr.f32.mxu0 0.0
  %2065 = vmatmul.mubr.f32.gmra.mxu0 %v1790
  %v2066 = vpop.f32.mrf.mxu0
  %v2067 = vadd.f32 0.0, %v2066
  %v2068 = vpop.f32.mrf.mxu0
  %2069 = vmatprep.mubr.f32.mxu0 0.0
  %2070 = vmatmul.mubr.f32.gmra.mxu0 %v1793
  %v2071 = vpop.f32.mrf.mxu0
  %v2072 = vadd.f32 0.0, %v2071
  %v2073 = vpop.f32.mrf.mxu0
  %2074 = vmatprep.mubr.f32.mxu0 0.0
  %2075 = vmatmul.mubr.f32.gmra.mxu0 %v1796
  %v2076 = vpop.f32.mrf.mxu0
  %v2077 = vadd.f32 0.0, %v2076
  %v2078 = vpop.f32.mrf.mxu0
  %2079 = vmatprep.mubr.f32.mxu0 0.0
  %2080 = vmatmul.mubr.f32.gmra.mxu0 %v1799
  %v2081 = vpop.f32.mrf.mxu0
  %v2082 = vadd.f32 0.0, %v2081
  %v2083 = vpop.f32.mrf.mxu0
  %2084 = vmatprep.mubr.f32.mxu0 0.0
  %2085 = vmatmul.mubr.f32.gmra.mxu0 %v1802
  %v2086 = vpop.f32.mrf.mxu0
  %v2087 = vadd.f32 0.0, %v2086
  %v2088 = vpop.f32.mrf.mxu0
  %2089 = vmatprep.mubr.f32.mxu0 0.0
  %2090 = vmatmul.mubr.f32.gmra.mxu0 %v1805
  %v2091 = vpop.f32.mrf.mxu0
  %v2092 = vadd.f32 0.0, %v2091
  %v2093 = vpop.f32.mrf.mxu0
  %2094 = vmatprep.mubr.f32.mxu0 0.0
  %2095 = vmatmul.mubr.f32.gmra.mxu0 %v1808
  %v2096 = vpop.f32.mrf.mxu0
  %v2097 = vadd.f32 0.0, %v2096
  %v2098 = vpop.f32.mrf.mxu0
  %2099 = vmatprep.mubr.f32.mxu0 0.0
  %2100 = vmatmul.mubr.f32.gmra.mxu0 %v1811
  %v2101 = vpop.f32.mrf.mxu0
  %v2102 = vadd.f32 0.0, %v2101
  %v2103 = vpop.f32.mrf.mxu0
  %2104 = vmatprep.mubr.f32.mxu0 0.0
  %2105 = vmatmul.mubr.f32.gmra.mxu0 %v1814
  %v2106 = vpop.f32.mrf.mxu0
  %v2107 = vadd.f32 0.0, %v2106
  %v2108 = vpop.f32.mrf.mxu0
  %2109 = vmatprep.mubr.f32.mxu0 0.0
  %2110 = vmatmul.mubr.f32.gmra.mxu0 %v1817
  %v2111 = vpop.f32.mrf.mxu0
  %v2112 = vadd.f32 0.0, %v2111
  %v2113 = vpop.f32.mrf.mxu0
  %2114 = vmatprep.mubr.f32.mxu0 0.0
  %2115 = vmatmul.mubr.f32.gmra.mxu0 %v1820
  %v2116 = vpop.f32.mrf.mxu0
  %v2117 = vadd.f32 0.0, %v2116
  %v2118 = vpop.f32.mrf.mxu0
  %2119 = vmatprep.mubr.f32.mxu0 0.0
  %2120 = vmatmul.mubr.f32.gmra.mxu0 %v1823
  %v2121 = vpop.f32.mrf.mxu0
  %v2122 = vadd.f32 0.0, %v2121
  %v2123 = vpop.f32.mrf.mxu0
  %2124 = vmatprep.mubr.f32.mxu0 0.0
  %2125 = vmatmul.mubr.f32.gmra.mxu0 %v1826
  %v2126 = vpop.f32.mrf.mxu0
  %v2127 = vadd.f32 0.0, %v2126
  %v2128 = vpop.f32.mrf.mxu0
  %2129 = vmatprep.mubr.f32.mxu0 0.0
  %2130 = vmatmul.mubr.f32.gmra.mxu0 %v1829
  %v2131 = vpop.f32.mrf.mxu0
  %v2132 = vadd.f32 0.0, %v2131
  %v2133 = vpop.f32.mrf.mxu0
  %2134 = vmatprep.mubr.f32.mxu0 0.0
  %2135 = vmatmul.mubr.f32.gmra.mxu0 %v1832
  %v2136 = vpop.f32.mrf.mxu0
  %v2137 = vadd.f32 0.0, %v2136
  %v2138 = vpop.f32.mrf.mxu0
  %2139 = vmatprep.mubr.f32.mxu0 0.0
  %2140 = vmatmul.mubr.f32.gmra.mxu0 %v1835
  %v2141 = vpop.f32.mrf.mxu0
  %v2142 = vadd.f32 0.0, %v2141
  %v2143 = vpop.f32.mrf.mxu0
  %2144 = vmatprep.mubr.f32.mxu0 0.0
  %2145 = vmatmul.mubr.f32.gmra.mxu0 %v1838
  %v2146 = vpop.f32.mrf.mxu0
  %v2147 = vadd.f32 0.0, %v2146
  %v2148 = vpop.f32.mrf.mxu0
  %2149 = vmatprep.mubr.f32.mxu0 0.0
  %2150 = vmatmul.mubr.f32.gmra.mxu0 %v1841
  %v2151 = vpop.f32.mrf.mxu0
  %v2152 = vadd.f32 0.0, %v2151
  %v2153 = vpop.f32.mrf.mxu0
  %2154 = vmatprep.mubr.f32.mxu0 0.0
  %2155 = vmatmul.mubr.f32.gmra.mxu0 %v1844
  %v2156 = vpop.f32.mrf.mxu0
  %v2157 = vadd.f32 0.0, %v2156
  %v2158 = vpop.f32.mrf.mxu0
  %2159 = vmatprep.mubr.f32.mxu0 0.0
  %2160 = vmatmul.mubr.f32.gmra.mxu0 %v1847
  %v2161 = vpop.f32.mrf.mxu0
  %v2162 = vadd.f32 0.0, %v2161
  %v2163 = vpop.f32.mrf.mxu0
  %2164 = vmatprep.mubr.f32.mxu0 0.0
  %2165 = vmatmul.mubr.f32.gmra.mxu0 %v1850
  %v2166 = vpop.f32.mrf.mxu0
  %v2167 = vadd.f32 0.0, %v2166
  %v2168 = vpop.f32.mrf.mxu0
  %2169 = vmatprep.mubr.f32.mxu0 0.0
  %2170 = vmatmul.mubr.f32.gmra.mxu0 %v1853
  %v2171 = vpop.f32.mrf.mxu0
  %v2172 = vadd.f32 0.0, %v2171
  %v2173 = vpop.f32.mrf.mxu0
  %2174 = vmatprep.mubr.f32.mxu0 0.0
  %2175 = vmatmul.mubr.f32.gmra.mxu0 %v1856
  %v2176 = vpop.f32.mrf.mxu0
  %v2177 = vadd.f32 0.0, %v2176
  %v2178 = vpop.f32.mrf.mxu0
  %2179 = vmatprep.mubr.f32.mxu0 0.0
  %2180 = vmatmul.mubr.f32.gmra.mxu0 %v1859
  %v2181 = vpop.f32.mrf.mxu0
  %v2182 = vadd.f32 0.0, %v2181
  %v2183 = vpop.f32.mrf.mxu0
  %2184 = vmatprep.mubr.f32.mxu0 0.0
  %2185 = vmatmul.mubr.f32.gmra.mxu0 %v1862
  %v2186 = vpop.f32.mrf.mxu0
  %v2187 = vadd.f32 0.0, %v2186
  %v2188 = vpop.f32.mrf.mxu0
  %2189 = vmatprep.mubr.f32.mxu0 0.0
  %2190 = vmatmul.mubr.f32.gmra.mxu0 %v1865
  %v2191 = vpop.f32.mrf.mxu0
  %v2192 = vadd.f32 0.0, %v2191
  %v2193 = vpop.f32.mrf.mxu0
  %2194 = vmatprep.mubr.f32.mxu0 0.0
  %2195 = vmatmul.mubr.f32.gmra.mxu0 %v1868
  %v2196 = vpop.f32.mrf.mxu0
  %v2197 = vadd.f32 0.0, %v2196
  %v2198 = vpop.f32.mrf.mxu0
  %2199 = vmatprep.mubr.f32.mxu0 0.0
  %2200 = vmatmul.mubr.f32.gmra.mxu0 %v1871
  %v2201 = vpop.f32.mrf.mxu0
  %v2202 = vadd.f32 0.0, %v2201
  %v2203 = vpop.f32.mrf.mxu0
  %2204 = vmatprep.mubr.f32.mxu0 0.0
  %2205 = vmatmul.mubr.f32.gmra.mxu0 %v1874
  %v2206 = vpop.f32.mrf.mxu0
  %v2207 = vadd.f32 0.0, %v2206
  %v2208 = vpop.f32.mrf.mxu0
  %2209 = vmatprep.mubr.f32.mxu0 0.0
  %2210 = vmatmul.mubr.f32.gmra.mxu0 %v1877
  %v2211 = vpop.f32.mrf.mxu0
  %v2212 = vadd.f32 0.0, %v2211
  %v2213 = vpop.f32.mrf.mxu0
  %2214 = vmatprep.mubr.f32.mxu0 0.0
  %2215 = vmatmul.mubr.f32.gmra.mxu0 %v1880
  %v2216 = vpop.f32.mrf.mxu0
  %v2217 = vadd.f32 0.0, %v2216
  %v2218 = vpop.f32.mrf.mxu0
  %2219 = vmatprep.mubr.f32.mxu0 0.0
  %2220 = vmatmul.mubr.f32.gmra.mxu0 %v1883
  %v2221 = vpop.f32.mrf.mxu0
  %v2222 = vadd.f32 0.0, %v2221
  %v2223 = vpop.f32.mrf.mxu0
  %2224 = vmatprep.mubr.f32.mxu0 0.0
  %2225 = vmatmul.mubr.f32.gmra.mxu0 %v1886
  %v2226 = vpop.f32.mrf.mxu0
  %v2227 = vadd.f32 0.0, %v2226
  %v2228 = vpop.f32.mrf.mxu0
  %2229 = vmatprep.mubr.f32.mxu0 0.0
  %2230 = vmatmul.mubr.f32.gmra.mxu0 %v1889
  %v2231 = vpop.f32.mrf.mxu0
  %v2232 = vadd.f32 0.0, %v2231
  %v2233 = vpop.f32.mrf.mxu0
  %2234 = vmatprep.mubr.f32.mxu0 0.0
  %2235 = vmatmul.mubr.f32.gmra.mxu0 %v1892
  %v2236 = vpop.f32.mrf.mxu0
  %v2237 = vadd.f32 0.0, %v2236
  %v2238 = vpop.f32.mrf.mxu0
  %2239 = vmatprep.mubr.f32.mxu0 0.0
  %2240 = vmatmul.mubr.f32.gmra.mxu0 %v1895
  %v2241 = vpop.f32.mrf.mxu0
  %v2242 = vadd.f32 0.0, %v2241
  %v2243 = vpop.f32.mrf.mxu0
  %2244 = vmatprep.mubr.f32.mxu0 0.0
  %2245 = vmatmul.mubr.f32.gmra.mxu0 %v1898
  %v2246 = vpop.f32.mrf.mxu0
  %v2247 = vadd.f32 0.0, %v2246
  %v2248 = vpop.f32.mrf.mxu0
  %2249 = vmatprep.mubr.f32.mxu0 0.0
  %2250 = vmatmul.mubr.f32.gmra.mxu0 %v1901
  %v2251 = vpop.f32.mrf.mxu0
  %v2252 = vadd.f32 0.0, %v2251
  %v2253 = vpop.f32.mrf.mxu0
  %2254 = vmatprep.mubr.f32.mxu0 0.0
  %2255 = vmatmul.mubr.f32.gmra.mxu0 %v1904
  %v2256 = vpop.f32.mrf.mxu0
  %v2257 = vadd.f32 0.0, %v2256
  %v2258 = vpop.f32.mrf.mxu0
  %2259 = vmatprep.mubr.f32.mxu0 0.0
  %2260 = vmatmul.mubr.f32.gmra.mxu0 %v1907
  %v2261 = vpop.f32.mrf.mxu0
  %v2262 = vadd.f32 0.0, %v2261
  %v2263 = vpop.f32.mrf.mxu0
  %2264 = vmatprep.mubr.f32.mxu0 0.0
  %2265 = vmatmul.mubr.f32.gmra.mxu0 %v1910
  %v2266 = vpop.f32.mrf.mxu0
  %v2267 = vadd.f32 0.0, %v2266
  %v2268 = vpop.f32.mrf.mxu0
  %2269 = vmatprep.mubr.f32.mxu0 0.0
  %2270 = vmatmul.mubr.f32.gmra.mxu0 %v1913
  %v2271 = vpop.f32.mrf.mxu0
  %v2272 = vadd.f32 0.0, %v2271
  %v2273 = vpop.f32.mrf.mxu0
  %2274 = vmatprep.mubr.f32.mxu0 0.0
  %2275 = vmatmul.mubr.f32.gmra.mxu0 %v1916
  %v2276 = vpop.f32.mrf.mxu0
  %v2277 = vadd.f32 0.0, %v2276
  %v2278 = vpop.f32.mrf.mxu0
  %2279 = vmatprep.mubr.f32.mxu0 0.0
  %2280 = vmatmul.mubr.f32.gmra.mxu0 %v1919
  %v2281 = vpop.f32.mrf.mxu0
  %v2282 = vadd.f32 0.0, %v2281
  %v2283 = vpop.f32.mrf.mxu0
  %2284 = vmatprep.mubr.f32.mxu0 0.0
  %2285 = vmatmul.mubr.f32.gmra.mxu0 %v1922
  %v2286 = vpop.f32.mrf.mxu0
  %v2287 = vadd.f32 0.0, %v2286
  %v2288 = vpop.f32.mrf.mxu0
  %2289 = vmatprep.mubr.f32.mxu0 0.0
  %2290 = vmatmul.mubr.f32.gmra.mxu0 %v1925
  %v2291 = vpop.f32.mrf.mxu0
  %v2292 = vadd.f32 0.0, %v2291
  %v2293 = vpop.f32.mrf.mxu0
  %2294 = vmatprep.mubr.f32.mxu0 0.0
  %2295 = vmatmul.mubr.f32.gmra.mxu0 %v1928
  %v2296 = vpop.f32.mrf.mxu0
  %v2297 = vadd.f32 0.0, %v2296
  %v2298 = vpop.f32.mrf.mxu0
  %2299 = vmatprep.mubr.f32.mxu0 0.0
  %2300 = vmatmul.mubr.f32.gmra.mxu0 %v1931
  %v2301 = vpop.f32.mrf.mxu0
  %v2302 = vadd.f32 0.0, %v2301
  %v2303 = vpop.f32.mrf.mxu0
  %2304 = vmatprep.mubr.f32.mxu0 0.0
  %2305 = vmatmul.mubr.f32.gmra.mxu0 %v1934
  %v2306 = vpop.f32.mrf.mxu0
  %v2307 = vadd.f32 0.0, %v2306
  %v2308 = vpop.f32.mrf.mxu0
  %2309 = vmatprep.mubr.f32.mxu0 0.0
  %2310 = vmatmul.mubr.f32.gmra.mxu0 %v1937
  %v2311 = vpop.f32.mrf.mxu0
  %v2312 = vadd.f32 0.0, %v2311
  %v2313 = vpop.f32.mrf.mxu0
  %2314 = vmatprep.mubr.f32.mxu0 0.0
  %2315 = vmatmul.mubr.f32.gmra.mxu0 %v1940
  %v2316 = vpop.f32.mrf.mxu0
  %v2317 = vadd.f32 0.0, %v2316
  %v2318 = vpop.f32.mrf.mxu0
  %2319 = vmatprep.mubr.f32.mxu0 0.0
  %2320 = vmatmul.mubr.f32.gmra.mxu0 %v1943
  %v2321 = vpop.f32.mrf.mxu0
  %v2322 = vadd.f32 0.0, %v2321
  %v2323 = vpop.f32.mrf.mxu0
  %2324 = vdwg.mxu0
  %2388 = vrot.lane.b32.xlu0 %v2012, 109
  %v2389 = vpop.permute.xlu0 %2388
  %2390 = vrot.lane.b32.xlu0 %v2017, 109
  %v2391 = vpop.permute.xlu0 %2390
  %2392 = vrot.lane.b32.xlu0 %v2022, 109
  %v2393 = vpop.permute.xlu0 %2392
  %2394 = vrot.lane.b32.xlu0 %v2027, 109
  %v2395 = vpop.permute.xlu0 %2394
  %2396 = vrot.lane.b32.xlu0 %v2032, 109
  %v2397 = vpop.permute.xlu0 %2396
  %2398 = vrot.lane.b32.xlu0 %v2037, 109
  %v2399 = vpop.permute.xlu0 %2398
  %2400 = vrot.lane.b32.xlu0 %v2042, 109
  %v2401 = vpop.permute.xlu0 %2400
  %2402 = vrot.lane.b32.xlu0 %v2047, 109
  %v2403 = vpop.permute.xlu0 %2402
  %2404 = vrot.lane.b32.xlu0 %v2052, 109
  %v2405 = vpop.permute.xlu0 %2404
  %2406 = vrot.lane.b32.xlu0 %v2057, 109
  %v2407 = vpop.permute.xlu0 %2406
  %2408 = vrot.lane.b32.xlu0 %v2062, 109
  %v2409 = vpop.permute.xlu0 %2408
  %2410 = vrot.lane.b32.xlu0 %v2067, 109
  %v2411 = vpop.permute.xlu0 %2410
  %2412 = vrot.lane.b32.xlu0 %v2072, 109
  %v2413 = vpop.permute.xlu0 %2412
  %2414 = vrot.lane.b32.xlu0 %v2077, 109
  %v2415 = vpop.permute.xlu0 %2414
  %2416 = vrot.lane.b32.xlu0 %v2082, 109
  %v2417 = vpop.permute.xlu0 %2416
  %2418 = vrot.lane.b32.xlu0 %v2087, 109
  %v2419 = vpop.permute.xlu0 %2418
  %2420 = vrot.lane.b32.xlu0 %v2092, 109
  %v2421 = vpop.permute.xlu0 %2420
  %2422 = vrot.lane.b32.xlu0 %v2097, 109
  %v2423 = vpop.permute.xlu0 %2422
  %2424 = vrot.lane.b32.xlu0 %v2102, 109
  %v2425 = vpop.permute.xlu0 %2424
  %2426 = vrot.lane.b32.xlu0 %v2107, 109
  %v2427 = vpop.permute.xlu0 %2426
  %2428 = vrot.lane.b32.xlu0 %v2112, 109
  %v2429 = vpop.permute.xlu0 %2428
  %2430 = vrot.lane.b32.xlu0 %v2117, 109
  %v2431 = vpop.permute.xlu0 %2430
  %2432 = vrot.lane.b32.xlu0 %v2122, 109
  %v2433 = vpop.permute.xlu0 %2432
  %2434 = vrot.lane.b32.xlu0 %v2127, 109
  %v2435 = vpop.permute.xlu0 %2434
  %2436 = vrot.lane.b32.xlu0 %v2132, 109
  %v2437 = vpop.permute.xlu0 %2436
  %2438 = vrot.lane.b32.xlu0 %v2137, 109
  %v2439 = vpop.permute.xlu0 %2438
  %2440 = vrot.lane.b32.xlu0 %v2142, 109
  %v2441 = vpop.permute.xlu0 %2440
  %2442 = vrot.lane.b32.xlu0 %v2147, 109
  %v2443 = vpop.permute.xlu0 %2442
  %2444 = vrot.lane.b32.xlu0 %v2152, 109
  %v2445 = vpop.permute.xlu0 %2444
  %2446 = vrot.lane.b32.xlu0 %v2157, 109
  %v2447 = vpop.permute.xlu0 %2446
  %2448 = vrot.lane.b32.xlu0 %v2162, 109
  %v2449 = vpop.permute.xlu0 %2448
  %2450 = vrot.lane.b32.xlu0 %v2167, 109
  %v2451 = vpop.permute.xlu0 %2450
  %2452 = vrot.lane.b32.xlu0 %v2172, 109
  %v2453 = vpop.permute.xlu0 %2452
  %2454 = vrot.lane.b32.xlu0 %v2177, 109
  %v2455 = vpop.permute.xlu0 %2454
  %2456 = vrot.lane.b32.xlu0 %v2182, 109
  %v2457 = vpop.permute.xlu0 %2456
  %2458 = vrot.lane.b32.xlu0 %v2187, 109
  %v2459 = vpop.permute.xlu0 %2458
  %2460 = vrot.lane.b32.xlu0 %v2192, 109
  %v2461 = vpop.permute.xlu0 %2460
  %2462 = vrot.lane.b32.xlu0 %v2197, 109
  %v2463 = vpop.permute.xlu0 %2462
  %2464 = vrot.lane.b32.xlu0 %v2202, 109
  %v2465 = vpop.permute.xlu0 %2464
  %2466 = vrot.lane.b32.xlu0 %v2207, 109
  %v2467 = vpop.permute.xlu0 %2466
  %2468 = vrot.lane.b32.xlu0 %v2212, 109
  %v2469 = vpop.permute.xlu0 %2468
  %2470 = vrot.lane.b32.xlu0 %v2217, 109
  %v2471 = vpop.permute.xlu0 %2470
  %2472 = vrot.lane.b32.xlu0 %v2222, 109
  %v2473 = vpop.permute.xlu0 %2472
  %2474 = vrot.lane.b32.xlu0 %v2227, 109
  %v2475 = vpop.permute.xlu0 %2474
  %2476 = vrot.lane.b32.xlu0 %v2232, 109
  %v2477 = vpop.permute.xlu0 %2476
  %2478 = vrot.lane.b32.xlu0 %v2237, 109
  %v2479 = vpop.permute.xlu0 %2478
  %2480 = vrot.lane.b32.xlu0 %v2242, 109
  %v2481 = vpop.permute.xlu0 %2480
  %2482 = vrot.lane.b32.xlu0 %v2247, 109
  %v2483 = vpop.permute.xlu0 %2482
  %2484 = vrot.lane.b32.xlu0 %v2252, 109
  %v2485 = vpop.permute.xlu0 %2484
  %2486 = vrot.lane.b32.xlu0 %v2257, 109
  %v2487 = vpop.permute.xlu0 %2486
  %2488 = vrot.lane.b32.xlu0 %v2262, 109
  %v2489 = vpop.permute.xlu0 %2488
  %2490 = vrot.lane.b32.xlu0 %v2267, 109
  %v2491 = vpop.permute.xlu0 %2490
  %2492 = vrot.lane.b32.xlu0 %v2272, 109
  %v2493 = vpop.permute.xlu0 %2492
  %2494 = vrot.lane.b32.xlu0 %v2277, 109
  %v2495 = vpop.permute.xlu0 %2494
  %2496 = vrot.lane.b32.xlu0 %v2282, 109
  %v2497 = vpop.permute.xlu0 %2496
  %2498 = vrot.lane.b32.xlu0 %v2287, 109
  %v2499 = vpop.permute.xlu0 %2498
  %2500 = vrot.lane.b32.xlu0 %v2292, 109
  %v2501 = vpop.permute.xlu0 %2500
  %2502 = vrot.lane.b32.xlu0 %v2297, 109
  %v2503 = vpop.permute.xlu0 %2502
  %2504 = vrot.lane.b32.xlu0 %v2302, 109
  %v2505 = vpop.permute.xlu0 %2504
  %2506 = vrot.lane.b32.xlu0 %v2307, 109
  %v2507 = vpop.permute.xlu0 %2506
  %2508 = vrot.lane.b32.xlu0 %v2312, 109
  %v2509 = vpop.permute.xlu0 %2508
  %2510 = vrot.lane.b32.xlu0 %v2317, 109
  %v2511 = vpop.permute.xlu0 %2510
  %2512 = vrot.lane.b32.xlu0 %v2322, 109
  %v2513 = vpop.permute.xlu0 %2512
  %v2577 = vmul.f32 %v2012, %v2389
  %v2578 = vmul.f32 %v2017, %v2391
  %v2579 = vmul.f32 %v2022, %v2393
  %v2580 = vmul.f32 %v2027, %v2395
  %v2581 = vmul.f32 %v2032, %v2397
  %v2582 = vmul.f32 %v2037, %v2399
  %v2583 = vmul.f32 %v2042, %v2401
  %v2584 = vmul.f32 %v2047, %v2403
  %v2585 = vmul.f32 %v2052, %v2405
  %v2586 = vmul.f32 %v2057, %v2407
  %v2587 = vmul.f32 %v2062, %v2409
  %v2588 = vmul.f32 %v2067, %v2411
  %v2589 = vmul.f32 %v2072, %v2413
  %v2590 = vmul.f32 %v2077, %v2415
  %v2591 = vmul.f32 %v2082, %v2417
  %v2592 = vmul.f32 %v2087, %v2419
  %v2593 = vmul.f32 %v2092, %v2421
  %v2594 = vmul.f32 %v2097, %v2423
  %v2595 = vmul.f32 %v2102, %v2425
  %v2596 = vmul.f32 %v2107, %v2427
  %v2597 = vmul.f32 %v2112, %v2429
  %v2598 = vmul.f32 %v2117, %v2431
  %v2599 = vmul.f32 %v2122, %v2433
  %v2600 = vmul.f32 %v2127, %v2435
  %v2601 = vmul.f32 %v2132, %v2437
  %v2602 = vmul.f32 %v2137, %v2439
  %v2603 = vmul.f32 %v2142, %v2441
  %v2604 = vmul.f32 %v2147, %v2443
  %v2605 = vmul.f32 %v2152, %v2445
  %v2606 = vmul.f32 %v2157, %v2447
  %v2607 = vmul.f32 %v2162, %v2449
  %v2608 = vmul.f32 %v2167, %v2451
  %v2609 = vmul.f32 %v2172, %v2453
  %v2610 = vmul.f32 %v2177, %v2455
  %v2611 = vmul.f32 %v2182, %v2457
  %v2612 = vmul.f32 %v2187, %v2459
  %v2613 = vmul.f32 %v2192, %v2461
  %v2614 = vmul.f32 %v2197, %v2463
  %v2615 = vmul.f32 %v2202, %v2465
  %v2616 = vmul.f32 %v2207, %v2467
  %v2617 = vmul.f32 %v2212, %v2469
  %v2618 = vmul.f32 %v2217, %v2471
  %v2619 = vmul.f32 %v2222, %v2473
  %v2620 = vmul.f32 %v2227, %v2475
  %v2621 = vmul.f32 %v2232, %v2477
  %v2622 = vmul.f32 %v2237, %v2479
  %v2623 = vmul.f32 %v2242, %v2481
  %v2624 = vmul.f32 %v2247, %v2483
  %v2625 = vmul.f32 %v2252, %v2485
  %v2626 = vmul.f32 %v2257, %v2487
  %v2627 = vmul.f32 %v2262, %v2489
  %v2628 = vmul.f32 %v2267, %v2491
  %v2629 = vmul.f32 %v2272, %v2493
  %v2630 = vmul.f32 %v2277, %v2495
  %v2631 = vmul.f32 %v2282, %v2497
  %v2632 = vmul.f32 %v2287, %v2499
  %v2633 = vmul.f32 %v2292, %v2501
  %v2634 = vmul.f32 %v2297, %v2503
  %v2635 = vmul.f32 %v2302, %v2505
  %v2636 = vmul.f32 %v2307, %v2507
  %v2637 = vmul.f32 %v2312, %v2509
  %v2638 = vmul.f32 %v2317, %v2511
  %v2639 = vmul.f32 %v2322, %v2513
  %v2640 = vld [vmem:[%s6 + $0x8] sm:$0xff]
  %v2641 = vld [vmem:[%s6 + $0x10] sm:$0xff]
  %v2642 = vld [vmem:[%s6 + $0x18] sm:$0x7]
  %vm2643 = vcmask 154624
  %v2645 = vsel %vm2643, %v2577, 0
  %v2648 = vsel %vm2643, %v2578, 0
  %v2651 = vsel %vm2643, %v2579, 0
  %v2654 = vsel %vm2643, %v2580, 0
  %v2657 = vsel %vm2643, %v2581, 0
  %v2660 = vsel %vm2643, %v2582, 0
  %v2663 = vsel %vm2643, %v2583, 0
  %v2666 = vsel %vm2643, %v2584, 0
  %v2669 = vsel %vm2643, %v2585, 0
  %v2672 = vsel %vm2643, %v2586, 0
  %v2675 = vsel %vm2643, %v2587, 0
  %v2678 = vsel %vm2643, %v2588, 0
  %v2681 = vsel %vm2643, %v2589, 0
  %v2684 = vsel %vm2643, %v2590, 0
  %v2687 = vsel %vm2643, %v2591, 0
  %v2690 = vsel %vm2643, %v2592, 0
  %v2693 = vsel %vm2643, %v2593, 0
  %v2696 = vsel %vm2643, %v2594, 0
  %v2699 = vsel %vm2643, %v2595, 0
  %v2702 = vsel %vm2643, %v2596, 0
  %v2705 = vsel %vm2643, %v2597, 0
  %v2708 = vsel %vm2643, %v2598, 0
  %v2711 = vsel %vm2643, %v2599, 0
  %v2714 = vsel %vm2643, %v2600, 0
  %v2717 = vsel %vm2643, %v2601, 0
  %v2720 = vsel %vm2643, %v2602, 0
  %v2723 = vsel %vm2643, %v2603, 0
  %v2726 = vsel %vm2643, %v2604, 0
  %v2729 = vsel %vm2643, %v2605, 0
  %v2732 = vsel %vm2643, %v2606, 0
  %v2735 = vsel %vm2643, %v2607, 0
  %v2738 = vsel %vm2643, %v2608, 0
  %v2741 = vsel %vm2643, %v2609, 0
  %v2744 = vsel %vm2643, %v2610, 0
  %v2747 = vsel %vm2643, %v2611, 0
  %v2750 = vsel %vm2643, %v2612, 0
  %v2753 = vsel %vm2643, %v2613, 0
  %v2756 = vsel %vm2643, %v2614, 0
  %v2759 = vsel %vm2643, %v2615, 0
  %v2762 = vsel %vm2643, %v2616, 0
  %v2765 = vsel %vm2643, %v2617, 0
  %v2768 = vsel %vm2643, %v2618, 0
  %v2771 = vsel %vm2643, %v2619, 0
  %v2774 = vsel %vm2643, %v2620, 0
  %v2777 = vsel %vm2643, %v2621, 0
  %v2780 = vsel %vm2643, %v2622, 0
  %v2783 = vsel %vm2643, %v2623, 0
  %v2786 = vsel %vm2643, %v2624, 0
  %v2789 = vsel %vm2643, %v2625, 0
  %v2792 = vsel %vm2643, %v2626, 0
  %v2795 = vsel %vm2643, %v2627, 0
  %v2798 = vsel %vm2643, %v2628, 0
  %v2801 = vsel %vm2643, %v2629, 0
  %v2804 = vsel %vm2643, %v2630, 0
  %v2807 = vsel %vm2643, %v2631, 0
  %v2810 = vsel %vm2643, %v2632, 0
  %v2813 = vsel %vm2643, %v2633, 0
  %v2816 = vsel %vm2643, %v2634, 0
  %v2819 = vsel %vm2643, %v2635, 0
  %v2822 = vsel %vm2643, %v2636, 0
  %v2825 = vsel %vm2643, %v2637, 0
  %v2828 = vsel %vm2643, %v2638, 0
  %v2831 = vsel %vm2643, %v2639, 0
  %vm2833 = vcmask 1042432
  %v2835 = vsel %vm2833, %v2642, 0
  %2837 = vmatprep.subr.mxu0 0.0
  %2838 = vmatpush1.msra.mxu0 0.0
  %2839 = vmatprep.subr.mxu0 0.0
  %2840 = vmatpush1.msra.mxu0 0.0
  %2841 = vmatprep.subr.mxu0 0.0
  %2842 = vmatpush1.msra.mxu0 0.0
  %2843 = vmatprep.subr.mxu0 0.0
  %2844 = vmatpush1.msra.mxu0 0.0
  %2845 = vmatprep.subr.mxu0 0.0
  %2846 = vmatpush1.msra.mxu0 0.0
  %2847 = vmatprep.subr.mxu0 0.0
  %2848 = vmatpush1.msra.mxu0 0.0
  %2849 = vmatprep.subr.mxu0 0.0
  %2850 = vmatpush1.msra.mxu0 0.0
  %2851 = vmatprep.subr.mxu0 0.0
  %2852 = vmatpush1.msra.mxu0 0.0
  %2853 = vmatprep.subr.mxu0 0.0
  %2854 = vmatpush1.msra.mxu0 0.0
  %2855 = vmatprep.subr.mxu0 0.0
  %2856 = vmatpush1.msra.mxu0 0.0
  %2857 = vmatprep.subr.mxu0 0.0
  %2858 = vmatpush1.msra.mxu0 0.0
  %2859 = vmatprep.subr.mxu0 0.0
  %2860 = vmatpush1.msra.mxu0 0.0
  %2861 = vmatprep.subr.mxu0 0.0
  %2862 = vmatpush1.msra.mxu0 0.0
  %2863 = vmatprep.subr.mxu0 0.0
  %2864 = vmatpush1.msra.mxu0 %v2835
  %2865 = vmatprep.subr.mxu0 0.0
  %2866 = vmatpush1.msra.mxu0 %v2641
  %2867 = vmatprep.subr.mxu0 0.0
  %2868 = vmatpush1.msra.mxu0 %v2640
  %2869 = vmatprep.subr.mxu0 0.0
  %2870 = vmatpush2.msra.mxu0 0.0
  %2871 = vmatprep.subr.mxu0 0.0
  %2872 = vmatpush2.msra.mxu0 0.0
  %2873 = vmatprep.subr.mxu0 0.0
  %2874 = vmatpush2.msra.mxu0 0.0
  %2875 = vmatprep.subr.mxu0 0.0
  %2876 = vmatpush2.msra.mxu0 0.0
  %2877 = vmatprep.subr.mxu0 0.0
  %2878 = vmatpush2.msra.mxu0 0.0
  %2879 = vmatprep.subr.mxu0 0.0
  %2880 = vmatpush2.msra.mxu0 0.0
  %2881 = vmatprep.subr.mxu0 0.0
  %2882 = vmatpush2.msra.mxu0 0.0
  %2883 = vmatprep.subr.mxu0 0.0
  %2884 = vmatpush2.msra.mxu0 0.0
  %2885 = vmatprep.subr.mxu0 0.0
  %2886 = vmatpush2.msra.mxu0 0.0
  %2887 = vmatprep.subr.mxu0 0.0
  %2888 = vmatpush2.msra.mxu0 0.0
  %2889 = vmatprep.subr.mxu0 0.0
  %2890 = vmatpush2.msra.mxu0 0.0
  %2891 = vmatprep.subr.mxu0 0.0
  %2892 = vmatpush2.msra.mxu0 0.0
  %2893 = vmatprep.subr.mxu0 0.0
  %2894 = vmatpush2.msra.mxu0 0.0
  %2895 = vmatprep.subr.mxu0 0.0
  %2896 = vmatpush2.msra.mxu0 0.0
  %2897 = vmatprep.subr.mxu0 0.0
  %2898 = vmatpush2.msra.mxu0 0.0
  %2899 = vmatprep.subr.mxu0 0.0
  %2900 = vmatpush2.msra.mxu0 0.0
  %2901 = vmatprep.mubr.f32.mxu0 0.0
  %2902 = vmatmul.mubr.f32.gmra.mxu0 %v2645
  %v2903 = vpop.f32.mrf.mxu0
  %v2904 = vadd.f32 0.0, %v2903
  %v2905 = vpop.f32.mrf.mxu0
  %2906 = vmatprep.mubr.f32.mxu0 0.0
  %2907 = vmatmul.mubr.f32.gmra.mxu0 %v2648
  %v2908 = vpop.f32.mrf.mxu0
  %v2909 = vadd.f32 0.0, %v2908
  %v2910 = vpop.f32.mrf.mxu0
  %2911 = vmatprep.mubr.f32.mxu0 0.0
  %2912 = vmatmul.mubr.f32.gmra.mxu0 %v2651
  %v2913 = vpop.f32.mrf.mxu0
  %v2914 = vadd.f32 0.0, %v2913
  %v2915 = vpop.f32.mrf.mxu0
  %2916 = vmatprep.mubr.f32.mxu0 0.0
  %2917 = vmatmul.mubr.f32.gmra.mxu0 %v2654
  %v2918 = vpop.f32.mrf.mxu0
  %v2919 = vadd.f32 0.0, %v2918
  %v2920 = vpop.f32.mrf.mxu0
  %2921 = vmatprep.mubr.f32.mxu0 0.0
  %2922 = vmatmul.mubr.f32.gmra.mxu0 %v2657
  %v2923 = vpop.f32.mrf.mxu0
  %v2924 = vadd.f32 0.0, %v2923
  %v2925 = vpop.f32.mrf.mxu0
  %2926 = vmatprep.mubr.f32.mxu0 0.0
  %2927 = vmatmul.mubr.f32.gmra.mxu0 %v2660
  %v2928 = vpop.f32.mrf.mxu0
  %v2929 = vadd.f32 0.0, %v2928
  %v2930 = vpop.f32.mrf.mxu0
  %2931 = vmatprep.mubr.f32.mxu0 0.0
  %2932 = vmatmul.mubr.f32.gmra.mxu0 %v2663
  %v2933 = vpop.f32.mrf.mxu0
  %v2934 = vadd.f32 0.0, %v2933
  %v2935 = vpop.f32.mrf.mxu0
  %2936 = vmatprep.mubr.f32.mxu0 0.0
  %2937 = vmatmul.mubr.f32.gmra.mxu0 %v2666
  %v2938 = vpop.f32.mrf.mxu0
  %v2939 = vadd.f32 0.0, %v2938
  %v2940 = vpop.f32.mrf.mxu0
  %2941 = vmatprep.mubr.f32.mxu0 0.0
  %2942 = vmatmul.mubr.f32.gmra.mxu0 %v2669
  %v2943 = vpop.f32.mrf.mxu0
  %v2944 = vadd.f32 0.0, %v2943
  %v2945 = vpop.f32.mrf.mxu0
  %2946 = vmatprep.mubr.f32.mxu0 0.0
  %2947 = vmatmul.mubr.f32.gmra.mxu0 %v2672
  %v2948 = vpop.f32.mrf.mxu0
  %v2949 = vadd.f32 0.0, %v2948
  %v2950 = vpop.f32.mrf.mxu0
  %2951 = vmatprep.mubr.f32.mxu0 0.0
  %2952 = vmatmul.mubr.f32.gmra.mxu0 %v2675
  %v2953 = vpop.f32.mrf.mxu0
  %v2954 = vadd.f32 0.0, %v2953
  %v2955 = vpop.f32.mrf.mxu0
  %2956 = vmatprep.mubr.f32.mxu0 0.0
  %2957 = vmatmul.mubr.f32.gmra.mxu0 %v2678
  %v2958 = vpop.f32.mrf.mxu0
  %v2959 = vadd.f32 0.0, %v2958
  %v2960 = vpop.f32.mrf.mxu0
  %2961 = vmatprep.mubr.f32.mxu0 0.0
  %2962 = vmatmul.mubr.f32.gmra.mxu0 %v2681
  %v2963 = vpop.f32.mrf.mxu0
  %v2964 = vadd.f32 0.0, %v2963
  %v2965 = vpop.f32.mrf.mxu0
  %2966 = vmatprep.mubr.f32.mxu0 0.0
  %2967 = vmatmul.mubr.f32.gmra.mxu0 %v2684
  %v2968 = vpop.f32.mrf.mxu0
  %v2969 = vadd.f32 0.0, %v2968
  %v2970 = vpop.f32.mrf.mxu0
  %2971 = vmatprep.mubr.f32.mxu0 0.0
  %2972 = vmatmul.mubr.f32.gmra.mxu0 %v2687
  %v2973 = vpop.f32.mrf.mxu0
  %v2974 = vadd.f32 0.0, %v2973
  %v2975 = vpop.f32.mrf.mxu0
  %2976 = vmatprep.mubr.f32.mxu0 0.0
  %2977 = vmatmul.mubr.f32.gmra.mxu0 %v2690
  %v2978 = vpop.f32.mrf.mxu0
  %v2979 = vadd.f32 0.0, %v2978
  %v2980 = vpop.f32.mrf.mxu0
  %2981 = vmatprep.mubr.f32.mxu0 0.0
  %2982 = vmatmul.mubr.f32.gmra.mxu0 %v2693
  %v2983 = vpop.f32.mrf.mxu0
  %v2984 = vadd.f32 0.0, %v2983
  %v2985 = vpop.f32.mrf.mxu0
  %2986 = vmatprep.mubr.f32.mxu0 0.0
  %2987 = vmatmul.mubr.f32.gmra.mxu0 %v2696
  %v2988 = vpop.f32.mrf.mxu0
  %v2989 = vadd.f32 0.0, %v2988
  %v2990 = vpop.f32.mrf.mxu0
  %2991 = vmatprep.mubr.f32.mxu0 0.0
  %2992 = vmatmul.mubr.f32.gmra.mxu0 %v2699
  %v2993 = vpop.f32.mrf.mxu0
  %v2994 = vadd.f32 0.0, %v2993
  %v2995 = vpop.f32.mrf.mxu0
  %2996 = vmatprep.mubr.f32.mxu0 0.0
  %2997 = vmatmul.mubr.f32.gmra.mxu0 %v2702
  %v2998 = vpop.f32.mrf.mxu0
  %v2999 = vadd.f32 0.0, %v2998
  %v3000 = vpop.f32.mrf.mxu0
  %3001 = vmatprep.mubr.f32.mxu0 0.0
  %3002 = vmatmul.mubr.f32.gmra.mxu0 %v2705
  %v3003 = vpop.f32.mrf.mxu0
  %v3004 = vadd.f32 0.0, %v3003
  %v3005 = vpop.f32.mrf.mxu0
  %3006 = vmatprep.mubr.f32.mxu0 0.0
  %3007 = vmatmul.mubr.f32.gmra.mxu0 %v2708
  %v3008 = vpop.f32.mrf.mxu0
  %v3009 = vadd.f32 0.0, %v3008
  %v3010 = vpop.f32.mrf.mxu0
  %3011 = vmatprep.mubr.f32.mxu0 0.0
  %3012 = vmatmul.mubr.f32.gmra.mxu0 %v2711
  %v3013 = vpop.f32.mrf.mxu0
  %v3014 = vadd.f32 0.0, %v3013
  %v3015 = vpop.f32.mrf.mxu0
  %3016 = vmatprep.mubr.f32.mxu0 0.0
  %3017 = vmatmul.mubr.f32.gmra.mxu0 %v2714
  %v3018 = vpop.f32.mrf.mxu0
  %v3019 = vadd.f32 0.0, %v3018
  %v3020 = vpop.f32.mrf.mxu0
  %3021 = vmatprep.mubr.f32.mxu0 0.0
  %3022 = vmatmul.mubr.f32.gmra.mxu0 %v2717
  %v3023 = vpop.f32.mrf.mxu0
  %v3024 = vadd.f32 0.0, %v3023
  %v3025 = vpop.f32.mrf.mxu0
  %3026 = vmatprep.mubr.f32.mxu0 0.0
  %3027 = vmatmul.mubr.f32.gmra.mxu0 %v2720
  %v3028 = vpop.f32.mrf.mxu0
  %v3029 = vadd.f32 0.0, %v3028
  %v3030 = vpop.f32.mrf.mxu0
  %3031 = vmatprep.mubr.f32.mxu0 0.0
  %3032 = vmatmul.mubr.f32.gmra.mxu0 %v2723
  %v3033 = vpop.f32.mrf.mxu0
  %v3034 = vadd.f32 0.0, %v3033
  %v3035 = vpop.f32.mrf.mxu0
  %3036 = vmatprep.mubr.f32.mxu0 0.0
  %3037 = vmatmul.mubr.f32.gmra.mxu0 %v2726
  %v3038 = vpop.f32.mrf.mxu0
  %v3039 = vadd.f32 0.0, %v3038
  %v3040 = vpop.f32.mrf.mxu0
  %3041 = vmatprep.mubr.f32.mxu0 0.0
  %3042 = vmatmul.mubr.f32.gmra.mxu0 %v2729
  %v3043 = vpop.f32.mrf.mxu0
  %v3044 = vadd.f32 0.0, %v3043
  %v3045 = vpop.f32.mrf.mxu0
  %3046 = vmatprep.mubr.f32.mxu0 0.0
  %3047 = vmatmul.mubr.f32.gmra.mxu0 %v2732
  %v3048 = vpop.f32.mrf.mxu0
  %v3049 = vadd.f32 0.0, %v3048
  %v3050 = vpop.f32.mrf.mxu0
  %3051 = vmatprep.mubr.f32.mxu0 0.0
  %3052 = vmatmul.mubr.f32.gmra.mxu0 %v2735
  %v3053 = vpop.f32.mrf.mxu0
  %v3054 = vadd.f32 0.0, %v3053
  %v3055 = vpop.f32.mrf.mxu0
  %3056 = vmatprep.mubr.f32.mxu0 0.0
  %3057 = vmatmul.mubr.f32.gmra.mxu0 %v2738
  %v3058 = vpop.f32.mrf.mxu0
  %v3059 = vadd.f32 0.0, %v3058
  %v3060 = vpop.f32.mrf.mxu0
  %3061 = vmatprep.mubr.f32.mxu0 0.0
  %3062 = vmatmul.mubr.f32.gmra.mxu0 %v2741
  %v3063 = vpop.f32.mrf.mxu0
  %v3064 = vadd.f32 0.0, %v3063
  %v3065 = vpop.f32.mrf.mxu0
  %3066 = vmatprep.mubr.f32.mxu0 0.0
  %3067 = vmatmul.mubr.f32.gmra.mxu0 %v2744
  %v3068 = vpop.f32.mrf.mxu0
  %v3069 = vadd.f32 0.0, %v3068
  %v3070 = vpop.f32.mrf.mxu0
  %3071 = vmatprep.mubr.f32.mxu0 0.0
  %3072 = vmatmul.mubr.f32.gmra.mxu0 %v2747
  %v3073 = vpop.f32.mrf.mxu0
  %v3074 = vadd.f32 0.0, %v3073
  %v3075 = vpop.f32.mrf.mxu0
  %3076 = vmatprep.mubr.f32.mxu0 0.0
  %3077 = vmatmul.mubr.f32.gmra.mxu0 %v2750
  %v3078 = vpop.f32.mrf.mxu0
  %v3079 = vadd.f32 0.0, %v3078
  %v3080 = vpop.f32.mrf.mxu0
  %3081 = vmatprep.mubr.f32.mxu0 0.0
  %3082 = vmatmul.mubr.f32.gmra.mxu0 %v2753
  %v3083 = vpop.f32.mrf.mxu0
  %v3084 = vadd.f32 0.0, %v3083
  %v3085 = vpop.f32.mrf.mxu0
  %3086 = vmatprep.mubr.f32.mxu0 0.0
  %3087 = vmatmul.mubr.f32.gmra.mxu0 %v2756
  %v3088 = vpop.f32.mrf.mxu0
  %v3089 = vadd.f32 0.0, %v3088
  %v3090 = vpop.f32.mrf.mxu0
  %3091 = vmatprep.mubr.f32.mxu0 0.0
  %3092 = vmatmul.mubr.f32.gmra.mxu0 %v2759
  %v3093 = vpop.f32.mrf.mxu0
  %v3094 = vadd.f32 0.0, %v3093
  %v3095 = vpop.f32.mrf.mxu0
  %3096 = vmatprep.mubr.f32.mxu0 0.0
  %3097 = vmatmul.mubr.f32.gmra.mxu0 %v2762
  %v3098 = vpop.f32.mrf.mxu0
  %v3099 = vadd.f32 0.0, %v3098
  %v3100 = vpop.f32.mrf.mxu0
  %3101 = vmatprep.mubr.f32.mxu0 0.0
  %3102 = vmatmul.mubr.f32.gmra.mxu0 %v2765
  %v3103 = vpop.f32.mrf.mxu0
  %v3104 = vadd.f32 0.0, %v3103
  %v3105 = vpop.f32.mrf.mxu0
  %3106 = vmatprep.mubr.f32.mxu0 0.0
  %3107 = vmatmul.mubr.f32.gmra.mxu0 %v2768
  %v3108 = vpop.f32.mrf.mxu0
  %v3109 = vadd.f32 0.0, %v3108
  %v3110 = vpop.f32.mrf.mxu0
  %3111 = vmatprep.mubr.f32.mxu0 0.0
  %3112 = vmatmul.mubr.f32.gmra.mxu0 %v2771
  %v3113 = vpop.f32.mrf.mxu0
  %v3114 = vadd.f32 0.0, %v3113
  %v3115 = vpop.f32.mrf.mxu0
  %3116 = vmatprep.mubr.f32.mxu0 0.0
  %3117 = vmatmul.mubr.f32.gmra.mxu0 %v2774
  %v3118 = vpop.f32.mrf.mxu0
  %v3119 = vadd.f32 0.0, %v3118
  %v3120 = vpop.f32.mrf.mxu0
  %3121 = vmatprep.mubr.f32.mxu0 0.0
  %3122 = vmatmul.mubr.f32.gmra.mxu0 %v2777
  %v3123 = vpop.f32.mrf.mxu0
  %v3124 = vadd.f32 0.0, %v3123
  %v3125 = vpop.f32.mrf.mxu0
  %3126 = vmatprep.mubr.f32.mxu0 0.0
  %3127 = vmatmul.mubr.f32.gmra.mxu0 %v2780
  %v3128 = vpop.f32.mrf.mxu0
  %v3129 = vadd.f32 0.0, %v3128
  %v3130 = vpop.f32.mrf.mxu0
  %3131 = vmatprep.mubr.f32.mxu0 0.0
  %3132 = vmatmul.mubr.f32.gmra.mxu0 %v2783
  %v3133 = vpop.f32.mrf.mxu0
  %v3134 = vadd.f32 0.0, %v3133
  %v3135 = vpop.f32.mrf.mxu0
  %3136 = vmatprep.mubr.f32.mxu0 0.0
  %3137 = vmatmul.mubr.f32.gmra.mxu0 %v2786
  %v3138 = vpop.f32.mrf.mxu0
  %v3139 = vadd.f32 0.0, %v3138
  %v3140 = vpop.f32.mrf.mxu0
  %3141 = vmatprep.mubr.f32.mxu0 0.0
  %3142 = vmatmul.mubr.f32.gmra.mxu0 %v2789
  %v3143 = vpop.f32.mrf.mxu0
  %v3144 = vadd.f32 0.0, %v3143
  %v3145 = vpop.f32.mrf.mxu0
  %3146 = vmatprep.mubr.f32.mxu0 0.0
  %3147 = vmatmul.mubr.f32.gmra.mxu0 %v2792
  %v3148 = vpop.f32.mrf.mxu0
  %v3149 = vadd.f32 0.0, %v3148
  %v3150 = vpop.f32.mrf.mxu0
  %3151 = vmatprep.mubr.f32.mxu0 0.0
  %3152 = vmatmul.mubr.f32.gmra.mxu0 %v2795
  %v3153 = vpop.f32.mrf.mxu0
  %v3154 = vadd.f32 0.0, %v3153
  %v3155 = vpop.f32.mrf.mxu0
  %3156 = vmatprep.mubr.f32.mxu0 0.0
  %3157 = vmatmul.mubr.f32.gmra.mxu0 %v2798
  %v3158 = vpop.f32.mrf.mxu0
  %v3159 = vadd.f32 0.0, %v3158
  %v3160 = vpop.f32.mrf.mxu0
  %3161 = vmatprep.mubr.f32.mxu0 0.0
  %3162 = vmatmul.mubr.f32.gmra.mxu0 %v2801
  %v3163 = vpop.f32.mrf.mxu0
  %v3164 = vadd.f32 0.0, %v3163
  %v3165 = vpop.f32.mrf.mxu0
  %3166 = vmatprep.mubr.f32.mxu0 0.0
  %3167 = vmatmul.mubr.f32.gmra.mxu0 %v2804
  %v3168 = vpop.f32.mrf.mxu0
  %v3169 = vadd.f32 0.0, %v3168
  %v3170 = vpop.f32.mrf.mxu0
  %3171 = vmatprep.mubr.f32.mxu0 0.0
  %3172 = vmatmul.mubr.f32.gmra.mxu0 %v2807
  %v3173 = vpop.f32.mrf.mxu0
  %v3174 = vadd.f32 0.0, %v3173
  %v3175 = vpop.f32.mrf.mxu0
  %3176 = vmatprep.mubr.f32.mxu0 0.0
  %3177 = vmatmul.mubr.f32.gmra.mxu0 %v2810
  %v3178 = vpop.f32.mrf.mxu0
  %v3179 = vadd.f32 0.0, %v3178
  %v3180 = vpop.f32.mrf.mxu0
  %3181 = vmatprep.mubr.f32.mxu0 0.0
  %3182 = vmatmul.mubr.f32.gmra.mxu0 %v2813
  %v3183 = vpop.f32.mrf.mxu0
  %v3184 = vadd.f32 0.0, %v3183
  %v3185 = vpop.f32.mrf.mxu0
  %3186 = vmatprep.mubr.f32.mxu0 0.0
  %3187 = vmatmul.mubr.f32.gmra.mxu0 %v2816
  %v3188 = vpop.f32.mrf.mxu0
  %v3189 = vadd.f32 0.0, %v3188
  %v3190 = vpop.f32.mrf.mxu0
  %3191 = vmatprep.mubr.f32.mxu0 0.0
  %3192 = vmatmul.mubr.f32.gmra.mxu0 %v2819
  %v3193 = vpop.f32.mrf.mxu0
  %v3194 = vadd.f32 0.0, %v3193
  %v3195 = vpop.f32.mrf.mxu0
  %3196 = vmatprep.mubr.f32.mxu0 0.0
  %3197 = vmatmul.mubr.f32.gmra.mxu0 %v2822
  %v3198 = vpop.f32.mrf.mxu0
  %v3199 = vadd.f32 0.0, %v3198
  %v3200 = vpop.f32.mrf.mxu0
  %3201 = vmatprep.mubr.f32.mxu0 0.0
  %3202 = vmatmul.mubr.f32.gmra.mxu0 %v2825
  %v3203 = vpop.f32.mrf.mxu0
  %v3204 = vadd.f32 0.0, %v3203
  %v3205 = vpop.f32.mrf.mxu0
  %3206 = vmatprep.mubr.f32.mxu0 0.0
  %3207 = vmatmul.mubr.f32.gmra.mxu0 %v2828
  %v3208 = vpop.f32.mrf.mxu0
  %v3209 = vadd.f32 0.0, %v3208
  %v3210 = vpop.f32.mrf.mxu0
  %3211 = vmatprep.mubr.f32.mxu0 0.0
  %3212 = vmatmul.mubr.f32.gmra.mxu0 %v2831
  %v3213 = vpop.f32.mrf.mxu0
  %v3214 = vadd.f32 0.0, %v3213
  %v3215 = vpop.f32.mrf.mxu0
  %3216 = vdwg.mxu0
  %v3217 = vld [vmem:[%s0] sm:$0xff]
  %v3218 = vld [vmem:[%s0 + $0x8] sm:$0xff]
  %v3219 = vld [vmem:[%s0 + $0x10] sm:$0xff]
  %v3220 = vld [vmem:[%s0 + $0x18] sm:$0xff]
  %v3221 = vld [vmem:[%s0 + $0x20] sm:$0xff]
  %v3222 = vld [vmem:[%s0 + $0x28] sm:$0xff]
  %v3223 = vld [vmem:[%s0 + $0x30] sm:$0xff]
  %v3224 = vld [vmem:[%s0 + $0x38] sm:$0xff]
  %v3225 = vld [vmem:[%s0 + $0x40] sm:$0xff]
  %v3226 = vld [vmem:[%s0 + $0x48] sm:$0xff]
  %v3227 = vld [vmem:[%s0 + $0x50] sm:$0xff]
  %v3228 = vld [vmem:[%s0 + $0x58] sm:$0xff]
  %v3229 = vld [vmem:[%s0 + $0x60] sm:$0xff]
  %v3230 = vld [vmem:[%s0 + $0x68] sm:$0xff]
  %v3231 = vld [vmem:[%s0 + $0x70] sm:$0xff]
  %v3232 = vld [vmem:[%s0 + $0x78] sm:$0xff]
  %v3233 = vld [vmem:[%s0 + $0x80] sm:$0xff]
  %v3234 = vld [vmem:[%s0 + $0x88] sm:$0xff]
  %v3235 = vld [vmem:[%s0 + $0x90] sm:$0xff]
  %v3236 = vld [vmem:[%s0 + $0x98] sm:$0xff]
  %v3237 = vld [vmem:[%s0 + $0xa0] sm:$0xff]
  %v3238 = vld [vmem:[%s0 + $0xa8] sm:$0xff]
  %v3239 = vld [vmem:[%s0 + $0xb0] sm:$0xff]
  %v3240 = vld [vmem:[%s0 + $0xb8] sm:$0xff]
  %v3241 = vld [vmem:[%s0 + $0xc0] sm:$0xff]
  %v3242 = vld [vmem:[%s0 + $0xc8] sm:$0xff]
  %v3243 = vld [vmem:[%s0 + $0xd0] sm:$0xff]
  %v3244 = vld [vmem:[%s0 + $0xd8] sm:$0xff]
  %v3245 = vld [vmem:[%s0 + $0xe0] sm:$0xff]
  %v3246 = vld [vmem:[%s0 + $0xe8] sm:$0xff]
  %v3247 = vld [vmem:[%s0 + $0xf0] sm:$0xff]
  %v3248 = vld [vmem:[%s0 + $0xf8] sm:$0xff]
  %v3249 = vld [vmem:[%s0 + $0x100] sm:$0xff]
  %v3250 = vld [vmem:[%s0 + $0x108] sm:$0xff]
  %v3251 = vld [vmem:[%s0 + $0x110] sm:$0xff]
  %v3252 = vld [vmem:[%s0 + $0x118] sm:$0xff]
  %v3253 = vld [vmem:[%s0 + $0x120] sm:$0xff]
  %v3254 = vld [vmem:[%s0 + $0x128] sm:$0xff]
  %v3255 = vld [vmem:[%s0 + $0x130] sm:$0xff]
  %v3256 = vld [vmem:[%s0 + $0x138] sm:$0xff]
  %v3257 = vld [vmem:[%s0 + $0x140] sm:$0xff]
  %v3258 = vld [vmem:[%s0 + $0x148] sm:$0xff]
  %v3259 = vld [vmem:[%s0 + $0x150] sm:$0xff]
  %v3260 = vld [vmem:[%s0 + $0x158] sm:$0xff]
  %v3261 = vld [vmem:[%s0 + $0x160] sm:$0xff]
  %v3262 = vld [vmem:[%s0 + $0x168] sm:$0xff]
  %v3263 = vld [vmem:[%s0 + $0x170] sm:$0xff]
  %v3264 = vld [vmem:[%s0 + $0x178] sm:$0xff]
  %v3265 = vld [vmem:[%s0 + $0x180] sm:$0xff]
  %v3266 = vld [vmem:[%s0 + $0x188] sm:$0xff]
  %v3267 = vld [vmem:[%s0 + $0x190] sm:$0xff]
  %v3268 = vld [vmem:[%s0 + $0x198] sm:$0xff]
  %v3269 = vld [vmem:[%s0 + $0x1a0] sm:$0xff]
  %v3270 = vld [vmem:[%s0 + $0x1a8] sm:$0xff]
  %v3271 = vld [vmem:[%s0 + $0x1b0] sm:$0xff]
  %v3272 = vld [vmem:[%s0 + $0x1b8] sm:$0xff]
  %v3273 = vld [vmem:[%s0 + $0x1c0] sm:$0xff]
  %v3274 = vld [vmem:[%s0 + $0x1c8] sm:$0xff]
  %v3275 = vld [vmem:[%s0 + $0x1d0] sm:$0xff]
  %v3276 = vld [vmem:[%s0 + $0x1d8] sm:$0xff]
  %v3277 = vld [vmem:[%s0 + $0x1e0] sm:$0xff]
  %v3278 = vld [vmem:[%s0 + $0x1e8] sm:$0xff]
  %v3279 = vld [vmem:[%s0 + $0x1f0] sm:$0xff]
  %3343 = vrot.lane.b32.xlu0 %v3217, 4
  %v3344 = vpop.permute.xlu0 %3343
  %3345 = vrot.lane.b32.xlu0 %v3218, 4
  %v3346 = vpop.permute.xlu0 %3345
  %3347 = vrot.lane.b32.xlu0 %v3219, 4
  %v3348 = vpop.permute.xlu0 %3347
  %3349 = vrot.lane.b32.xlu0 %v3220, 4
  %v3350 = vpop.permute.xlu0 %3349
  %3351 = vrot.lane.b32.xlu0 %v3221, 4
  %v3352 = vpop.permute.xlu0 %3351
  %3353 = vrot.lane.b32.xlu0 %v3222, 4
  %v3354 = vpop.permute.xlu0 %3353
  %3355 = vrot.lane.b32.xlu0 %v3223, 4
  %v3356 = vpop.permute.xlu0 %3355
  %3357 = vrot.lane.b32.xlu0 %v3224, 4
  %v3358 = vpop.permute.xlu0 %3357
  %3359 = vrot.lane.b32.xlu0 %v3225, 4
  %v3360 = vpop.permute.xlu0 %3359
  %3361 = vrot.lane.b32.xlu0 %v3226, 4
  %v3362 = vpop.permute.xlu0 %3361
  %3363 = vrot.lane.b32.xlu0 %v3227, 4
  %v3364 = vpop.permute.xlu0 %3363
  %3365 = vrot.lane.b32.xlu0 %v3228, 4
  %v3366 = vpop.permute.xlu0 %3365
  %3367 = vrot.lane.b32.xlu0 %v3229, 4
  %v3368 = vpop.permute.xlu0 %3367
  %3369 = vrot.lane.b32.xlu0 %v3230, 4
  %v3370 = vpop.permute.xlu0 %3369
  %3371 = vrot.lane.b32.xlu0 %v3231, 4
  %v3372 = vpop.permute.xlu0 %3371
  %3373 = vrot.lane.b32.xlu0 %v3232, 4
  %v3374 = vpop.permute.xlu0 %3373
  %3375 = vrot.lane.b32.xlu0 %v3233, 4
  %v3376 = vpop.permute.xlu0 %3375
  %3377 = vrot.lane.b32.xlu0 %v3234, 4
  %v3378 = vpop.permute.xlu0 %3377
  %3379 = vrot.lane.b32.xlu0 %v3235, 4
  %v3380 = vpop.permute.xlu0 %3379
  %3381 = vrot.lane.b32.xlu0 %v3236, 4
  %v3382 = vpop.permute.xlu0 %3381
  %3383 = vrot.lane.b32.xlu0 %v3237, 4
  %v3384 = vpop.permute.xlu0 %3383
  %3385 = vrot.lane.b32.xlu0 %v3238, 4
  %v3386 = vpop.permute.xlu0 %3385
  %3387 = vrot.lane.b32.xlu0 %v3239, 4
  %v3388 = vpop.permute.xlu0 %3387
  %3389 = vrot.lane.b32.xlu0 %v3240, 4
  %v3390 = vpop.permute.xlu0 %3389
  %3391 = vrot.lane.b32.xlu0 %v3241, 4
  %v3392 = vpop.permute.xlu0 %3391
  %3393 = vrot.lane.b32.xlu0 %v3242, 4
  %v3394 = vpop.permute.xlu0 %3393
  %3395 = vrot.lane.b32.xlu0 %v3243, 4
  %v3396 = vpop.permute.xlu0 %3395
  %3397 = vrot.lane.b32.xlu0 %v3244, 4
  %v3398 = vpop.permute.xlu0 %3397
  %3399 = vrot.lane.b32.xlu0 %v3245, 4
  %v3400 = vpop.permute.xlu0 %3399
  %3401 = vrot.lane.b32.xlu0 %v3246, 4
  %v3402 = vpop.permute.xlu0 %3401
  %3403 = vrot.lane.b32.xlu0 %v3247, 4
  %v3404 = vpop.permute.xlu0 %3403
  %3405 = vrot.lane.b32.xlu0 %v3248, 4
  %v3406 = vpop.permute.xlu0 %3405
  %3407 = vrot.lane.b32.xlu0 %v3249, 4
  %v3408 = vpop.permute.xlu0 %3407
  %3409 = vrot.lane.b32.xlu0 %v3250, 4
  %v3410 = vpop.permute.xlu0 %3409
  %3411 = vrot.lane.b32.xlu0 %v3251, 4
  %v3412 = vpop.permute.xlu0 %3411
  %3413 = vrot.lane.b32.xlu0 %v3252, 4
  %v3414 = vpop.permute.xlu0 %3413
  %3415 = vrot.lane.b32.xlu0 %v3253, 4
  %v3416 = vpop.permute.xlu0 %3415
  %3417 = vrot.lane.b32.xlu0 %v3254, 4
  %v3418 = vpop.permute.xlu0 %3417
  %3419 = vrot.lane.b32.xlu0 %v3255, 4
  %v3420 = vpop.permute.xlu0 %3419
  %3421 = vrot.lane.b32.xlu0 %v3256, 4
  %v3422 = vpop.permute.xlu0 %3421
  %3423 = vrot.lane.b32.xlu0 %v3257, 4
  %v3424 = vpop.permute.xlu0 %3423
  %3425 = vrot.lane.b32.xlu0 %v3258, 4
  %v3426 = vpop.permute.xlu0 %3425
  %3427 = vrot.lane.b32.xlu0 %v3259, 4
  %v3428 = vpop.permute.xlu0 %3427
  %3429 = vrot.lane.b32.xlu0 %v3260, 4
  %v3430 = vpop.permute.xlu0 %3429
  %3431 = vrot.lane.b32.xlu0 %v3261, 4
  %v3432 = vpop.permute.xlu0 %3431
  %3433 = vrot.lane.b32.xlu0 %v3262, 4
  %v3434 = vpop.permute.xlu0 %3433
  %3435 = vrot.lane.b32.xlu0 %v3263, 4
  %v3436 = vpop.permute.xlu0 %3435
  %3437 = vrot.lane.b32.xlu0 %v3264, 4
  %v3438 = vpop.permute.xlu0 %3437
  %3439 = vrot.lane.b32.xlu0 %v3265, 4
  %v3440 = vpop.permute.xlu0 %3439
  %3441 = vrot.lane.b32.xlu0 %v3266, 4
  %v3442 = vpop.permute.xlu0 %3441
  %3443 = vrot.lane.b32.xlu0 %v3267, 4
  %v3444 = vpop.permute.xlu0 %3443
  %3445 = vrot.lane.b32.xlu0 %v3268, 4
  %v3446 = vpop.permute.xlu0 %3445
  %3447 = vrot.lane.b32.xlu0 %v3269, 4
  %v3448 = vpop.permute.xlu0 %3447
  %3449 = vrot.lane.b32.xlu0 %v3270, 4
  %v3450 = vpop.permute.xlu0 %3449
  %3451 = vrot.lane.b32.xlu0 %v3271, 4
  %v3452 = vpop.permute.xlu0 %3451
  %3453 = vrot.lane.b32.xlu0 %v3272, 4
  %v3454 = vpop.permute.xlu0 %3453
  %3455 = vrot.lane.b32.xlu0 %v3273, 4
  %v3456 = vpop.permute.xlu0 %3455
  %3457 = vrot.lane.b32.xlu0 %v3274, 4
  %v3458 = vpop.permute.xlu0 %3457
  %3459 = vrot.lane.b32.xlu0 %v3275, 4
  %v3460 = vpop.permute.xlu0 %3459
  %3461 = vrot.lane.b32.xlu0 %v3276, 4
  %v3462 = vpop.permute.xlu0 %3461
  %3463 = vrot.lane.b32.xlu0 %v3277, 4
  %v3464 = vpop.permute.xlu0 %3463
  %3465 = vrot.lane.b32.xlu0 %v3278, 4
  %v3466 = vpop.permute.xlu0 %3465
  %3467 = vrot.lane.b32.xlu0 %v3279, 4
  %v3468 = vpop.permute.xlu0 %3467
  %3532 = vrot.lane.b32.xlu0 %v3217, 8
  %v3533 = vpop.permute.xlu0 %3532
  %3534 = vrot.lane.b32.xlu0 %v3218, 8
  %v3535 = vpop.permute.xlu0 %3534
  %3536 = vrot.lane.b32.xlu0 %v3219, 8
  %v3537 = vpop.permute.xlu0 %3536
  %3538 = vrot.lane.b32.xlu0 %v3220, 8
  %v3539 = vpop.permute.xlu0 %3538
  %3540 = vrot.lane.b32.xlu0 %v3221, 8
  %v3541 = vpop.permute.xlu0 %3540
  %3542 = vrot.lane.b32.xlu0 %v3222, 8
  %v3543 = vpop.permute.xlu0 %3542
  %3544 = vrot.lane.b32.xlu0 %v3223, 8
  %v3545 = vpop.permute.xlu0 %3544
  %3546 = vrot.lane.b32.xlu0 %v3224, 8
  %v3547 = vpop.permute.xlu0 %3546
  %3548 = vrot.lane.b32.xlu0 %v3225, 8
  %v3549 = vpop.permute.xlu0 %3548
  %3550 = vrot.lane.b32.xlu0 %v3226, 8
  %v3551 = vpop.permute.xlu0 %3550
  %3552 = vrot.lane.b32.xlu0 %v3227, 8
  %v3553 = vpop.permute.xlu0 %3552
  %3554 = vrot.lane.b32.xlu0 %v3228, 8
  %v3555 = vpop.permute.xlu0 %3554
  %3556 = vrot.lane.b32.xlu0 %v3229, 8
  %v3557 = vpop.permute.xlu0 %3556
  %3558 = vrot.lane.b32.xlu0 %v3230, 8
  %v3559 = vpop.permute.xlu0 %3558
  %3560 = vrot.lane.b32.xlu0 %v3231, 8
  %v3561 = vpop.permute.xlu0 %3560
  %3562 = vrot.lane.b32.xlu0 %v3232, 8
  %v3563 = vpop.permute.xlu0 %3562
  %3564 = vrot.lane.b32.xlu0 %v3233, 8
  %v3565 = vpop.permute.xlu0 %3564
  %3566 = vrot.lane.b32.xlu0 %v3234, 8
  %v3567 = vpop.permute.xlu0 %3566
  %3568 = vrot.lane.b32.xlu0 %v3235, 8
  %v3569 = vpop.permute.xlu0 %3568
  %3570 = vrot.lane.b32.xlu0 %v3236, 8
  %v3571 = vpop.permute.xlu0 %3570
  %3572 = vrot.lane.b32.xlu0 %v3237, 8
  %v3573 = vpop.permute.xlu0 %3572
  %3574 = vrot.lane.b32.xlu0 %v3238, 8
  %v3575 = vpop.permute.xlu0 %3574
  %3576 = vrot.lane.b32.xlu0 %v3239, 8
  %v3577 = vpop.permute.xlu0 %3576
  %3578 = vrot.lane.b32.xlu0 %v3240, 8
  %v3579 = vpop.permute.xlu0 %3578
  %3580 = vrot.lane.b32.xlu0 %v3241, 8
  %v3581 = vpop.permute.xlu0 %3580
  %3582 = vrot.lane.b32.xlu0 %v3242, 8
  %v3583 = vpop.permute.xlu0 %3582
  %3584 = vrot.lane.b32.xlu0 %v3243, 8
  %v3585 = vpop.permute.xlu0 %3584
  %3586 = vrot.lane.b32.xlu0 %v3244, 8
  %v3587 = vpop.permute.xlu0 %3586
  %3588 = vrot.lane.b32.xlu0 %v3245, 8
  %v3589 = vpop.permute.xlu0 %3588
  %3590 = vrot.lane.b32.xlu0 %v3246, 8
  %v3591 = vpop.permute.xlu0 %3590
  %3592 = vrot.lane.b32.xlu0 %v3247, 8
  %v3593 = vpop.permute.xlu0 %3592
  %3594 = vrot.lane.b32.xlu0 %v3248, 8
  %v3595 = vpop.permute.xlu0 %3594
  %3596 = vrot.lane.b32.xlu0 %v3249, 8
  %v3597 = vpop.permute.xlu0 %3596
  %3598 = vrot.lane.b32.xlu0 %v3250, 8
  %v3599 = vpop.permute.xlu0 %3598
  %3600 = vrot.lane.b32.xlu0 %v3251, 8
  %v3601 = vpop.permute.xlu0 %3600
  %3602 = vrot.lane.b32.xlu0 %v3252, 8
  %v3603 = vpop.permute.xlu0 %3602
  %3604 = vrot.lane.b32.xlu0 %v3253, 8
  %v3605 = vpop.permute.xlu0 %3604
  %3606 = vrot.lane.b32.xlu0 %v3254, 8
  %v3607 = vpop.permute.xlu0 %3606
  %3608 = vrot.lane.b32.xlu0 %v3255, 8
  %v3609 = vpop.permute.xlu0 %3608
  %3610 = vrot.lane.b32.xlu0 %v3256, 8
  %v3611 = vpop.permute.xlu0 %3610
  %3612 = vrot.lane.b32.xlu0 %v3257, 8
  %v3613 = vpop.permute.xlu0 %3612
  %3614 = vrot.lane.b32.xlu0 %v3258, 8
  %v3615 = vpop.permute.xlu0 %3614
  %3616 = vrot.lane.b32.xlu0 %v3259, 8
  %v3617 = vpop.permute.xlu0 %3616
  %3618 = vrot.lane.b32.xlu0 %v3260, 8
  %v3619 = vpop.permute.xlu0 %3618
  %3620 = vrot.lane.b32.xlu0 %v3261, 8
  %v3621 = vpop.permute.xlu0 %3620
  %3622 = vrot.lane.b32.xlu0 %v3262, 8
  %v3623 = vpop.permute.xlu0 %3622
  %3624 = vrot.lane.b32.xlu0 %v3263, 8
  %v3625 = vpop.permute.xlu0 %3624
  %3626 = vrot.lane.b32.xlu0 %v3264, 8
  %v3627 = vpop.permute.xlu0 %3626
  %3628 = vrot.lane.b32.xlu0 %v3265, 8
  %v3629 = vpop.permute.xlu0 %3628
  %3630 = vrot.lane.b32.xlu0 %v3266, 8
  %v3631 = vpop.permute.xlu0 %3630
  %3632 = vrot.lane.b32.xlu0 %v3267, 8
  %v3633 = vpop.permute.xlu0 %3632
  %3634 = vrot.lane.b32.xlu0 %v3268, 8
  %v3635 = vpop.permute.xlu0 %3634
  %3636 = vrot.lane.b32.xlu0 %v3269, 8
  %v3637 = vpop.permute.xlu0 %3636
  %3638 = vrot.lane.b32.xlu0 %v3270, 8
  %v3639 = vpop.permute.xlu0 %3638
  %3640 = vrot.lane.b32.xlu0 %v3271, 8
  %v3641 = vpop.permute.xlu0 %3640
  %3642 = vrot.lane.b32.xlu0 %v3272, 8
  %v3643 = vpop.permute.xlu0 %3642
  %3644 = vrot.lane.b32.xlu0 %v3273, 8
  %v3645 = vpop.permute.xlu0 %3644
  %3646 = vrot.lane.b32.xlu0 %v3274, 8
  %v3647 = vpop.permute.xlu0 %3646
  %3648 = vrot.lane.b32.xlu0 %v3275, 8
  %v3649 = vpop.permute.xlu0 %3648
  %3650 = vrot.lane.b32.xlu0 %v3276, 8
  %v3651 = vpop.permute.xlu0 %3650
  %3652 = vrot.lane.b32.xlu0 %v3277, 8
  %v3653 = vpop.permute.xlu0 %3652
  %3654 = vrot.lane.b32.xlu0 %v3278, 8
  %v3655 = vpop.permute.xlu0 %3654
  %3656 = vrot.lane.b32.xlu0 %v3279, 8
  %v3657 = vpop.permute.xlu0 %3656
  %3721 = vrot.lane.b32.xlu0 %v3217, 12
  %v3722 = vpop.permute.xlu0 %3721
  %3723 = vrot.lane.b32.xlu0 %v3218, 12
  %v3724 = vpop.permute.xlu0 %3723
  %3725 = vrot.lane.b32.xlu0 %v3219, 12
  %v3726 = vpop.permute.xlu0 %3725
  %3727 = vrot.lane.b32.xlu0 %v3220, 12
  %v3728 = vpop.permute.xlu0 %3727
  %3729 = vrot.lane.b32.xlu0 %v3221, 12
  %v3730 = vpop.permute.xlu0 %3729
  %3731 = vrot.lane.b32.xlu0 %v3222, 12
  %v3732 = vpop.permute.xlu0 %3731
  %3733 = vrot.lane.b32.xlu0 %v3223, 12
  %v3734 = vpop.permute.xlu0 %3733
  %3735 = vrot.lane.b32.xlu0 %v3224, 12
  %v3736 = vpop.permute.xlu0 %3735
  %3737 = vrot.lane.b32.xlu0 %v3225, 12
  %v3738 = vpop.permute.xlu0 %3737
  %3739 = vrot.lane.b32.xlu0 %v3226, 12
  %v3740 = vpop.permute.xlu0 %3739
  %3741 = vrot.lane.b32.xlu0 %v3227, 12
  %v3742 = vpop.permute.xlu0 %3741
  %3743 = vrot.lane.b32.xlu0 %v3228, 12
  %v3744 = vpop.permute.xlu0 %3743
  %3745 = vrot.lane.b32.xlu0 %v3229, 12
  %v3746 = vpop.permute.xlu0 %3745
  %3747 = vrot.lane.b32.xlu0 %v3230, 12
  %v3748 = vpop.permute.xlu0 %3747
  %3749 = vrot.lane.b32.xlu0 %v3231, 12
  %v3750 = vpop.permute.xlu0 %3749
  %3751 = vrot.lane.b32.xlu0 %v3232, 12
  %v3752 = vpop.permute.xlu0 %3751
  %3753 = vrot.lane.b32.xlu0 %v3233, 12
  %v3754 = vpop.permute.xlu0 %3753
  %3755 = vrot.lane.b32.xlu0 %v3234, 12
  %v3756 = vpop.permute.xlu0 %3755
  %3757 = vrot.lane.b32.xlu0 %v3235, 12
  %v3758 = vpop.permute.xlu0 %3757
  %3759 = vrot.lane.b32.xlu0 %v3236, 12
  %v3760 = vpop.permute.xlu0 %3759
  %3761 = vrot.lane.b32.xlu0 %v3237, 12
  %v3762 = vpop.permute.xlu0 %3761
  %3763 = vrot.lane.b32.xlu0 %v3238, 12
  %v3764 = vpop.permute.xlu0 %3763
  %3765 = vrot.lane.b32.xlu0 %v3239, 12
  %v3766 = vpop.permute.xlu0 %3765
  %3767 = vrot.lane.b32.xlu0 %v3240, 12
  %v3768 = vpop.permute.xlu0 %3767
  %3769 = vrot.lane.b32.xlu0 %v3241, 12
  %v3770 = vpop.permute.xlu0 %3769
  %3771 = vrot.lane.b32.xlu0 %v3242, 12
  %v3772 = vpop.permute.xlu0 %3771
  %3773 = vrot.lane.b32.xlu0 %v3243, 12
  %v3774 = vpop.permute.xlu0 %3773
  %3775 = vrot.lane.b32.xlu0 %v3244, 12
  %v3776 = vpop.permute.xlu0 %3775
  %3777 = vrot.lane.b32.xlu0 %v3245, 12
  %v3778 = vpop.permute.xlu0 %3777
  %3779 = vrot.lane.b32.xlu0 %v3246, 12
  %v3780 = vpop.permute.xlu0 %3779
  %3781 = vrot.lane.b32.xlu0 %v3247, 12
  %v3782 = vpop.permute.xlu0 %3781
  %3783 = vrot.lane.b32.xlu0 %v3248, 12
  %v3784 = vpop.permute.xlu0 %3783
  %3785 = vrot.lane.b32.xlu0 %v3249, 12
  %v3786 = vpop.permute.xlu0 %3785
  %3787 = vrot.lane.b32.xlu0 %v3250, 12
  %v3788 = vpop.permute.xlu0 %3787
  %3789 = vrot.lane.b32.xlu0 %v3251, 12
  %v3790 = vpop.permute.xlu0 %3789
  %3791 = vrot.lane.b32.xlu0 %v3252, 12
  %v3792 = vpop.permute.xlu0 %3791
  %3793 = vrot.lane.b32.xlu0 %v3253, 12
  %v3794 = vpop.permute.xlu0 %3793
  %3795 = vrot.lane.b32.xlu0 %v3254, 12
  %v3796 = vpop.permute.xlu0 %3795
  %3797 = vrot.lane.b32.xlu0 %v3255, 12
  %v3798 = vpop.permute.xlu0 %3797
  %3799 = vrot.lane.b32.xlu0 %v3256, 12
  %v3800 = vpop.permute.xlu0 %3799
  %3801 = vrot.lane.b32.xlu0 %v3257, 12
  %v3802 = vpop.permute.xlu0 %3801
  %3803 = vrot.lane.b32.xlu0 %v3258, 12
  %v3804 = vpop.permute.xlu0 %3803
  %3805 = vrot.lane.b32.xlu0 %v3259, 12
  %v3806 = vpop.permute.xlu0 %3805
  %3807 = vrot.lane.b32.xlu0 %v3260, 12
  %v3808 = vpop.permute.xlu0 %3807
  %3809 = vrot.lane.b32.xlu0 %v3261, 12
  %v3810 = vpop.permute.xlu0 %3809
  %3811 = vrot.lane.b32.xlu0 %v3262, 12
  %v3812 = vpop.permute.xlu0 %3811
  %3813 = vrot.lane.b32.xlu0 %v3263, 12
  %v3814 = vpop.permute.xlu0 %3813
  %3815 = vrot.lane.b32.xlu0 %v3264, 12
  %v3816 = vpop.permute.xlu0 %3815
  %3817 = vrot.lane.b32.xlu0 %v3265, 12
  %v3818 = vpop.permute.xlu0 %3817
  %3819 = vrot.lane.b32.xlu0 %v3266, 12
  %v3820 = vpop.permute.xlu0 %3819
  %3821 = vrot.lane.b32.xlu0 %v3267, 12
  %v3822 = vpop.permute.xlu0 %3821
  %3823 = vrot.lane.b32.xlu0 %v3268, 12
  %v3824 = vpop.permute.xlu0 %3823
  %3825 = vrot.lane.b32.xlu0 %v3269, 12
  %v3826 = vpop.permute.xlu0 %3825
  %3827 = vrot.lane.b32.xlu0 %v3270, 12
  %v3828 = vpop.permute.xlu0 %3827
  %3829 = vrot.lane.b32.xlu0 %v3271, 12
  %v3830 = vpop.permute.xlu0 %3829
  %3831 = vrot.lane.b32.xlu0 %v3272, 12
  %v3832 = vpop.permute.xlu0 %3831
  %3833 = vrot.lane.b32.xlu0 %v3273, 12
  %v3834 = vpop.permute.xlu0 %3833
  %3835 = vrot.lane.b32.xlu0 %v3274, 12
  %v3836 = vpop.permute.xlu0 %3835
  %3837 = vrot.lane.b32.xlu0 %v3275, 12
  %v3838 = vpop.permute.xlu0 %3837
  %3839 = vrot.lane.b32.xlu0 %v3276, 12
  %v3840 = vpop.permute.xlu0 %3839
  %3841 = vrot.lane.b32.xlu0 %v3277, 12
  %v3842 = vpop.permute.xlu0 %3841
  %3843 = vrot.lane.b32.xlu0 %v3278, 12
  %v3844 = vpop.permute.xlu0 %3843
  %3845 = vrot.lane.b32.xlu0 %v3279, 12
  %v3846 = vpop.permute.xlu0 %3845
  %vm3910 = vcmask 31744
  %v3911 = vsel %vm3910, %v3217, %v3344
  %v3912 = vsel %vm3910, %v3218, %v3346
  %v3913 = vsel %vm3910, %v3219, %v3348
  %v3914 = vsel %vm3910, %v3220, %v3350
  %v3915 = vsel %vm3910, %v3221, %v3352
  %v3916 = vsel %vm3910, %v3222, %v3354
  %v3917 = vsel %vm3910, %v3223, %v3356
  %v3918 = vsel %vm3910, %v3224, %v3358
  %v3919 = vsel %vm3910, %v3225, %v3360
  %v3920 = vsel %vm3910, %v3226, %v3362
  %v3921 = vsel %vm3910, %v3227, %v3364
  %v3922 = vsel %vm3910, %v3228, %v3366
  %v3923 = vsel %vm3910, %v3229, %v3368
  %v3924 = vsel %vm3910, %v3230, %v3370
  %v3925 = vsel %vm3910, %v3231, %v3372
  %v3926 = vsel %vm3910, %v3232, %v3374
  %v3927 = vsel %vm3910, %v3233, %v3376
  %v3928 = vsel %vm3910, %v3234, %v3378
  %v3929 = vsel %vm3910, %v3235, %v3380
  %v3930 = vsel %vm3910, %v3236, %v3382
  %v3931 = vsel %vm3910, %v3237, %v3384
  %v3932 = vsel %vm3910, %v3238, %v3386
  %v3933 = vsel %vm3910, %v3239, %v3388
  %v3934 = vsel %vm3910, %v3240, %v3390
  %v3935 = vsel %vm3910, %v3241, %v3392
  %v3936 = vsel %vm3910, %v3242, %v3394
  %v3937 = vsel %vm3910, %v3243, %v3396
  %v3938 = vsel %vm3910, %v3244, %v3398
  %v3939 = vsel %vm3910, %v3245, %v3400
  %v3940 = vsel %vm3910, %v3246, %v3402
  %v3941 = vsel %vm3910, %v3247, %v3404
  %v3942 = vsel %vm3910, %v3248, %v3406
  %v3943 = vsel %vm3910, %v3249, %v3408
  %v3944 = vsel %vm3910, %v3250, %v3410
  %v3945 = vsel %vm3910, %v3251, %v3412
  %v3946 = vsel %vm3910, %v3252, %v3414
  %v3947 = vsel %vm3910, %v3253, %v3416
  %v3948 = vsel %vm3910, %v3254, %v3418
  %v3949 = vsel %vm3910, %v3255, %v3420
  %v3950 = vsel %vm3910, %v3256, %v3422
  %v3951 = vsel %vm3910, %v3257, %v3424
  %v3952 = vsel %vm3910, %v3258, %v3426
  %v3953 = vsel %vm3910, %v3259, %v3428
  %v3954 = vsel %vm3910, %v3260, %v3430
  %v3955 = vsel %vm3910, %v3261, %v3432
  %v3956 = vsel %vm3910, %v3262, %v3434
  %v3957 = vsel %vm3910, %v3263, %v3436
  %v3958 = vsel %vm3910, %v3264, %v3438
  %v3959 = vsel %vm3910, %v3265, %v3440
  %v3960 = vsel %vm3910, %v3266, %v3442
  %v3961 = vsel %vm3910, %v3267, %v3444
  %v3962 = vsel %vm3910, %v3268, %v3446
  %v3963 = vsel %vm3910, %v3269, %v3448
  %v3964 = vsel %vm3910, %v3270, %v3450
  %v3965 = vsel %vm3910, %v3271, %v3452
  %v3966 = vsel %vm3910, %v3272, %v3454
  %v3967 = vsel %vm3910, %v3273, %v3456
  %v3968 = vsel %vm3910, %v3274, %v3458
  %v3969 = vsel %vm3910, %v3275, %v3460
  %v3970 = vsel %vm3910, %v3276, %v3462
  %v3971 = vsel %vm3910, %v3277, %v3464
  %v3972 = vsel %vm3910, %v3278, %v3466
  %v3973 = vsel %vm3910, %v3279, %v3468
  %v3974 = vsel %vm1249, %v3911, %v3533
  %v3975 = vsel %vm1249, %v3912, %v3535
  %v3976 = vsel %vm1249, %v3913, %v3537
  %v3977 = vsel %vm1249, %v3914, %v3539
  %v3978 = vsel %vm1249, %v3915, %v3541
  %v3979 = vsel %vm1249, %v3916, %v3543
  %v3980 = vsel %vm1249, %v3917, %v3545
  %v3981 = vsel %vm1249, %v3918, %v3547
  %v3982 = vsel %vm1249, %v3919, %v3549
  %v3983 = vsel %vm1249, %v3920, %v3551
  %v3984 = vsel %vm1249, %v3921, %v3553
  %v3985 = vsel %vm1249, %v3922, %v3555
  %v3986 = vsel %vm1249, %v3923, %v3557
  %v3987 = vsel %vm1249, %v3924, %v3559
  %v3988 = vsel %vm1249, %v3925, %v3561
  %v3989 = vsel %vm1249, %v3926, %v3563
  %v3990 = vsel %vm1249, %v3927, %v3565
  %v3991 = vsel %vm1249, %v3928, %v3567
  %v3992 = vsel %vm1249, %v3929, %v3569
  %v3993 = vsel %vm1249, %v3930, %v3571
  %v3994 = vsel %vm1249, %v3931, %v3573
  %v3995 = vsel %vm1249, %v3932, %v3575
  %v3996 = vsel %vm1249, %v3933, %v3577
  %v3997 = vsel %vm1249, %v3934, %v3579
  %v3998 = vsel %vm1249, %v3935, %v3581
  %v3999 = vsel %vm1249, %v3936, %v3583
  %v4000 = vsel %vm1249, %v3937, %v3585
  %v4001 = vsel %vm1249, %v3938, %v3587
  %v4002 = vsel %vm1249, %v3939, %v3589
  %v4003 = vsel %vm1249, %v3940, %v3591
  %v4004 = vsel %vm1249, %v3941, %v3593
  %v4005 = vsel %vm1249, %v3942, %v3595
  %v4006 = vsel %vm1249, %v3943, %v3597
  %v4007 = vsel %vm1249, %v3944, %v3599
  %v4008 = vsel %vm1249, %v3945, %v3601
  %v4009 = vsel %vm1249, %v3946, %v3603
  %v4010 = vsel %vm1249, %v3947, %v3605
  %v4011 = vsel %vm1249, %v3948, %v3607
  %v4012 = vsel %vm1249, %v3949, %v3609
  %v4013 = vsel %vm1249, %v3950, %v3611
  %v4014 = vsel %vm1249, %v3951, %v3613
  %v4015 = vsel %vm1249, %v3952, %v3615
  %v4016 = vsel %vm1249, %v3953, %v3617
  %v4017 = vsel %vm1249, %v3954, %v3619
  %v4018 = vsel %vm1249, %v3955, %v3621
  %v4019 = vsel %vm1249, %v3956, %v3623
  %v4020 = vsel %vm1249, %v3957, %v3625
  %v4021 = vsel %vm1249, %v3958, %v3627
  %v4022 = vsel %vm1249, %v3959, %v3629
  %v4023 = vsel %vm1249, %v3960, %v3631
  %v4024 = vsel %vm1249, %v3961, %v3633
  %v4025 = vsel %vm1249, %v3962, %v3635
  %v4026 = vsel %vm1249, %v3963, %v3637
  %v4027 = vsel %vm1249, %v3964, %v3639
  %v4028 = vsel %vm1249, %v3965, %v3641
  %v4029 = vsel %vm1249, %v3966, %v3643
  %v4030 = vsel %vm1249, %v3967, %v3645
  %v4031 = vsel %vm1249, %v3968, %v3647
  %v4032 = vsel %vm1249, %v3969, %v3649
  %v4033 = vsel %vm1249, %v3970, %v3651
  %v4034 = vsel %vm1249, %v3971, %v3653
  %v4035 = vsel %vm1249, %v3972, %v3655
  %v4036 = vsel %vm1249, %v3973, %v3657
  %vm4037 = vcmask 97280
  %v4038 = vsel %vm4037, %v3974, %v3722
  %v4039 = vsel %vm4037, %v3975, %v3724
  %v4040 = vsel %vm4037, %v3976, %v3726
  %v4041 = vsel %vm4037, %v3977, %v3728
  %v4042 = vsel %vm4037, %v3978, %v3730
  %v4043 = vsel %vm4037, %v3979, %v3732
  %v4044 = vsel %vm4037, %v3980, %v3734
  %v4045 = vsel %vm4037, %v3981, %v3736
  %v4046 = vsel %vm4037, %v3982, %v3738
  %v4047 = vsel %vm4037, %v3983, %v3740
  %v4048 = vsel %vm4037, %v3984, %v3742
  %v4049 = vsel %vm4037, %v3985, %v3744
  %v4050 = vsel %vm4037, %v3986, %v3746
  %v4051 = vsel %vm4037, %v3987, %v3748
  %v4052 = vsel %vm4037, %v3988, %v3750
  %v4053 = vsel %vm4037, %v3989, %v3752
  %v4054 = vsel %vm4037, %v3990, %v3754
  %v4055 = vsel %vm4037, %v3991, %v3756
  %v4056 = vsel %vm4037, %v3992, %v3758
  %v4057 = vsel %vm4037, %v3993, %v3760
  %v4058 = vsel %vm4037, %v3994, %v3762
  %v4059 = vsel %vm4037, %v3995, %v3764
  %v4060 = vsel %vm4037, %v3996, %v3766
  %v4061 = vsel %vm4037, %v3997, %v3768
  %v4062 = vsel %vm4037, %v3998, %v3770
  %v4063 = vsel %vm4037, %v3999, %v3772
  %v4064 = vsel %vm4037, %v4000, %v3774
  %v4065 = vsel %vm4037, %v4001, %v3776
  %v4066 = vsel %vm4037, %v4002, %v3778
  %v4067 = vsel %vm4037, %v4003, %v3780
  %v4068 = vsel %vm4037, %v4004, %v3782
  %v4069 = vsel %vm4037, %v4005, %v3784
  %v4070 = vsel %vm4037, %v4006, %v3786
  %v4071 = vsel %vm4037, %v4007, %v3788
  %v4072 = vsel %vm4037, %v4008, %v3790
  %v4073 = vsel %vm4037, %v4009, %v3792
  %v4074 = vsel %vm4037, %v4010, %v3794
  %v4075 = vsel %vm4037, %v4011, %v3796
  %v4076 = vsel %vm4037, %v4012, %v3798
  %v4077 = vsel %vm4037, %v4013, %v3800
  %v4078 = vsel %vm4037, %v4014, %v3802
  %v4079 = vsel %vm4037, %v4015, %v3804
  %v4080 = vsel %vm4037, %v4016, %v3806
  %v4081 = vsel %vm4037, %v4017, %v3808
  %v4082 = vsel %vm4037, %v4018, %v3810
  %v4083 = vsel %vm4037, %v4019, %v3812
  %v4084 = vsel %vm4037, %v4020, %v3814
  %v4085 = vsel %vm4037, %v4021, %v3816
  %v4086 = vsel %vm4037, %v4022, %v3818
  %v4087 = vsel %vm4037, %v4023, %v3820
  %v4088 = vsel %vm4037, %v4024, %v3822
  %v4089 = vsel %vm4037, %v4025, %v3824
  %v4090 = vsel %vm4037, %v4026, %v3826
  %v4091 = vsel %vm4037, %v4027, %v3828
  %v4092 = vsel %vm4037, %v4028, %v3830
  %v4093 = vsel %vm4037, %v4029, %v3832
  %v4094 = vsel %vm4037, %v4030, %v3834
  %v4095 = vsel %vm4037, %v4031, %v3836
  %v4096 = vsel %vm4037, %v4032, %v3838
  %v4097 = vsel %vm4037, %v4033, %v3840
  %v4098 = vsel %vm4037, %v4034, %v3842
  %v4099 = vsel %vm4037, %v4035, %v3844
  %v4100 = vsel %vm4037, %v4036, %v3846
  %v4101 = vmul.f32 %v2904, %v4038
  %v4102 = vmul.f32 %v2909, %v4039
  %v4103 = vmul.f32 %v2914, %v4040
  %v4104 = vmul.f32 %v2919, %v4041
  %v4105 = vmul.f32 %v2924, %v4042
  %v4106 = vmul.f32 %v2929, %v4043
  %v4107 = vmul.f32 %v2934, %v4044
  %v4108 = vmul.f32 %v2939, %v4045
  %v4109 = vmul.f32 %v2944, %v4046
  %v4110 = vmul.f32 %v2949, %v4047
  %v4111 = vmul.f32 %v2954, %v4048
  %v4112 = vmul.f32 %v2959, %v4049
  %v4113 = vmul.f32 %v2964, %v4050
  %v4114 = vmul.f32 %v2969, %v4051
  %v4115 = vmul.f32 %v2974, %v4052
  %v4116 = vmul.f32 %v2979, %v4053
  %v4117 = vmul.f32 %v2984, %v4054
  %v4118 = vmul.f32 %v2989, %v4055
  %v4119 = vmul.f32 %v2994, %v4056
  %v4120 = vmul.f32 %v2999, %v4057
  %v4121 = vmul.f32 %v3004, %v4058
  %v4122 = vmul.f32 %v3009, %v4059
  %v4123 = vmul.f32 %v3014, %v4060
  %v4124 = vmul.f32 %v3019, %v4061
  %v4125 = vmul.f32 %v3024, %v4062
  %v4126 = vmul.f32 %v3029, %v4063
  %v4127 = vmul.f32 %v3034, %v4064
  %v4128 = vmul.f32 %v3039, %v4065
  %v4129 = vmul.f32 %v3044, %v4066
  %v4130 = vmul.f32 %v3049, %v4067
  %v4131 = vmul.f32 %v3054, %v4068
  %v4132 = vmul.f32 %v3059, %v4069
  %v4133 = vmul.f32 %v3064, %v4070
  %v4134 = vmul.f32 %v3069, %v4071
  %v4135 = vmul.f32 %v3074, %v4072
  %v4136 = vmul.f32 %v3079, %v4073
  %v4137 = vmul.f32 %v3084, %v4074
  %v4138 = vmul.f32 %v3089, %v4075
  %v4139 = vmul.f32 %v3094, %v4076
  %v4140 = vmul.f32 %v3099, %v4077
  %v4141 = vmul.f32 %v3104, %v4078
  %v4142 = vmul.f32 %v3109, %v4079
  %v4143 = vmul.f32 %v3114, %v4080
  %v4144 = vmul.f32 %v3119, %v4081
  %v4145 = vmul.f32 %v3124, %v4082
  %v4146 = vmul.f32 %v3129, %v4083
  %v4147 = vmul.f32 %v3134, %v4084
  %v4148 = vmul.f32 %v3139, %v4085
  %v4149 = vmul.f32 %v3144, %v4086
  %v4150 = vmul.f32 %v3149, %v4087
  %v4151 = vmul.f32 %v3154, %v4088
  %v4152 = vmul.f32 %v3159, %v4089
  %v4153 = vmul.f32 %v3164, %v4090
  %v4154 = vmul.f32 %v3169, %v4091
  %v4155 = vmul.f32 %v3174, %v4092
  %v4156 = vmul.f32 %v3179, %v4093
  %v4157 = vmul.f32 %v3184, %v4094
  %v4158 = vmul.f32 %v3189, %v4095
  %v4159 = vmul.f32 %v3194, %v4096
  %v4160 = vmul.f32 %v3199, %v4097
  %v4161 = vmul.f32 %v3204, %v4098
  %v4162 = vmul.f32 %v3209, %v4099
  %v4163 = vmul.f32 %v3214, %v4100
  %v4164 = vld [vmem:[%s6 + $0x20] sm:$0xff]
  %v4165 = vld [vmem:[%s6 + $0x28] sm:$0xff]
  %vm4166 = vcmask 130048
  %v4168 = vsel %vm4166, %v4101, 0
  %v4171 = vsel %vm4166, %v4102, 0
  %v4174 = vsel %vm4166, %v4103, 0
  %v4177 = vsel %vm4166, %v4104, 0
  %v4180 = vsel %vm4166, %v4105, 0
  %v4183 = vsel %vm4166, %v4106, 0
  %v4186 = vsel %vm4166, %v4107, 0
  %v4189 = vsel %vm4166, %v4108, 0
  %v4192 = vsel %vm4166, %v4109, 0
  %v4195 = vsel %vm4166, %v4110, 0
  %v4198 = vsel %vm4166, %v4111, 0
  %v4201 = vsel %vm4166, %v4112, 0
  %v4204 = vsel %vm4166, %v4113, 0
  %v4207 = vsel %vm4166, %v4114, 0
  %v4210 = vsel %vm4166, %v4115, 0
  %v4213 = vsel %vm4166, %v4116, 0
  %v4216 = vsel %vm4166, %v4117, 0
  %v4219 = vsel %vm4166, %v4118, 0
  %v4222 = vsel %vm4166, %v4119, 0
  %v4225 = vsel %vm4166, %v4120, 0
  %v4228 = vsel %vm4166, %v4121, 0
  %v4231 = vsel %vm4166, %v4122, 0
  %v4234 = vsel %vm4166, %v4123, 0
  %v4237 = vsel %vm4166, %v4124, 0
  %v4240 = vsel %vm4166, %v4125, 0
  %v4243 = vsel %vm4166, %v4126, 0
  %v4246 = vsel %vm4166, %v4127, 0
  %v4249 = vsel %vm4166, %v4128, 0
  %v4252 = vsel %vm4166, %v4129, 0
  %v4255 = vsel %vm4166, %v4130, 0
  %v4258 = vsel %vm4166, %v4131, 0
  %v4261 = vsel %vm4166, %v4132, 0
  %v4264 = vsel %vm4166, %v4133, 0
  %v4267 = vsel %vm4166, %v4134, 0
  %v4270 = vsel %vm4166, %v4135, 0
  %v4273 = vsel %vm4166, %v4136, 0
  %v4276 = vsel %vm4166, %v4137, 0
  %v4279 = vsel %vm4166, %v4138, 0
  %v4282 = vsel %vm4166, %v4139, 0
  %v4285 = vsel %vm4166, %v4140, 0
  %v4288 = vsel %vm4166, %v4141, 0
  %v4291 = vsel %vm4166, %v4142, 0
  %v4294 = vsel %vm4166, %v4143, 0
  %v4297 = vsel %vm4166, %v4144, 0
  %v4300 = vsel %vm4166, %v4145, 0
  %v4303 = vsel %vm4166, %v4146, 0
  %v4306 = vsel %vm4166, %v4147, 0
  %v4309 = vsel %vm4166, %v4148, 0
  %v4312 = vsel %vm4166, %v4149, 0
  %v4315 = vsel %vm4166, %v4150, 0
  %v4318 = vsel %vm4166, %v4151, 0
  %v4321 = vsel %vm4166, %v4152, 0
  %v4324 = vsel %vm4166, %v4153, 0
  %v4327 = vsel %vm4166, %v4154, 0
  %v4330 = vsel %vm4166, %v4155, 0
  %v4333 = vsel %vm4166, %v4156, 0
  %v4336 = vsel %vm4166, %v4157, 0
  %v4339 = vsel %vm4166, %v4158, 0
  %v4342 = vsel %vm4166, %v4159, 0
  %v4345 = vsel %vm4166, %v4160, 0
  %v4348 = vsel %vm4166, %v4161, 0
  %v4351 = vsel %vm4166, %v4162, 0
  %v4354 = vsel %vm4166, %v4163, 0
  %4356 = vmatprep.subr.mxu0 0.0
  %4357 = vmatpush1.msra.mxu0 0.0
  %4358 = vmatprep.subr.mxu0 0.0
  %4359 = vmatpush1.msra.mxu0 0.0
  %4360 = vmatprep.subr.mxu0 0.0
  %4361 = vmatpush1.msra.mxu0 0.0
  %4362 = vmatprep.subr.mxu0 0.0
  %4363 = vmatpush1.msra.mxu0 0.0
  %4364 = vmatprep.subr.mxu0 0.0
  %4365 = vmatpush1.msra.mxu0 0.0
  %4366 = vmatprep.subr.mxu0 0.0
  %4367 = vmatpush1.msra.mxu0 0.0
  %4368 = vmatprep.subr.mxu0 0.0
  %4369 = vmatpush1.msra.mxu0 0.0
  %4370 = vmatprep.subr.mxu0 0.0
  %4371 = vmatpush1.msra.mxu0 0.0
  %4372 = vmatprep.subr.mxu0 0.0
  %4373 = vmatpush1.msra.mxu0 0.0
  %4374 = vmatprep.subr.mxu0 0.0
  %4375 = vmatpush1.msra.mxu0 0.0
  %4376 = vmatprep.subr.mxu0 0.0
  %4377 = vmatpush1.msra.mxu0 0.0
  %4378 = vmatprep.subr.mxu0 0.0
  %4379 = vmatpush1.msra.mxu0 0.0
  %4380 = vmatprep.subr.mxu0 0.0
  %4381 = vmatpush1.msra.mxu0 0.0
  %4382 = vmatprep.subr.mxu0 0.0
  %4383 = vmatpush1.msra.mxu0 0.0
  %4384 = vmatprep.subr.mxu0 0.0
  %4385 = vmatpush1.msra.mxu0 %v4165
  %4386 = vmatprep.subr.mxu0 0.0
  %4387 = vmatpush1.msra.mxu0 %v4164
  %4388 = vmatprep.subr.mxu0 0.0
  %4389 = vmatpush2.msra.mxu0 0.0
  %4390 = vmatprep.subr.mxu0 0.0
  %4391 = vmatpush2.msra.mxu0 0.0
  %4392 = vmatprep.subr.mxu0 0.0
  %4393 = vmatpush2.msra.mxu0 0.0
  %4394 = vmatprep.subr.mxu0 0.0
  %4395 = vmatpush2.msra.mxu0 0.0
  %4396 = vmatprep.subr.mxu0 0.0
  %4397 = vmatpush2.msra.mxu0 0.0
  %4398 = vmatprep.subr.mxu0 0.0
  %4399 = vmatpush2.msra.mxu0 0.0
  %4400 = vmatprep.subr.mxu0 0.0
  %4401 = vmatpush2.msra.mxu0 0.0
  %4402 = vmatprep.subr.mxu0 0.0
  %4403 = vmatpush2.msra.mxu0 0.0
  %4404 = vmatprep.subr.mxu0 0.0
  %4405 = vmatpush2.msra.mxu0 0.0
  %4406 = vmatprep.subr.mxu0 0.0
  %4407 = vmatpush2.msra.mxu0 0.0
  %4408 = vmatprep.subr.mxu0 0.0
  %4409 = vmatpush2.msra.mxu0 0.0
  %4410 = vmatprep.subr.mxu0 0.0
  %4411 = vmatpush2.msra.mxu0 0.0
  %4412 = vmatprep.subr.mxu0 0.0
  %4413 = vmatpush2.msra.mxu0 0.0
  %4414 = vmatprep.subr.mxu0 0.0
  %4415 = vmatpush2.msra.mxu0 0.0
  %4416 = vmatprep.subr.mxu0 0.0
  %4417 = vmatpush2.msra.mxu0 0.0
  %4418 = vmatprep.subr.mxu0 0.0
  %4419 = vmatpush2.msra.mxu0 0.0
  %4420 = vmatprep.mubr.f32.mxu0 0.0
  %4421 = vmatmul.mubr.f32.gmra.mxu0 %v4168
  %v4422 = vpop.f32.mrf.mxu0
  %v4423 = vadd.f32 0.0, %v4422
  %v4424 = vpop.f32.mrf.mxu0
  %4425 = vmatprep.mubr.f32.mxu0 0.0
  %4426 = vmatmul.mubr.f32.gmra.mxu0 %v4171
  %v4427 = vpop.f32.mrf.mxu0
  %v4428 = vadd.f32 0.0, %v4427
  %v4429 = vpop.f32.mrf.mxu0
  %4430 = vmatprep.mubr.f32.mxu0 0.0
  %4431 = vmatmul.mubr.f32.gmra.mxu0 %v4174
  %v4432 = vpop.f32.mrf.mxu0
  %v4433 = vadd.f32 0.0, %v4432
  %v4434 = vpop.f32.mrf.mxu0
  %4435 = vmatprep.mubr.f32.mxu0 0.0
  %4436 = vmatmul.mubr.f32.gmra.mxu0 %v4177
  %v4437 = vpop.f32.mrf.mxu0
  %v4438 = vadd.f32 0.0, %v4437
  %v4439 = vpop.f32.mrf.mxu0
  %4440 = vmatprep.mubr.f32.mxu0 0.0
  %4441 = vmatmul.mubr.f32.gmra.mxu0 %v4180
  %v4442 = vpop.f32.mrf.mxu0
  %v4443 = vadd.f32 0.0, %v4442
  %v4444 = vpop.f32.mrf.mxu0
  %4445 = vmatprep.mubr.f32.mxu0 0.0
  %4446 = vmatmul.mubr.f32.gmra.mxu0 %v4183
  %v4447 = vpop.f32.mrf.mxu0
  %v4448 = vadd.f32 0.0, %v4447
  %v4449 = vpop.f32.mrf.mxu0
  %4450 = vmatprep.mubr.f32.mxu0 0.0
  %4451 = vmatmul.mubr.f32.gmra.mxu0 %v4186
  %v4452 = vpop.f32.mrf.mxu0
  %v4453 = vadd.f32 0.0, %v4452
  %v4454 = vpop.f32.mrf.mxu0
  %4455 = vmatprep.mubr.f32.mxu0 0.0
  %4456 = vmatmul.mubr.f32.gmra.mxu0 %v4189
  %v4457 = vpop.f32.mrf.mxu0
  %v4458 = vadd.f32 0.0, %v4457
  %v4459 = vpop.f32.mrf.mxu0
  %4460 = vmatprep.mubr.f32.mxu0 0.0
  %4461 = vmatmul.mubr.f32.gmra.mxu0 %v4192
  %v4462 = vpop.f32.mrf.mxu0
  %v4463 = vadd.f32 0.0, %v4462
  %v4464 = vpop.f32.mrf.mxu0
  %4465 = vmatprep.mubr.f32.mxu0 0.0
  %4466 = vmatmul.mubr.f32.gmra.mxu0 %v4195
  %v4467 = vpop.f32.mrf.mxu0
  %v4468 = vadd.f32 0.0, %v4467
  %v4469 = vpop.f32.mrf.mxu0
  %4470 = vmatprep.mubr.f32.mxu0 0.0
  %4471 = vmatmul.mubr.f32.gmra.mxu0 %v4198
  %v4472 = vpop.f32.mrf.mxu0
  %v4473 = vadd.f32 0.0, %v4472
  %v4474 = vpop.f32.mrf.mxu0
  %4475 = vmatprep.mubr.f32.mxu0 0.0
  %4476 = vmatmul.mubr.f32.gmra.mxu0 %v4201
  %v4477 = vpop.f32.mrf.mxu0
  %v4478 = vadd.f32 0.0, %v4477
  %v4479 = vpop.f32.mrf.mxu0
  %4480 = vmatprep.mubr.f32.mxu0 0.0
  %4481 = vmatmul.mubr.f32.gmra.mxu0 %v4204
  %v4482 = vpop.f32.mrf.mxu0
  %v4483 = vadd.f32 0.0, %v4482
  %v4484 = vpop.f32.mrf.mxu0
  %4485 = vmatprep.mubr.f32.mxu0 0.0
  %4486 = vmatmul.mubr.f32.gmra.mxu0 %v4207
  %v4487 = vpop.f32.mrf.mxu0
  %v4488 = vadd.f32 0.0, %v4487
  %v4489 = vpop.f32.mrf.mxu0
  %4490 = vmatprep.mubr.f32.mxu0 0.0
  %4491 = vmatmul.mubr.f32.gmra.mxu0 %v4210
  %v4492 = vpop.f32.mrf.mxu0
  %v4493 = vadd.f32 0.0, %v4492
  %v4494 = vpop.f32.mrf.mxu0
  %4495 = vmatprep.mubr.f32.mxu0 0.0
  %4496 = vmatmul.mubr.f32.gmra.mxu0 %v4213
  %v4497 = vpop.f32.mrf.mxu0
  %v4498 = vadd.f32 0.0, %v4497
  %v4499 = vpop.f32.mrf.mxu0
  %4500 = vmatprep.mubr.f32.mxu0 0.0
  %4501 = vmatmul.mubr.f32.gmra.mxu0 %v4216
  %v4502 = vpop.f32.mrf.mxu0
  %v4503 = vadd.f32 0.0, %v4502
  %v4504 = vpop.f32.mrf.mxu0
  %4505 = vmatprep.mubr.f32.mxu0 0.0
  %4506 = vmatmul.mubr.f32.gmra.mxu0 %v4219
  %v4507 = vpop.f32.mrf.mxu0
  %v4508 = vadd.f32 0.0, %v4507
  %v4509 = vpop.f32.mrf.mxu0
  %4510 = vmatprep.mubr.f32.mxu0 0.0
  %4511 = vmatmul.mubr.f32.gmra.mxu0 %v4222
  %v4512 = vpop.f32.mrf.mxu0
  %v4513 = vadd.f32 0.0, %v4512
  %v4514 = vpop.f32.mrf.mxu0
  %4515 = vmatprep.mubr.f32.mxu0 0.0
  %4516 = vmatmul.mubr.f32.gmra.mxu0 %v4225
  %v4517 = vpop.f32.mrf.mxu0
  %v4518 = vadd.f32 0.0, %v4517
  %v4519 = vpop.f32.mrf.mxu0
  %4520 = vmatprep.mubr.f32.mxu0 0.0
  %4521 = vmatmul.mubr.f32.gmra.mxu0 %v4228
  %v4522 = vpop.f32.mrf.mxu0
  %v4523 = vadd.f32 0.0, %v4522
  %v4524 = vpop.f32.mrf.mxu0
  %4525 = vmatprep.mubr.f32.mxu0 0.0
  %4526 = vmatmul.mubr.f32.gmra.mxu0 %v4231
  %v4527 = vpop.f32.mrf.mxu0
  %v4528 = vadd.f32 0.0, %v4527
  %v4529 = vpop.f32.mrf.mxu0
  %4530 = vmatprep.mubr.f32.mxu0 0.0
  %4531 = vmatmul.mubr.f32.gmra.mxu0 %v4234
  %v4532 = vpop.f32.mrf.mxu0
  %v4533 = vadd.f32 0.0, %v4532
  %v4534 = vpop.f32.mrf.mxu0
  %4535 = vmatprep.mubr.f32.mxu0 0.0
  %4536 = vmatmul.mubr.f32.gmra.mxu0 %v4237
  %v4537 = vpop.f32.mrf.mxu0
  %v4538 = vadd.f32 0.0, %v4537
  %v4539 = vpop.f32.mrf.mxu0
  %4540 = vmatprep.mubr.f32.mxu0 0.0
  %4541 = vmatmul.mubr.f32.gmra.mxu0 %v4240
  %v4542 = vpop.f32.mrf.mxu0
  %v4543 = vadd.f32 0.0, %v4542
  %v4544 = vpop.f32.mrf.mxu0
  %4545 = vmatprep.mubr.f32.mxu0 0.0
  %4546 = vmatmul.mubr.f32.gmra.mxu0 %v4243
  %v4547 = vpop.f32.mrf.mxu0
  %v4548 = vadd.f32 0.0, %v4547
  %v4549 = vpop.f32.mrf.mxu0
  %4550 = vmatprep.mubr.f32.mxu0 0.0
  %4551 = vmatmul.mubr.f32.gmra.mxu0 %v4246
  %v4552 = vpop.f32.mrf.mxu0
  %v4553 = vadd.f32 0.0, %v4552
  %v4554 = vpop.f32.mrf.mxu0
  %4555 = vmatprep.mubr.f32.mxu0 0.0
  %4556 = vmatmul.mubr.f32.gmra.mxu0 %v4249
  %v4557 = vpop.f32.mrf.mxu0
  %v4558 = vadd.f32 0.0, %v4557
  %v4559 = vpop.f32.mrf.mxu0
  %4560 = vmatprep.mubr.f32.mxu0 0.0
  %4561 = vmatmul.mubr.f32.gmra.mxu0 %v4252
  %v4562 = vpop.f32.mrf.mxu0
  %v4563 = vadd.f32 0.0, %v4562
  %v4564 = vpop.f32.mrf.mxu0
  %4565 = vmatprep.mubr.f32.mxu0 0.0
  %4566 = vmatmul.mubr.f32.gmra.mxu0 %v4255
  %v4567 = vpop.f32.mrf.mxu0
  %v4568 = vadd.f32 0.0, %v4567
  %v4569 = vpop.f32.mrf.mxu0
  %4570 = vmatprep.mubr.f32.mxu0 0.0
  %4571 = vmatmul.mubr.f32.gmra.mxu0 %v4258
  %v4572 = vpop.f32.mrf.mxu0
  %v4573 = vadd.f32 0.0, %v4572
  %v4574 = vpop.f32.mrf.mxu0
  %4575 = vmatprep.mubr.f32.mxu0 0.0
  %4576 = vmatmul.mubr.f32.gmra.mxu0 %v4261
  %v4577 = vpop.f32.mrf.mxu0
  %v4578 = vadd.f32 0.0, %v4577
  %v4579 = vpop.f32.mrf.mxu0
  %4580 = vmatprep.mubr.f32.mxu0 0.0
  %4581 = vmatmul.mubr.f32.gmra.mxu0 %v4264
  %v4582 = vpop.f32.mrf.mxu0
  %v4583 = vadd.f32 0.0, %v4582
  %v4584 = vpop.f32.mrf.mxu0
  %4585 = vmatprep.mubr.f32.mxu0 0.0
  %4586 = vmatmul.mubr.f32.gmra.mxu0 %v4267
  %v4587 = vpop.f32.mrf.mxu0
  %v4588 = vadd.f32 0.0, %v4587
  %v4589 = vpop.f32.mrf.mxu0
  %4590 = vmatprep.mubr.f32.mxu0 0.0
  %4591 = vmatmul.mubr.f32.gmra.mxu0 %v4270
  %v4592 = vpop.f32.mrf.mxu0
  %v4593 = vadd.f32 0.0, %v4592
  %v4594 = vpop.f32.mrf.mxu0
  %4595 = vmatprep.mubr.f32.mxu0 0.0
  %4596 = vmatmul.mubr.f32.gmra.mxu0 %v4273
  %v4597 = vpop.f32.mrf.mxu0
  %v4598 = vadd.f32 0.0, %v4597
  %v4599 = vpop.f32.mrf.mxu0
  %4600 = vmatprep.mubr.f32.mxu0 0.0
  %4601 = vmatmul.mubr.f32.gmra.mxu0 %v4276
  %v4602 = vpop.f32.mrf.mxu0
  %v4603 = vadd.f32 0.0, %v4602
  %v4604 = vpop.f32.mrf.mxu0
  %4605 = vmatprep.mubr.f32.mxu0 0.0
  %4606 = vmatmul.mubr.f32.gmra.mxu0 %v4279
  %v4607 = vpop.f32.mrf.mxu0
  %v4608 = vadd.f32 0.0, %v4607
  %v4609 = vpop.f32.mrf.mxu0
  %4610 = vmatprep.mubr.f32.mxu0 0.0
  %4611 = vmatmul.mubr.f32.gmra.mxu0 %v4282
  %v4612 = vpop.f32.mrf.mxu0
  %v4613 = vadd.f32 0.0, %v4612
  %v4614 = vpop.f32.mrf.mxu0
  %4615 = vmatprep.mubr.f32.mxu0 0.0
  %4616 = vmatmul.mubr.f32.gmra.mxu0 %v4285
  %v4617 = vpop.f32.mrf.mxu0
  %v4618 = vadd.f32 0.0, %v4617
  %v4619 = vpop.f32.mrf.mxu0
  %4620 = vmatprep.mubr.f32.mxu0 0.0
  %4621 = vmatmul.mubr.f32.gmra.mxu0 %v4288
  %v4622 = vpop.f32.mrf.mxu0
  %v4623 = vadd.f32 0.0, %v4622
  %v4624 = vpop.f32.mrf.mxu0
  %4625 = vmatprep.mubr.f32.mxu0 0.0
  %4626 = vmatmul.mubr.f32.gmra.mxu0 %v4291
  %v4627 = vpop.f32.mrf.mxu0
  %v4628 = vadd.f32 0.0, %v4627
  %v4629 = vpop.f32.mrf.mxu0
  %4630 = vmatprep.mubr.f32.mxu0 0.0
  %4631 = vmatmul.mubr.f32.gmra.mxu0 %v4294
  %v4632 = vpop.f32.mrf.mxu0
  %v4633 = vadd.f32 0.0, %v4632
  %v4634 = vpop.f32.mrf.mxu0
  %4635 = vmatprep.mubr.f32.mxu0 0.0
  %4636 = vmatmul.mubr.f32.gmra.mxu0 %v4297
  %v4637 = vpop.f32.mrf.mxu0
  %v4638 = vadd.f32 0.0, %v4637
  %v4639 = vpop.f32.mrf.mxu0
  %4640 = vmatprep.mubr.f32.mxu0 0.0
  %4641 = vmatmul.mubr.f32.gmra.mxu0 %v4300
  %v4642 = vpop.f32.mrf.mxu0
  %v4643 = vadd.f32 0.0, %v4642
  %v4644 = vpop.f32.mrf.mxu0
  %4645 = vmatprep.mubr.f32.mxu0 0.0
  %4646 = vmatmul.mubr.f32.gmra.mxu0 %v4303
  %v4647 = vpop.f32.mrf.mxu0
  %v4648 = vadd.f32 0.0, %v4647
  %v4649 = vpop.f32.mrf.mxu0
  %4650 = vmatprep.mubr.f32.mxu0 0.0
  %4651 = vmatmul.mubr.f32.gmra.mxu0 %v4306
  %v4652 = vpop.f32.mrf.mxu0
  %v4653 = vadd.f32 0.0, %v4652
  %v4654 = vpop.f32.mrf.mxu0
  %4655 = vmatprep.mubr.f32.mxu0 0.0
  %4656 = vmatmul.mubr.f32.gmra.mxu0 %v4309
  %v4657 = vpop.f32.mrf.mxu0
  %v4658 = vadd.f32 0.0, %v4657
  %v4659 = vpop.f32.mrf.mxu0
  %4660 = vmatprep.mubr.f32.mxu0 0.0
  %4661 = vmatmul.mubr.f32.gmra.mxu0 %v4312
  %v4662 = vpop.f32.mrf.mxu0
  %v4663 = vadd.f32 0.0, %v4662
  %v4664 = vpop.f32.mrf.mxu0
  %4665 = vmatprep.mubr.f32.mxu0 0.0
  %4666 = vmatmul.mubr.f32.gmra.mxu0 %v4315
  %v4667 = vpop.f32.mrf.mxu0
  %v4668 = vadd.f32 0.0, %v4667
  %v4669 = vpop.f32.mrf.mxu0
  %4670 = vmatprep.mubr.f32.mxu0 0.0
  %4671 = vmatmul.mubr.f32.gmra.mxu0 %v4318
  %v4672 = vpop.f32.mrf.mxu0
  %v4673 = vadd.f32 0.0, %v4672
  %v4674 = vpop.f32.mrf.mxu0
  %4675 = vmatprep.mubr.f32.mxu0 0.0
  %4676 = vmatmul.mubr.f32.gmra.mxu0 %v4321
  %v4677 = vpop.f32.mrf.mxu0
  %v4678 = vadd.f32 0.0, %v4677
  %v4679 = vpop.f32.mrf.mxu0
  %4680 = vmatprep.mubr.f32.mxu0 0.0
  %4681 = vmatmul.mubr.f32.gmra.mxu0 %v4324
  %v4682 = vpop.f32.mrf.mxu0
  %v4683 = vadd.f32 0.0, %v4682
  %v4684 = vpop.f32.mrf.mxu0
  %4685 = vmatprep.mubr.f32.mxu0 0.0
  %4686 = vmatmul.mubr.f32.gmra.mxu0 %v4327
  %v4687 = vpop.f32.mrf.mxu0
  %v4688 = vadd.f32 0.0, %v4687
  %v4689 = vpop.f32.mrf.mxu0
  %4690 = vmatprep.mubr.f32.mxu0 0.0
  %4691 = vmatmul.mubr.f32.gmra.mxu0 %v4330
  %v4692 = vpop.f32.mrf.mxu0
  %v4693 = vadd.f32 0.0, %v4692
  %v4694 = vpop.f32.mrf.mxu0
  %4695 = vmatprep.mubr.f32.mxu0 0.0
  %4696 = vmatmul.mubr.f32.gmra.mxu0 %v4333
  %v4697 = vpop.f32.mrf.mxu0
  %v4698 = vadd.f32 0.0, %v4697
  %v4699 = vpop.f32.mrf.mxu0
  %4700 = vmatprep.mubr.f32.mxu0 0.0
  %4701 = vmatmul.mubr.f32.gmra.mxu0 %v4336
  %v4702 = vpop.f32.mrf.mxu0
  %v4703 = vadd.f32 0.0, %v4702
  %v4704 = vpop.f32.mrf.mxu0
  %4705 = vmatprep.mubr.f32.mxu0 0.0
  %4706 = vmatmul.mubr.f32.gmra.mxu0 %v4339
  %v4707 = vpop.f32.mrf.mxu0
  %v4708 = vadd.f32 0.0, %v4707
  %v4709 = vpop.f32.mrf.mxu0
  %4710 = vmatprep.mubr.f32.mxu0 0.0
  %4711 = vmatmul.mubr.f32.gmra.mxu0 %v4342
  %v4712 = vpop.f32.mrf.mxu0
  %v4713 = vadd.f32 0.0, %v4712
  %v4714 = vpop.f32.mrf.mxu0
  %4715 = vmatprep.mubr.f32.mxu0 0.0
  %4716 = vmatmul.mubr.f32.gmra.mxu0 %v4345
  %v4717 = vpop.f32.mrf.mxu0
  %v4718 = vadd.f32 0.0, %v4717
  %v4719 = vpop.f32.mrf.mxu0
  %4720 = vmatprep.mubr.f32.mxu0 0.0
  %4721 = vmatmul.mubr.f32.gmra.mxu0 %v4348
  %v4722 = vpop.f32.mrf.mxu0
  %v4723 = vadd.f32 0.0, %v4722
  %v4724 = vpop.f32.mrf.mxu0
  %4725 = vmatprep.mubr.f32.mxu0 0.0
  %4726 = vmatmul.mubr.f32.gmra.mxu0 %v4351
  %v4727 = vpop.f32.mrf.mxu0
  %v4728 = vadd.f32 0.0, %v4727
  %v4729 = vpop.f32.mrf.mxu0
  %4730 = vmatprep.mubr.f32.mxu0 0.0
  %4731 = vmatmul.mubr.f32.gmra.mxu0 %v4354
  %v4732 = vpop.f32.mrf.mxu0
  %v4733 = vadd.f32 0.0, %v4732
  %v4734 = vpop.f32.mrf.mxu0
  %4735 = vdwg.mxu0
  %4736 = vst.msk [vmem:[%s7] sm:$0xff] %vm3910, %v4423
  %4737 = vst.msk [vmem:[%s7 + $0x8] sm:$0xff] %vm3910, %v4428
  %4738 = vst.msk [vmem:[%s7 + $0x10] sm:$0xff] %vm3910, %v4433
  %4739 = vst.msk [vmem:[%s7 + $0x18] sm:$0xff] %vm3910, %v4438
  %4740 = vst.msk [vmem:[%s7 + $0x20] sm:$0xff] %vm3910, %v4443
  %4741 = vst.msk [vmem:[%s7 + $0x28] sm:$0xff] %vm3910, %v4448
  %4742 = vst.msk [vmem:[%s7 + $0x30] sm:$0xff] %vm3910, %v4453
  %4743 = vst.msk [vmem:[%s7 + $0x38] sm:$0xff] %vm3910, %v4458
  %4744 = vst.msk [vmem:[%s7 + $0x40] sm:$0xff] %vm3910, %v4463
  %4745 = vst.msk [vmem:[%s7 + $0x48] sm:$0xff] %vm3910, %v4468
  %4746 = vst.msk [vmem:[%s7 + $0x50] sm:$0xff] %vm3910, %v4473
  %4747 = vst.msk [vmem:[%s7 + $0x58] sm:$0xff] %vm3910, %v4478
  %4748 = vst.msk [vmem:[%s7 + $0x60] sm:$0xff] %vm3910, %v4483
  %4749 = vst.msk [vmem:[%s7 + $0x68] sm:$0xff] %vm3910, %v4488
  %4750 = vst.msk [vmem:[%s7 + $0x70] sm:$0xff] %vm3910, %v4493
  %4751 = vst.msk [vmem:[%s7 + $0x78] sm:$0xff] %vm3910, %v4498
  %4752 = vst.msk [vmem:[%s7 + $0x80] sm:$0xff] %vm3910, %v4503
  %4753 = vst.msk [vmem:[%s7 + $0x88] sm:$0xff] %vm3910, %v4508
  %4754 = vst.msk [vmem:[%s7 + $0x90] sm:$0xff] %vm3910, %v4513
  %4755 = vst.msk [vmem:[%s7 + $0x98] sm:$0xff] %vm3910, %v4518
  %4756 = vst.msk [vmem:[%s7 + $0xa0] sm:$0xff] %vm3910, %v4523
  %4757 = vst.msk [vmem:[%s7 + $0xa8] sm:$0xff] %vm3910, %v4528
  %4758 = vst.msk [vmem:[%s7 + $0xb0] sm:$0xff] %vm3910, %v4533
  %4759 = vst.msk [vmem:[%s7 + $0xb8] sm:$0xff] %vm3910, %v4538
  %4760 = vst.msk [vmem:[%s7 + $0xc0] sm:$0xff] %vm3910, %v4543
  %4761 = vst.msk [vmem:[%s7 + $0xc8] sm:$0xff] %vm3910, %v4548
  %4762 = vst.msk [vmem:[%s7 + $0xd0] sm:$0xff] %vm3910, %v4553
  %4763 = vst.msk [vmem:[%s7 + $0xd8] sm:$0xff] %vm3910, %v4558
  %4764 = vst.msk [vmem:[%s7 + $0xe0] sm:$0xff] %vm3910, %v4563
  %4765 = vst.msk [vmem:[%s7 + $0xe8] sm:$0xff] %vm3910, %v4568
  %4766 = vst.msk [vmem:[%s7 + $0xf0] sm:$0xff] %vm3910, %v4573
  %4767 = vst.msk [vmem:[%s7 + $0xf8] sm:$0xff] %vm3910, %v4578
  %4768 = vst.msk [vmem:[%s7 + $0x100] sm:$0xff] %vm3910, %v4583
  %4769 = vst.msk [vmem:[%s7 + $0x108] sm:$0xff] %vm3910, %v4588
  %4770 = vst.msk [vmem:[%s7 + $0x110] sm:$0xff] %vm3910, %v4593
  %4771 = vst.msk [vmem:[%s7 + $0x118] sm:$0xff] %vm3910, %v4598
  %4772 = vst.msk [vmem:[%s7 + $0x120] sm:$0xff] %vm3910, %v4603
  %4773 = vst.msk [vmem:[%s7 + $0x128] sm:$0xff] %vm3910, %v4608
  %4774 = vst.msk [vmem:[%s7 + $0x130] sm:$0xff] %vm3910, %v4613
  %4775 = vst.msk [vmem:[%s7 + $0x138] sm:$0xff] %vm3910, %v4618
  %4776 = vst.msk [vmem:[%s7 + $0x140] sm:$0xff] %vm3910, %v4623
  %4777 = vst.msk [vmem:[%s7 + $0x148] sm:$0xff] %vm3910, %v4628
  %4778 = vst.msk [vmem:[%s7 + $0x150] sm:$0xff] %vm3910, %v4633
  %4779 = vst.msk [vmem:[%s7 + $0x158] sm:$0xff] %vm3910, %v4638
  %4780 = vst.msk [vmem:[%s7 + $0x160] sm:$0xff] %vm3910, %v4643
  %4781 = vst.msk [vmem:[%s7 + $0x168] sm:$0xff] %vm3910, %v4648
  %4782 = vst.msk [vmem:[%s7 + $0x170] sm:$0xff] %vm3910, %v4653
  %4783 = vst.msk [vmem:[%s7 + $0x178] sm:$0xff] %vm3910, %v4658
  %4784 = vst.msk [vmem:[%s7 + $0x180] sm:$0xff] %vm3910, %v4663
  %4785 = vst.msk [vmem:[%s7 + $0x188] sm:$0xff] %vm3910, %v4668
  %4786 = vst.msk [vmem:[%s7 + $0x190] sm:$0xff] %vm3910, %v4673
  %4787 = vst.msk [vmem:[%s7 + $0x198] sm:$0xff] %vm3910, %v4678
  %4788 = vst.msk [vmem:[%s7 + $0x1a0] sm:$0xff] %vm3910, %v4683
  %4789 = vst.msk [vmem:[%s7 + $0x1a8] sm:$0xff] %vm3910, %v4688
  %4790 = vst.msk [vmem:[%s7 + $0x1b0] sm:$0xff] %vm3910, %v4693
  %4791 = vst.msk [vmem:[%s7 + $0x1b8] sm:$0xff] %vm3910, %v4698
  %4792 = vst.msk [vmem:[%s7 + $0x1c0] sm:$0xff] %vm3910, %v4703
  %4793 = vst.msk [vmem:[%s7 + $0x1c8] sm:$0xff] %vm3910, %v4708
  %4794 = vst.msk [vmem:[%s7 + $0x1d0] sm:$0xff] %vm3910, %v4713
  %4795 = vst.msk [vmem:[%s7 + $0x1d8] sm:$0xff] %vm3910, %v4718
  %4796 = vst.msk [vmem:[%s7 + $0x1e0] sm:$0xff] %vm3910, %v4723
  %4797 = vst.msk [vmem:[%s7 + $0x1e8] sm:$0xff] %vm3910, %v4728
  %4798 = vst.msk [vmem:[%s7 + $0x1f0] sm:$0xff] %vm3910, %v4733
  // Predicated region
  $region30: #{tpu_custom_call.1} parent=0 // pred_check
    _
  $region31: #{tpu_custom_call.1} parent=0 // pred_check_branch
    %4800 = sbr.rel (0) target = $region33
  $region32: #{tpu_custom_call.1} parent=0 // pred_region
    _
  $region33: #{tpu_custom_call.1} parent=0 // pred_fallthru
    _
  // Predicated region
  $region34: #{tpu_custom_call.1} parent=0 // pred_check
    _
  $region35: #{tpu_custom_call.1} parent=0 // pred_check_branch
    %4802 = sbr.rel (0) target = $region37
  $region36: #{tpu_custom_call.1} parent=0 // pred_region
    _
  $region37: #{tpu_custom_call.1} parent=0 // pred_fallthru
    _

</llo_original>
